<compile_context>
chip_gen: v7x
topology: tpu7x:2x2x1
jax: 0.10.0
libtpu: 0.0.40
codegen_flags: <defaults>
</compile_context>

<pallas_src>
import functools

import numpy as np
import jax
import jax.numpy as jnp
from jax.experimental import pallas as pl
from jax.experimental.pallas import tpu as pltpu


def _round_up(x, m):
    return ((x + m - 1) // m) * m


def _choose_tile(N, *, tile_n=512, min_tiles=2):
    """Pick (TN, Np) so Np hugs N (minimal zero-node padding).

    Keeps an even grid step count >= 2 (when N is big enough) so the parallel
    grid axis splits evenly across both TensorCores on v7x.
    """
    if N <= 16:
        n_tiles = 1
    else:
        n_tiles = max(min_tiles, -(-N // tile_n))        # ceil(N / tile_n)
        if n_tiles % 2:
            n_tiles += 1
    TN = _round_up(-(-N // n_tiles), 8)                  # ceil(N / n_tiles) -> x8
    return TN, TN * n_tiles


# ----------------------------------------------------------------------------
# Fused PainnUpdate kernel
# ----------------------------------------------------------------------------
def _painn_update_kernel(s_ref, v_ref, wuv_ref, buv_ref, w1_ref, b1_ref,
                         w2_ref, b2_ref, os_ref, ov_ref, *, Hp):
    s = s_ref[...]                                       # (TN, Hp)  f32
    wuv = wuv_ref[...]                                   # (Hp, 2Hp) bf16 = [Wu | Wv]
    buv = buv_ref[...]                                   # (1, 2Hp)  f32

    # Per-component Uv/Vv projection (unrolled).  u_c / vv_c are consumed
    # immediately into inner / ||Vv||^2; u_c is stashed in the output buffer so
    # only two (TN, Hp) f32 accumulators stay live across the loop.
    inner = jnp.zeros_like(s)
    vv_sq = jnp.zeros_like(s)
    for c in range(3):
        uv_c = jnp.dot(v_ref[c].astype(jnp.bfloat16), wuv,
                       preferred_element_type=jnp.float32) + buv
        u_c = uv_c[:, :Hp]                               # lane-aligned 128-wide slices
        vv_c = uv_c[:, Hp:]
        inner = inner + u_c * vv_c                       # sum(Uv * Vv, dim=1)
        vv_sq = vv_sq + vv_c * vv_c
        ov_ref[c, :, :] = u_c                            # stash Uv; finalized below

    vv_norm = jnp.sqrt(vv_sq)                            # ||Vv|| over the 3 components

    # update_mlp: Linear(2H->H) -> SiLU -> Linear(H->3H).
    # concat([Vv_norm, node_scalar]) is a lane concat of two 128-wide slabs ->
    # one K=2*Hp MXU pass (full systolic depth on v6e/v7x).
    mlp_in = jnp.concatenate([vv_norm, s], axis=1).astype(jnp.bfloat16)
    h = jnp.dot(mlp_in, w1_ref[...], preferred_element_type=jnp.float32) + b1_ref[...]
    h = h * jax.nn.sigmoid(h)                            # SiLU in f32 (VPU/EUP)
    m = jnp.dot(h.astype(jnp.bfloat16), w2_ref[...],
                preferred_element_type=jnp.float32) + b2_ref[...]

    a_vv = m[:, 0 * Hp:1 * Hp]                           # each head sits at c*Hp (lane-aligned)
    a_sv = m[:, 1 * Hp:2 * Hp]
    a_ss = m[:, 2 * Hp:3 * Hp]

    os_ref[...] = s + a_sv * inner + a_ss                # node_scalar + delta_s
    for c in range(3):
        ov_ref[c, :, :] = v_ref[c] + a_vv * ov_ref[c, :, :]   # node_vector + a_vv * Uv


# ----------------------------------------------------------------------------
# Parameter init (mirrors nn.Linear shapes) and lane-padding / packing
# ----------------------------------------------------------------------------
def init_params(key, H):
    keys = iter(jax.random.split(key, 16))

    def lin(fan_in, fan_out):
        bound = 1.0 / float(np.sqrt(fan_in))
        W = jax.random.uniform(next(keys), (fan_in, fan_out), jnp.float32, -bound, bound)
        b = jax.random.uniform(next(keys), (fan_out,), jnp.float32, -bound, bound)
        return W, b

    p = {}
    p["Wu"], p["bu"] = lin(H, H)          # update_U
    p["Wv"], p["bv"] = lin(H, H)          # update_V
    p["W1"], p["b1"] = lin(2 * H, H)      # update_mlp[0]
    p["W2"], p["b2"] = lin(H, 3 * H)      # update_mlp[2]
    return p


def pack_params(p, H, Hp):
    """Zero-pad weights to 128-lane-aligned shapes, fuse [Wu | Wv], cast to bf16.

    All padded lanes/rows are exactly zero (required so padded lanes stay zero
    through the kernel's norm/SiLU/gating path).
    """
    Wuv = jnp.zeros((Hp, 2 * Hp), jnp.float32)
    Wuv = Wuv.at[:H, :H].set(p["Wu"]).at[:H, Hp:Hp + H].set(p["Wv"])
    buv = jnp.zeros((1, 2 * Hp), jnp.float32)
    buv = buv.at[0, :H].set(p["bu"]).at[0, Hp:Hp + H].set(p["bv"])

    # W1 packed as (2*Hp, Hp): rows [0:Hp) consume Vv_norm lanes, rows [Hp:2Hp)
    # consume node_scalar lanes (matches the in-kernel lane concat order).
    W1 = jnp.zeros((2 * Hp, Hp), jnp.float32)
    W1 = W1.at[:H, :H].set(p["W1"][:H])
    W1 = W1.at[Hp:Hp + H, :H].set(p["W1"][H:])
    b1 = jnp.zeros((1, Hp), jnp.float32).at[0, :H].set(p["b1"])

    W2 = jnp.zeros((Hp, 3 * Hp), jnp.float32)
    b2 = jnp.zeros((1, 3 * Hp), jnp.float32)
    for c in range(3):                                   # place each H-wide head at c*Hp
        W2 = W2.at[:H, c * Hp:c * Hp + H].set(p["W2"][:, c * H:(c + 1) * H])
        b2 = b2.at[0, c * Hp:c * Hp + H].set(p["b2"][c * H:(c + 1) * H])

    return dict(Wuv=Wuv.astype(jnp.bfloat16), buv=buv,
                W1=W1.astype(jnp.bfloat16), b1=b1,
                W2=W2.astype(jnp.bfloat16), b2=b2)


# ----------------------------------------------------------------------------
# Resident padded layout helpers (boundary-only in a full model)
# ----------------------------------------------------------------------------
def pad_node_state(node_scalar, node_vector, *, H, Hp, tile_n=512):
    N = node_scalar.shape[0]
    TN, Np = _choose_tile(N, tile_n=tile_n)
    s_pad = jnp.zeros((Np, Hp), jnp.float32).at[:N, :H].set(node_scalar)
    v_pad = jnp.zeros((3, Np, Hp), jnp.float32).at[:, :N, :H].set(
        jnp.transpose(node_vector, (1, 0, 2)))           # component-major (3, N, H)
    return s_pad, v_pad, TN


def unpad_node_state(s_pad, v_pad, *, N, H):
    return s_pad[:N, :H], jnp.transpose(v_pad[:, :N, :H], (1, 0, 2))


def _const_spec(shape):
    # Grid-invariant weight/bias block: fetched once, single-buffered.
    return pl.BlockSpec(shape, lambda *_: (0,) * len(shape),
                        pipeline_mode=pl.Buffered(buffer_count=1))


# ----------------------------------------------------------------------------
# Tiled pallas_call on the resident padded layout
# ----------------------------------------------------------------------------
@functools.partial(jax.jit, static_argnames=("Hp", "TN"))
def painn_update_padded(packed, s_pad, v_pad, *, Hp, TN):
    Np = s_pad.shape[0]
    kernel = functools.partial(_painn_update_kernel, Hp=Hp)
    out_s, out_v = pl.pallas_call(
        kernel,
        grid=(Np // TN,),
        in_specs=[
            pl.BlockSpec((TN, Hp), lambda i: (i, 0)),            # node_scalar tile (f32)
            pl.BlockSpec((3, TN, Hp), lambda i: (0, i, 0)),      # node_vector tile (f32)
            _const_spec((Hp, 2 * Hp)),                           # [Wu | Wv]  bf16
            _const_spec((1, 2 * Hp)),                            # [bu | bv]  f32
            _const_spec((2 * Hp, Hp)),                           # W1         bf16
            _const_spec((1, Hp)),                                # b1         f32
            _const_spec((Hp, 3 * Hp)),                           # W2         bf16
            _const_spec((1, 3 * Hp)),                            # b2         f32
        ],
        out_specs=(
            pl.BlockSpec((TN, Hp), lambda i: (i, 0)),
            pl.BlockSpec((3, TN, Hp), lambda i: (0, i, 0)),
        ),
        out_shape=(
            jax.ShapeDtypeStruct((Np, Hp), jnp.float32),
            jax.ShapeDtypeStruct((3, Np, Hp), jnp.float32),
        ),
        compiler_params=pltpu.CompilerParams(
            dimension_semantics=("parallel",)),                  # megacore split on v7x
    )(s_pad, v_pad, packed["Wuv"], packed["buv"], packed["W1"], packed["b1"],
      packed["W2"], packed["b2"])
    return out_s, out_v


# ----------------------------------------------------------------------------
# Pure-JAX f32 reference (mirrors the PyTorch PainnUpdate.forward)
# ----------------------------------------------------------------------------
def painn_update_ref(p, node_scalar, node_vector, H):
    Uv = jnp.einsum("ncd,de->nce", node_vector, p["Wu"]) + p["bu"]
    Vv = jnp.einsum("ncd,de->nce", node_vector, p["Wv"]) + p["bv"]
    Vv_norm = jnp.sqrt(jnp.sum(Vv * Vv, axis=1))
    mlp_in = jnp.concatenate([Vv_norm, node_scalar], axis=1)
    h = mlp_in @ p["W1"] + p["b1"]
    h = h * jax.nn.sigmoid(h)
    m = h @ p["W2"] + p["b2"]
    a_vv, a_sv, a_ss = m[:, :H], m[:, H:2 * H], m[:, 2 * H:]
    inner = jnp.sum(Uv * Vv, axis=1)
    new_s = node_scalar + a_sv * inner + a_ss
    new_v = node_vector + a_vv[:, None, :] * Uv
    return new_s, new_v


# ----------------------------------------------------------------------------
# Main
# ----------------------------------------------------------------------------
if __name__ == "__main__":
    H = 32          # node_size (hidden state)
    N = 300         # nodes: -> TN=152, Np=304, grid=2 (minimal padding, 2 tiles)

    key = jax.random.PRNGKey(0)
    kp, ks, kv = jax.random.split(key, 3)

    params = init_params(kp, H)
    node_scalar = jax.random.normal(ks, (N, H), jnp.float32)
    node_vector = jax.random.normal(kv, (N, 3, H), jnp.float32)

    Hp = _round_up(H, 128)                 # lane-pad hidden dim 32 -> 128
    packed = pack_params(params, H, Hp)

    # Boundary pad (once); in a full model the padded layout stays resident.
    s_pad, v_pad, TN = pad_node_state(node_scalar, node_vector, H=H, Hp=Hp)
    out_s_pad, out_v_pad = painn_update_padded(packed, s_pad, v_pad, Hp=Hp, TN=TN)
    new_s, new_v = unpad_node_state(out_s_pad, out_v_pad, N=N, H=H)
    jax.block_until_ready(new_s)
    jax.block_until_ready(new_v)

    ref_s, ref_v = painn_update_ref(params, node_scalar, node_vector, H)
    # bf16 MXU operands with f32 accumulation -> ~1e-2-level agreement vs f32 ref.
    assert np.allclose(np.asarray(new_s), np.asarray(ref_s), rtol=2e-2, atol=2e-2), \
        float(np.max(np.abs(np.asarray(new_s) - np.asarray(ref_s))))
    assert np.allclose(np.asarray(new_v), np.asarray(ref_v), rtol=2e-2, atol=2e-2), \
        float(np.max(np.abs(np.asarray(new_v) - np.asarray(ref_v))))

    print("KERNEL_OK")
</pallas_src>

<mosaic_0001>
module attributes {stable_mosaic.version = 11 : i64} {
  func.func @_painn_update_kernel(%arg0: i32, %arg1: memref<152x128xf32, #tpu.memory_space<vmem>>, %arg2: memref<3x152x128xf32, #tpu.memory_space<vmem>>, %arg3: memref<128x256xbf16, #tpu.memory_space<vmem>>, %arg4: memref<1x256xf32, #tpu.memory_space<vmem>>, %arg5: memref<256x128xbf16, #tpu.memory_space<vmem>>, %arg6: memref<1x128xf32, #tpu.memory_space<vmem>>, %arg7: memref<128x384xbf16, #tpu.memory_space<vmem>>, %arg8: memref<1x384xf32, #tpu.memory_space<vmem>>, %arg9: memref<152x128xf32, #tpu.memory_space<vmem>>, %arg10: memref<3x152x128xf32, #tpu.memory_space<vmem>>) attributes {dimension_semantics = [#tpu.dimension_semantics<parallel>], iteration_bounds = array<i64: 2>, scalar_prefetch = 0 : i64, scratch_operands = 0 : i64, tpu.core_type = #tpu.core_type<tc>, window_params = [{transform_indices = @transform_0, window_bounds = array<i64: 152, 128>}, {transform_indices = @transform_1, window_bounds = array<i64: 3, 152, 128>}, {pipeline_mode = #tpu.pipeline_mode<synchronous>, transform_indices = @transform_2, window_bounds = array<i64: 128, 256>}, {pipeline_mode = #tpu.pipeline_mode<synchronous>, transform_indices = @transform_3, window_bounds = array<i64: 1, 256>}, {pipeline_mode = #tpu.pipeline_mode<synchronous>, transform_indices = @transform_4, window_bounds = array<i64: 256, 128>}, {pipeline_mode = #tpu.pipeline_mode<synchronous>, transform_indices = @transform_5, window_bounds = array<i64: 1, 128>}, {pipeline_mode = #tpu.pipeline_mode<synchronous>, transform_indices = @transform_6, window_bounds = array<i64: 128, 384>}, {pipeline_mode = #tpu.pipeline_mode<synchronous>, transform_indices = @transform_7, window_bounds = array<i64: 1, 384>}, {transform_indices = @transform_8, window_bounds = array<i64: 152, 128>}, {transform_indices = @transform_9, window_bounds = array<i64: 3, 152, 128>}]} {
    %c0 = arith.constant 0 : index
    %c0_0 = arith.constant 0 : index
    %0 = vector.load %arg1[%c0, %c0_0] : memref<152x128xf32, #tpu.memory_space<vmem>>, vector<152x128xf32>
    %c0_1 = arith.constant 0 : index
    %c0_2 = arith.constant 0 : index
    %1 = vector.load %arg3[%c0_1, %c0_2] : memref<128x256xbf16, #tpu.memory_space<vmem>>, vector<128x256xbf16>
    %c0_3 = arith.constant 0 : index
    %c0_4 = arith.constant 0 : index
    %2 = vector.load %arg4[%c0_3, %c0_4] : memref<1x256xf32, #tpu.memory_space<vmem>>, vector<1x256xf32>
    %cst = arith.constant 0.000000e+00 : f32
    %3 = vector.broadcast %cst : f32 to vector<152x128xf32>
    %cst_5 = arith.constant 0.000000e+00 : f32
    %4 = vector.broadcast %cst_5 : f32 to vector<152x128xf32>
    %c0_6 = arith.constant 0 : index
    %c0_7 = arith.constant 0 : index
    %c0_8 = arith.constant 0 : index
    %5 = vector.load %arg2[%c0_6, %c0_7, %c0_8] : memref<3x152x128xf32, #tpu.memory_space<vmem>>, vector<1x152x128xf32>
    %6 = vector.shape_cast %5 : vector<1x152x128xf32> to vector<152x128xf32>
    %7 = arith.truncf %6 : vector<152x128xf32> to vector<152x128xbf16>
    %cst_9 = arith.constant dense<0.000000e+00> : vector<152x256xf32>
    %8 = tpu.matmul %7, %1, %cst_9 {dimension_numbers = #tpu.dot_dimension_numbers<[1], [0], [0], [1], [0, 0, 1, 1], [], []>} : vector<152x128xbf16>, vector<128x256xbf16>, vector<152x256xf32> -> vector<152x256xf32>
    %9 = vector.broadcast %2 : vector<1x256xf32> to vector<152x256xf32>
    %10 = arith.addf %8, %9 : vector<152x256xf32>
    %11 = vector.extract_strided_slice %10 {offsets = [0, 0], sizes = [152, 128], strides = [1, 1]} : vector<152x256xf32> to vector<152x128xf32>
    %12 = vector.extract_strided_slice %10 {offsets = [0, 128], sizes = [152, 128], strides = [1, 1]} : vector<152x256xf32> to vector<152x128xf32>
    %13 = arith.mulf %11, %12 : vector<152x128xf32>
    %14 = arith.addf %3, %13 : vector<152x128xf32>
    %15 = arith.mulf %12, %12 : vector<152x128xf32>
    %16 = arith.addf %4, %15 : vector<152x128xf32>
    %c0_10 = arith.constant 0 : index
    %c0_11 = arith.constant 0 : index
    %c0_12 = arith.constant 0 : index
    %17 = vector.load %arg10[%c0_10, %c0_11, %c0_12] : memref<3x152x128xf32, #tpu.memory_space<vmem>>, vector<1x152x128xf32>
    %18 = vector.shape_cast %17 : vector<1x152x128xf32> to vector<152x128xf32>
    %19 = vector.shape_cast %11 : vector<152x128xf32> to vector<1x152x128xf32>
    tpu.vector_store %arg10[%c0_10, %c0_11, %c0_12], %19 {strides = array<i32>} : memref<3x152x128xf32, #tpu.memory_space<vmem>>, vector<1x152x128xf32>,
    %c1 = arith.constant 1 : index
    %c0_13 = arith.constant 0 : index
    %c0_14 = arith.constant 0 : index
    %20 = vector.load %arg2[%c1, %c0_13, %c0_14] : memref<3x152x128xf32, #tpu.memory_space<vmem>>, vector<1x152x128xf32>
    %21 = vector.shape_cast %20 : vector<1x152x128xf32> to vector<152x128xf32>
    %22 = arith.truncf %21 : vector<152x128xf32> to vector<152x128xbf16>
    %cst_15 = arith.constant dense<0.000000e+00> : vector<152x256xf32>
    %23 = tpu.matmul %22, %1, %cst_15 {dimension_numbers = #tpu.dot_dimension_numbers<[1], [0], [0], [1], [0, 0, 1, 1], [], []>} : vector<152x128xbf16>, vector<128x256xbf16>, vector<152x256xf32> -> vector<152x256xf32>
    %24 = vector.broadcast %2 : vector<1x256xf32> to vector<152x256xf32>
    %25 = arith.addf %23, %24 : vector<152x256xf32>
    %26 = vector.extract_strided_slice %25 {offsets = [0, 0], sizes = [152, 128], strides = [1, 1]} : vector<152x256xf32> to vector<152x128xf32>
    %27 = vector.extract_strided_slice %25 {offsets = [0, 128], sizes = [152, 128], strides = [1, 1]} : vector<152x256xf32> to vector<152x128xf32>
    %28 = arith.mulf %26, %27 : vector<152x128xf32>
    %29 = arith.addf %14, %28 : vector<152x128xf32>
    %30 = arith.mulf %27, %27 : vector<152x128xf32>
    %31 = arith.addf %16, %30 : vector<152x128xf32>
    %c1_16 = arith.constant 1 : index
    %c0_17 = arith.constant 0 : index
    %c0_18 = arith.constant 0 : index
    %32 = vector.load %arg10[%c1_16, %c0_17, %c0_18] : memref<3x152x128xf32, #tpu.memory_space<vmem>>, vector<1x152x128xf32>
    %33 = vector.shape_cast %32 : vector<1x152x128xf32> to vector<152x128xf32>
    %34 = vector.shape_cast %26 : vector<152x128xf32> to vector<1x152x128xf32>
    tpu.vector_store %arg10[%c1_16, %c0_17, %c0_18], %34 {strides = array<i32>} : memref<3x152x128xf32, #tpu.memory_space<vmem>>, vector<1x152x128xf32>,
    %c2 = arith.constant 2 : index
    %c0_19 = arith.constant 0 : index
    %c0_20 = arith.constant 0 : index
    %35 = vector.load %arg2[%c2, %c0_19, %c0_20] : memref<3x152x128xf32, #tpu.memory_space<vmem>>, vector<1x152x128xf32>
    %36 = vector.shape_cast %35 : vector<1x152x128xf32> to vector<152x128xf32>
    %37 = arith.truncf %36 : vector<152x128xf32> to vector<152x128xbf16>
    %cst_21 = arith.constant dense<0.000000e+00> : vector<152x256xf32>
    %38 = tpu.matmul %37, %1, %cst_21 {dimension_numbers = #tpu.dot_dimension_numbers<[1], [0], [0], [1], [0, 0, 1, 1], [], []>} : vector<152x128xbf16>, vector<128x256xbf16>, vector<152x256xf32> -> vector<152x256xf32>
    %39 = vector.broadcast %2 : vector<1x256xf32> to vector<152x256xf32>
    %40 = arith.addf %38, %39 : vector<152x256xf32>
    %41 = vector.extract_strided_slice %40 {offsets = [0, 0], sizes = [152, 128], strides = [1, 1]} : vector<152x256xf32> to vector<152x128xf32>
    %42 = vector.extract_strided_slice %40 {offsets = [0, 128], sizes = [152, 128], strides = [1, 1]} : vector<152x256xf32> to vector<152x128xf32>
    %43 = arith.mulf %41, %42 : vector<152x128xf32>
    %44 = arith.addf %29, %43 : vector<152x128xf32>
    %45 = arith.mulf %42, %42 : vector<152x128xf32>
    %46 = arith.addf %31, %45 : vector<152x128xf32>
    %c2_22 = arith.constant 2 : index
    %c0_23 = arith.constant 0 : index
    %c0_24 = arith.constant 0 : index
    %47 = vector.load %arg10[%c2_22, %c0_23, %c0_24] : memref<3x152x128xf32, #tpu.memory_space<vmem>>, vector<1x152x128xf32>
    %48 = vector.shape_cast %47 : vector<1x152x128xf32> to vector<152x128xf32>
    %49 = vector.shape_cast %41 : vector<152x128xf32> to vector<1x152x128xf32>
    tpu.vector_store %arg10[%c2_22, %c0_23, %c0_24], %49 {strides = array<i32>} : memref<3x152x128xf32, #tpu.memory_space<vmem>>, vector<1x152x128xf32>,
    %50 = math.sqrt %46 : vector<152x128xf32>
    %51 = tpu.concatenate %50, %0 in 1 : vector<152x128xf32>, vector<152x128xf32> -> vector<152x256xf32>
    %52 = arith.truncf %51 : vector<152x256xf32> to vector<152x256xbf16>
    %c0_25 = arith.constant 0 : index
    %c0_26 = arith.constant 0 : index
    %53 = vector.load %arg5[%c0_25, %c0_26] : memref<256x128xbf16, #tpu.memory_space<vmem>>, vector<256x128xbf16>
    %cst_27 = arith.constant dense<0.000000e+00> : vector<152x128xf32>
    %54 = tpu.matmul %52, %53, %cst_27 {dimension_numbers = #tpu.dot_dimension_numbers<[1], [0], [0], [1], [0, 0, 1, 1], [], []>} : vector<152x256xbf16>, vector<256x128xbf16>, vector<152x128xf32> -> vector<152x128xf32>
    %c0_28 = arith.constant 0 : index
    %c0_29 = arith.constant 0 : index
    %55 = vector.load %arg6[%c0_28, %c0_29] : memref<1x128xf32, #tpu.memory_space<vmem>>, vector<1x128xf32>
    %56 = vector.broadcast %55 : vector<1x128xf32> to vector<152x128xf32>
    %57 = arith.addf %54, %56 : vector<152x128xf32>
    %58 = arith.negf %57 : vector<152x128xf32>
    %59 = math.exp %58 : vector<152x128xf32>
    %cst_30 = arith.constant 1.000000e+00 : f32
    %60 = vector.broadcast %cst_30 : f32 to vector<152x128xf32>
    %61 = arith.addf %60, %59 : vector<152x128xf32>
    %62 = arith.divf %60, %61 : vector<152x128xf32>
    %63 = arith.mulf %57, %62 : vector<152x128xf32>
    %64 = arith.truncf %63 : vector<152x128xf32> to vector<152x128xbf16>
    %c0_31 = arith.constant 0 : index
    %c0_32 = arith.constant 0 : index
    %65 = vector.load %arg7[%c0_31, %c0_32] : memref<128x384xbf16, #tpu.memory_space<vmem>>, vector<128x384xbf16>
    %cst_33 = arith.constant dense<0.000000e+00> : vector<152x384xf32>
    %66 = tpu.matmul %64, %65, %cst_33 {dimension_numbers = #tpu.dot_dimension_numbers<[1], [0], [0], [1], [0, 0, 1, 1], [], []>} : vector<152x128xbf16>, vector<128x384xbf16>, vector<152x384xf32> -> vector<152x384xf32>
    %c0_34 = arith.constant 0 : index
    %c0_35 = arith.constant 0 : index
    %67 = vector.load %arg8[%c0_34, %c0_35] : memref<1x384xf32, #tpu.memory_space<vmem>>, vector<1x384xf32>
    %68 = vector.broadcast %67 : vector<1x384xf32> to vector<152x384xf32>
    %69 = arith.addf %66, %68 : vector<152x384xf32>
    %70 = vector.extract_strided_slice %69 {offsets = [0, 0], sizes = [152, 128], strides = [1, 1]} : vector<152x384xf32> to vector<152x128xf32>
    %71 = vector.extract_strided_slice %69 {offsets = [0, 128], sizes = [152, 128], strides = [1, 1]} : vector<152x384xf32> to vector<152x128xf32>
    %72 = vector.extract_strided_slice %69 {offsets = [0, 256], sizes = [152, 128], strides = [1, 1]} : vector<152x384xf32> to vector<152x128xf32>
    %73 = arith.mulf %71, %44 : vector<152x128xf32>
    %74 = arith.addf %0, %73 : vector<152x128xf32>
    %75 = arith.addf %74, %72 : vector<152x128xf32>
    %c0_36 = arith.constant 0 : index
    %c0_37 = arith.constant 0 : index
    %76 = vector.load %arg9[%c0_36, %c0_37] : memref<152x128xf32, #tpu.memory_space<vmem>>, vector<152x128xf32>
    tpu.vector_store %arg9[%c0_36, %c0_37], %75 {strides = array<i32>} : memref<152x128xf32, #tpu.memory_space<vmem>>, vector<152x128xf32>,
    %c0_38 = arith.constant 0 : index
    %c0_39 = arith.constant 0 : index
    %c0_40 = arith.constant 0 : index
    %77 = vector.load %arg2[%c0_38, %c0_39, %c0_40] : memref<3x152x128xf32, #tpu.memory_space<vmem>>, vector<1x152x128xf32>
    %78 = vector.shape_cast %77 : vector<1x152x128xf32> to vector<152x128xf32>
    %c0_41 = arith.constant 0 : index
    %c0_42 = arith.constant 0 : index
    %c0_43 = arith.constant 0 : index
    %79 = vector.load %arg10[%c0_41, %c0_42, %c0_43] : memref<3x152x128xf32, #tpu.memory_space<vmem>>, vector<1x152x128xf32>
    %80 = vector.shape_cast %79 : vector<1x152x128xf32> to vector<152x128xf32>
    %81 = arith.mulf %70, %80 : vector<152x128xf32>
    %82 = arith.addf %78, %81 : vector<152x128xf32>
    %c0_44 = arith.constant 0 : index
    %c0_45 = arith.constant 0 : index
    %c0_46 = arith.constant 0 : index
    %83 = vector.load %arg10[%c0_44, %c0_45, %c0_46] : memref<3x152x128xf32, #tpu.memory_space<vmem>>, vector<1x152x128xf32>
    %84 = vector.shape_cast %83 : vector<1x152x128xf32> to vector<152x128xf32>
    %85 = vector.shape_cast %82 : vector<152x128xf32> to vector<1x152x128xf32>
    tpu.vector_store %arg10[%c0_44, %c0_45, %c0_46], %85 {strides = array<i32>} : memref<3x152x128xf32, #tpu.memory_space<vmem>>, vector<1x152x128xf32>,
    %c1_47 = arith.constant 1 : index
    %c0_48 = arith.constant 0 : index
    %c0_49 = arith.constant 0 : index
    %86 = vector.load %arg2[%c1_47, %c0_48, %c0_49] : memref<3x152x128xf32, #tpu.memory_space<vmem>>, vector<1x152x128xf32>
    %87 = vector.shape_cast %86 : vector<1x152x128xf32> to vector<152x128xf32>
    %c1_50 = arith.constant 1 : index
    %c0_51 = arith.constant 0 : index
    %c0_52 = arith.constant 0 : index
    %88 = vector.load %arg10[%c1_50, %c0_51, %c0_52] : memref<3x152x128xf32, #tpu.memory_space<vmem>>, vector<1x152x128xf32>
    %89 = vector.shape_cast %88 : vector<1x152x128xf32> to vector<152x128xf32>
    %90 = arith.mulf %70, %89 : vector<152x128xf32>
    %91 = arith.addf %87, %90 : vector<152x128xf32>
    %c1_53 = arith.constant 1 : index
    %c0_54 = arith.constant 0 : index
    %c0_55 = arith.constant 0 : index
    %92 = vector.load %arg10[%c1_53, %c0_54, %c0_55] : memref<3x152x128xf32, #tpu.memory_space<vmem>>, vector<1x152x128xf32>
    %93 = vector.shape_cast %92 : vector<1x152x128xf32> to vector<152x128xf32>
    %94 = vector.shape_cast %91 : vector<152x128xf32> to vector<1x152x128xf32>
    tpu.vector_store %arg10[%c1_53, %c0_54, %c0_55], %94 {strides = array<i32>} : memref<3x152x128xf32, #tpu.memory_space<vmem>>, vector<1x152x128xf32>,
    %c2_56 = arith.constant 2 : index
    %c0_57 = arith.constant 0 : index
    %c0_58 = arith.constant 0 : index
    %95 = vector.load %arg2[%c2_56, %c0_57, %c0_58] : memref<3x152x128xf32, #tpu.memory_space<vmem>>, vector<1x152x128xf32>
    %96 = vector.shape_cast %95 : vector<1x152x128xf32> to vector<152x128xf32>
    %c2_59 = arith.constant 2 : index
    %c0_60 = arith.constant 0 : index
    %c0_61 = arith.constant 0 : index
    %97 = vector.load %arg10[%c2_59, %c0_60, %c0_61] : memref<3x152x128xf32, #tpu.memory_space<vmem>>, vector<1x152x128xf32>
    %98 = vector.shape_cast %97 : vector<1x152x128xf32> to vector<152x128xf32>
    %99 = arith.mulf %70, %98 : vector<152x128xf32>
    %100 = arith.addf %96, %99 : vector<152x128xf32>
    %c2_62 = arith.constant 2 : index
    %c0_63 = arith.constant 0 : index
    %c0_64 = arith.constant 0 : index
    %101 = vector.load %arg10[%c2_62, %c0_63, %c0_64] : memref<3x152x128xf32, #tpu.memory_space<vmem>>, vector<1x152x128xf32>
    %102 = vector.shape_cast %101 : vector<1x152x128xf32> to vector<152x128xf32>
    %103 = vector.shape_cast %100 : vector<152x128xf32> to vector<1x152x128xf32>
    tpu.vector_store %arg10[%c2_62, %c0_63, %c0_64], %103 {strides = array<i32>} : memref<3x152x128xf32, #tpu.memory_space<vmem>>, vector<1x152x128xf32>,
    return
  }
  func.func @transform_0(%arg0: i32) -> (i32, i32) {
    %c0_i32 = arith.constant 0 : i32
    %c0_i32_0 = arith.constant 0 : i32
    return %arg0, %c0_i32 : i32, i32
  }
  func.func @transform_1(%arg0: i32) -> (i32, i32, i32) {
    %c0_i32 = arith.constant 0 : i32
    %c0_i32_0 = arith.constant 0 : i32
    %c0_i32_1 = arith.constant 0 : i32
    return %c0_i32, %arg0, %c0_i32_0 : i32, i32, i32
  }
  func.func @transform_2(%arg0: i32) -> (i32, i32) {
    %c0_i32 = arith.constant 0 : i32
    %c0_i32_0 = arith.constant 0 : i32
    %c0_i32_1 = arith.constant 0 : i32
    return %c0_i32, %c0_i32_0 : i32, i32
  }
  func.func @transform_3(%arg0: i32) -> (i32, i32) {
    %c0_i32 = arith.constant 0 : i32
    %c0_i32_0 = arith.constant 0 : i32
    %c0_i32_1 = arith.constant 0 : i32
    return %c0_i32, %c0_i32_0 : i32, i32
  }
  func.func @transform_4(%arg0: i32) -> (i32, i32) {
    %c0_i32 = arith.constant 0 : i32
    %c0_i32_0 = arith.constant 0 : i32
    %c0_i32_1 = arith.constant 0 : i32
    return %c0_i32, %c0_i32_0 : i32, i32
  }
  func.func @transform_5(%arg0: i32) -> (i32, i32) {
    %c0_i32 = arith.constant 0 : i32
    %c0_i32_0 = arith.constant 0 : i32
    %c0_i32_1 = arith.constant 0 : i32
    return %c0_i32, %c0_i32_0 : i32, i32
  }
  func.func @transform_6(%arg0: i32) -> (i32, i32) {
    %c0_i32 = arith.constant 0 : i32
    %c0_i32_0 = arith.constant 0 : i32
    %c0_i32_1 = arith.constant 0 : i32
    return %c0_i32, %c0_i32_0 : i32, i32
  }
  func.func @transform_7(%arg0: i32) -> (i32, i32) {
    %c0_i32 = arith.constant 0 : i32
    %c0_i32_0 = arith.constant 0 : i32
    %c0_i32_1 = arith.constant 0 : i32
    return %c0_i32, %c0_i32_0 : i32, i32
  }
  func.func @transform_8(%arg0: i32) -> (i32, i32) {
    %c0_i32 = arith.constant 0 : i32
    %c0_i32_0 = arith.constant 0 : i32
    return %arg0, %c0_i32 : i32, i32
  }
  func.func @transform_9(%arg0: i32) -> (i32, i32, i32) {
    %c0_i32 = arith.constant 0 : i32
    %c0_i32_0 = arith.constant 0 : i32
    %c0_i32_1 = arith.constant 0 : i32
    return %c0_i32, %arg0, %c0_i32_0 : i32, i32, i32
  }
}

</mosaic_0001>

<llo_original>
// kernel: painn_update_padded.1
$region0: #{painn_update_padded.1}
  #allocation0 [shape = 'u32[]', space=smem, size = 0x4, offset = 0x4, fixed_abs, tag = 'smem constant byte address 0x4 - core index']
  #allocation1 [shape = 'u32[144,128]{1,0:T(1,128)}', space=vmem, size = 0x12000, scoped, tag = 'internal scratch']
  #allocation14 [shape = 's32[]', space=sflag, size = 0x4, offset = 0, fixed_abs, tag = 'sflag constant byte address 0x0 - dummy sync flag']
  #allocation16 [shape = 's32[]', space=sflag, size = 0x4, offset = 0, fixed_abs, tag = 'sflag constant byte address 0x0 - dummy sync flag']
  %s0 = inlined_call_operand.hbm [shape: f32[304,128], index: 0, kind: input, shape index: {}]
  %s1 = inlined_call_operand.hbm [shape: f32[3,304,128], index: 1, kind: input, shape index: {}]
  %s2 = inlined_call_operand.hbm [shape: bf16[128,256], index: 2, kind: input, shape index: {}]
  %s3 = inlined_call_operand.vmem [shape: f32[1,256], index: 3, kind: input, shape index: {}]
  %s4 = inlined_call_operand.hbm [shape: bf16[256,128], index: 4, kind: input, shape index: {}]
  %s5 = inlined_call_operand.vmem [shape: f32[1,128], index: 5, kind: input, shape index: {}]
  %s6 = inlined_call_operand.hbm [shape: bf16[128,384], index: 6, kind: input, shape index: {}]
  %s7 = inlined_call_operand.vmem [shape: f32[1,384], index: 7, kind: input, shape index: {}]
  %s8 = inlined_call_operand.hbm [shape: f32[304,128], index: 8, kind: output, shape index: {0}]
  %s9 = inlined_call_operand.hbm [shape: f32[3,304,128], index: 9, kind: output, shape index: {1}]
  %10 = xla_tuple %s8, %s9
  %s11 = sld [smem:[#allocation0]]
  $region93: #{painn_update_padded.1} parent=0
    _
  %s13 = ssub.s32 1, %s11
  %s14 = scalar_select 0, %s13, %s11
  $region1: #{painn_update_padded.1} parent=0
    #allocation2 [shape = 'u8[155648]{0}', space=vmem, size = 0x26000, scoped, tag = 'input window, operand 0']
    #allocation3 [shape = 's32[2]{0}', space=sflag, size = 0x8, scoped, tag = 'scoped memory for painn_update_padded.1']
    #allocation4 [shape = 's32[2]{0}', space=sflag, size = 0x8, scoped, tag = 'scoped memory for painn_update_padded.1']
    #allocation5 [shape = 'u8[466944]{0}', space=vmem, size = 0x72000, scoped, tag = 'input window, operand 1']
    #allocation6 [shape = 's32[2]{0}', space=sflag, size = 0x8, scoped, tag = 'scoped memory for painn_update_padded.1']
    #allocation7 [shape = 'u8[65536]{0}', space=vmem, size = 0x10000, scoped, tag = 'input window, operand 2, single buffered']
    #allocation8 [shape = 'u8[65536]{0}', space=vmem, size = 0x10000, scoped, tag = 'input window, operand 4, single buffered']
    #allocation9 [shape = 's32[1]{0}', space=sflag, size = 0x4, scoped, tag = 'scoped memory for painn_update_padded.1']
    #allocation10 [shape = 'u8[98304]{0}', space=vmem, size = 0x18000, scoped, tag = 'input window, operand 6, single buffered']
    #allocation11 [shape = 'u8[155648]{0}', space=vmem, size = 0x26000, scoped, tag = 'output window, operand 0']
    #allocation12 [shape = 'u8[466944]{0}', space=vmem, size = 0x72000, scoped, tag = 'output window, operand 1']
    #allocation13 [shape = 's32[2]{0}', space=sflag, size = 0x8, scoped, tag = 'scoped memory for painn_update_padded.1']
    %15 = vsyncpa [#allocation3], 0
    %s16 = scalar_lea.sflag [#allocation3], 1
    %17 = vsyncpa %s16, 0
    %18 = vsyncpa [#allocation6], 0
    %s19 = scalar_lea.sflag [#allocation6], 1
    %20 = vsyncpa %s19, 0
    %21 = vsyncpa [#allocation9], 0
    %22 = vsyncpa [#allocation4], 0
    %s23 = scalar_lea.sflag [#allocation4], 1
    %24 = vsyncpa %s23, 0
    %25 = vsyncpa [#allocation13], 0
    %s26 = scalar_lea.sflag [#allocation13], 1
    %27 = vsyncpa %s26, 0
    loop: start=0, step=1, limit=4
    $region2: #{painn_update_padded.1} parent=1 // loop_pre_header
      _
    $region3: #{painn_update_padded.1} parent=1 // loop_header
      %s29 = sphi 0, %s33
      %p30 = scmp.ge.s32.totalorder %s29, 4
      %s39 = sphi 0, %s41
      %s42 = sphi 0, %s39
      %s43 = sphi 0, %s42
      %s59 = sphi 0, %s43
      %s65 = sphi 0, %s67
      %s68 = sphi 0, %s65
      %s69 = sphi 0, %s68
      %s85 = sphi 0, %s69
      %s89 = sphi 0, %s89
      %s91 = sphi 0, %s89
      %s92 = sphi 0, %s91
      %s106 = sphi 0, %s92
      %s110 = sphi 0, %s110
      %s112 = sphi 0, %s110
      %s113 = sphi 0, %s112
      %s127 = sphi 0, %s113
      %s131 = sphi 0, %s131
      %s133 = sphi 0, %s131
      %s134 = sphi 0, %s133
      %s148 = sphi 0, %s134
      %s152 = sphi 0, %s152
      %s154 = sphi 0, %s152
      %s155 = sphi 0, %s154
      %s169 = sphi 0, %s155
      %s173 = sphi 0, %s173
      %s175 = sphi 0, %s173
      %s176 = sphi 0, %s175
      %s190 = sphi 0, %s176
      %s194 = sphi 0, %s194
      %s196 = sphi 0, %s194
      %s197 = sphi 0, %s196
      %s211 = sphi 0, %s197
      %s217 = sphi 0, %s219
      %s220 = sphi 0, %s217
      %s221 = sphi 0, %s220
      %s237 = sphi 0, %s221
      %s243 = sphi 0, %s245
      %s246 = sphi 0, %s243
      %s247 = sphi 0, %s246
      %s263 = sphi 0, %s247
    $region4: #{painn_update_padded.1} parent=1 // loop_header_branch
      %32 = sbr.rel (%p30) target = $region8
    $region5: #{painn_update_padded.1} parent=1 // loop_body
      %s34 = ssub.s32 %s29, 1
      %s35 = ssub.s32 %s29, 2
      %s36 = sadd.s32 %s29, 1
      %s37 = ssub.s32 %s29, %s36
      %p38 = scmp.eq.s32.totalorder %s37, 0
      %s40 = sadd.s32 %s39, 1
      %s41 = scalar_select %p38, %s39, %s40
      %p44 = pneg %p38
      %p45 = scmp.eq.s32.totalorder %s29, 1
      %p46 = por %p44, %p45
      %p47 = scmp.ne.s32.totalorder %s39, %s42
      %p48 = scmp.eq.s32.totalorder %s29, 0
      %p49 = por %p47, %p48
      %p50 = scmp.ne.s32.totalorder %s39, %s42
      %p51 = scmp.eq.s32.totalorder %s34, 1
      %p52 = por %p50, %p51
      %p53 = scmp.ne.s32.totalorder %s42, %s43
      %p54 = scmp.eq.s32.totalorder %s34, 0
      %p55 = por %p53, %p54
      %p56 = scmp.ne.s32.totalorder %s42, %s43
      %p57 = scmp.eq.s32.totalorder %s35, 1
      %p58 = por %p56, %p57
      %p60 = scmp.ne.s32.totalorder %s43, %s59
      %p61 = scmp.eq.s32.totalorder %s35, 0
      %p62 = por %p60, %p61
      %s63 = ssub.s32 %s29, %s36
      %p64 = scmp.eq.s32.totalorder %s63, 0
      %s66 = sadd.s32 %s65, 1
      %s67 = scalar_select %p64, %s65, %s66
      %p70 = pneg %p64
      %p71 = scmp.eq.s32.totalorder %s29, 1
      %p72 = por %p70, %p71
      %p73 = scmp.ne.s32.totalorder %s65, %s68
      %p74 = scmp.eq.s32.totalorder %s29, 0
      %p75 = por %p73, %p74
      %p76 = scmp.ne.s32.totalorder %s65, %s68
      %p77 = scmp.eq.s32.totalorder %s34, 1
      %p78 = por %p76, %p77
      %p79 = scmp.ne.s32.totalorder %s68, %s69
      %p80 = scmp.eq.s32.totalorder %s34, 0
      %p81 = por %p79, %p80
      %p82 = scmp.ne.s32.totalorder %s68, %s69
      %p83 = scmp.eq.s32.totalorder %s35, 1
      %p84 = por %p82, %p83
      %p86 = scmp.ne.s32.totalorder %s69, %s85
      %p87 = scmp.eq.s32.totalorder %s35, 0
      %p88 = por %p86, %p87
      %s90 = sadd.s32 %s89, 1
      %p93 = scmp.eq.s32.totalorder %s29, 1
      %p94 = scmp.ne.s32.totalorder %s89, %s91
      %p95 = scmp.eq.s32.totalorder %s29, 0
      %p96 = por %p94, %p95
      %p97 = scmp.ne.s32.totalorder %s89, %s91
      %p98 = scmp.eq.s32.totalorder %s34, 1
      %p99 = por %p97, %p98
      %p100 = scmp.ne.s32.totalorder %s91, %s92
      %p101 = scmp.eq.s32.totalorder %s34, 0
      %p102 = por %p100, %p101
      %p103 = scmp.ne.s32.totalorder %s91, %s92
      %p104 = scmp.eq.s32.totalorder %s35, 1
      %p105 = por %p103, %p104
      %p107 = scmp.ne.s32.totalorder %s92, %s106
      %p108 = scmp.eq.s32.totalorder %s35, 0
      %p109 = por %p107, %p108
      %s111 = sadd.s32 %s110, 1
      %p114 = scmp.eq.s32.totalorder %s29, 1
      %p115 = scmp.ne.s32.totalorder %s110, %s112
      %p116 = scmp.eq.s32.totalorder %s29, 0
      %p117 = por %p115, %p116
      %p118 = scmp.ne.s32.totalorder %s110, %s112
      %p119 = scmp.eq.s32.totalorder %s34, 1
      %p120 = por %p118, %p119
      %p121 = scmp.ne.s32.totalorder %s112, %s113
      %p122 = scmp.eq.s32.totalorder %s34, 0
      %p123 = por %p121, %p122
      %p124 = scmp.ne.s32.totalorder %s112, %s113
      %p125 = scmp.eq.s32.totalorder %s35, 1
      %p126 = por %p124, %p125
      %p128 = scmp.ne.s32.totalorder %s113, %s127
      %p129 = scmp.eq.s32.totalorder %s35, 0
      %p130 = por %p128, %p129
      %s132 = sadd.s32 %s131, 1
      %p135 = scmp.eq.s32.totalorder %s29, 1
      %p136 = scmp.ne.s32.totalorder %s131, %s133
      %p137 = scmp.eq.s32.totalorder %s29, 0
      %p138 = por %p136, %p137
      %p139 = scmp.ne.s32.totalorder %s131, %s133
      %p140 = scmp.eq.s32.totalorder %s34, 1
      %p141 = por %p139, %p140
      %p142 = scmp.ne.s32.totalorder %s133, %s134
      %p143 = scmp.eq.s32.totalorder %s34, 0
      %p144 = por %p142, %p143
      %p145 = scmp.ne.s32.totalorder %s133, %s134
      %p146 = scmp.eq.s32.totalorder %s35, 1
      %p147 = por %p145, %p146
      %p149 = scmp.ne.s32.totalorder %s134, %s148
      %p150 = scmp.eq.s32.totalorder %s35, 0
      %p151 = por %p149, %p150
      %s153 = sadd.s32 %s152, 1
      %p156 = scmp.eq.s32.totalorder %s29, 1
      %p157 = scmp.ne.s32.totalorder %s152, %s154
      %p158 = scmp.eq.s32.totalorder %s29, 0
      %p159 = por %p157, %p158
      %p160 = scmp.ne.s32.totalorder %s152, %s154
      %p161 = scmp.eq.s32.totalorder %s34, 1
      %p162 = por %p160, %p161
      %p163 = scmp.ne.s32.totalorder %s154, %s155
      %p164 = scmp.eq.s32.totalorder %s34, 0
      %p165 = por %p163, %p164
      %p166 = scmp.ne.s32.totalorder %s154, %s155
      %p167 = scmp.eq.s32.totalorder %s35, 1
      %p168 = por %p166, %p167
      %p170 = scmp.ne.s32.totalorder %s155, %s169
      %p171 = scmp.eq.s32.totalorder %s35, 0
      %p172 = por %p170, %p171
      %s174 = sadd.s32 %s173, 1
      %p177 = scmp.eq.s32.totalorder %s29, 1
      %p178 = scmp.ne.s32.totalorder %s173, %s175
      %p179 = scmp.eq.s32.totalorder %s29, 0
      %p180 = por %p178, %p179
      %p181 = scmp.ne.s32.totalorder %s173, %s175
      %p182 = scmp.eq.s32.totalorder %s34, 1
      %p183 = por %p181, %p182
      %p184 = scmp.ne.s32.totalorder %s175, %s176
      %p185 = scmp.eq.s32.totalorder %s34, 0
      %p186 = por %p184, %p185
      %p187 = scmp.ne.s32.totalorder %s175, %s176
      %p188 = scmp.eq.s32.totalorder %s35, 1
      %p189 = por %p187, %p188
      %p191 = scmp.ne.s32.totalorder %s176, %s190
      %p192 = scmp.eq.s32.totalorder %s35, 0
      %p193 = por %p191, %p192
      %s195 = sadd.s32 %s194, 1
      %p198 = scmp.eq.s32.totalorder %s29, 1
      %p199 = scmp.ne.s32.totalorder %s194, %s196
      %p200 = scmp.eq.s32.totalorder %s29, 0
      %p201 = por %p199, %p200
      %p202 = scmp.ne.s32.totalorder %s194, %s196
      %p203 = scmp.eq.s32.totalorder %s34, 1
      %p204 = por %p202, %p203
      %p205 = scmp.ne.s32.totalorder %s196, %s197
      %p206 = scmp.eq.s32.totalorder %s34, 0
      %p207 = por %p205, %p206
      %p208 = scmp.ne.s32.totalorder %s196, %s197
      %p209 = scmp.eq.s32.totalorder %s35, 1
      %p210 = por %p208, %p209
      %p212 = scmp.ne.s32.totalorder %s197, %s211
      %p213 = scmp.eq.s32.totalorder %s35, 0
      %p214 = por %p212, %p213
      %s215 = ssub.s32 %s29, %s36
      %p216 = scmp.eq.s32.totalorder %s215, 0
      %s218 = sadd.s32 %s217, 1
      %s219 = scalar_select %p216, %s217, %s218
      %p222 = pneg %p216
      %p223 = scmp.eq.s32.totalorder %s29, 1
      %p224 = por %p222, %p223
      %p225 = scmp.ne.s32.totalorder %s217, %s220
      %p226 = scmp.eq.s32.totalorder %s29, 0
      %p227 = por %p225, %p226
      %p228 = scmp.ne.s32.totalorder %s217, %s220
      %p229 = scmp.eq.s32.totalorder %s34, 1
      %p230 = por %p228, %p229
      %p231 = scmp.ne.s32.totalorder %s220, %s221
      %p232 = scmp.eq.s32.totalorder %s34, 0
      %p233 = por %p231, %p232
      %p234 = scmp.ne.s32.totalorder %s220, %s221
      %p235 = scmp.eq.s32.totalorder %s35, 1
      %p236 = por %p234, %p235
      %p238 = scmp.ne.s32.totalorder %s221, %s237
      %p239 = scmp.eq.s32.totalorder %s35, 0
      %p240 = por %p238, %p239
      %s241 = ssub.s32 %s29, %s36
      %p242 = scmp.eq.s32.totalorder %s241, 0
      %s244 = sadd.s32 %s243, 1
      %s245 = scalar_select %p242, %s243, %s244
      %p248 = pneg %p242
      %p249 = scmp.eq.s32.totalorder %s29, 1
      %p250 = por %p248, %p249
      %p251 = scmp.ne.s32.totalorder %s243, %s246
      %p252 = scmp.eq.s32.totalorder %s29, 0
      %p253 = por %p251, %p252
      %p254 = scmp.ne.s32.totalorder %s243, %s246
      %p255 = scmp.eq.s32.totalorder %s34, 1
      %p256 = por %p254, %p255
      %p257 = scmp.ne.s32.totalorder %s246, %s247
      %p258 = scmp.eq.s32.totalorder %s34, 0
      %p259 = por %p257, %p258
      %p260 = scmp.ne.s32.totalorder %s246, %s247
      %p261 = scmp.eq.s32.totalorder %s35, 1
      %p262 = por %p260, %p261
      %p264 = scmp.ne.s32.totalorder %s247, %s263
      %p265 = scmp.eq.s32.totalorder %s35, 0
      %p266 = por %p264, %p265
      %p267 = scmp.le.s32.totalorder 1, %s29
      %p268 = scmp.lt.s32.totalorder %s29, 3
      %p269 = pnand %p267, %p268
      %p270 = pneg %p269
      // Predicated region
      $region9: #{painn_update_padded.1} parent=5 // pred_check
        _
      $region10: #{painn_update_padded.1} parent=5 // pred_check_branch
        %272 = sbr.rel (%p269) target = $region12
      $region11: #{painn_update_padded.1} parent=5 // pred_region
        %s273 = ssub.s32 %s29, 1
        // Predicated region
        $region13: #{painn_update_padded.1} parent=11 // pred_check
          %p274 = pneg %p102
        $region14: #{painn_update_padded.1} parent=11 // pred_check_branch
          %276 = sbr.rel (%p274) target = $region16
        $region15: #{painn_update_padded.1} parent=11 // pred_region
          %s278 = ssub.s32 2048, 2048
          %279 = vsyncadd [#allocation6], %s278
          %s280 = sshll.u32 [#allocation7], 4
          %s281 = int_to_ptr.vmem [resolvable:$true] %s280
          %286 = dma.hbm_to_vmem [thread:$0]  %s2, 2048, %s281, [#allocation6], 128, 128, 8
        $region16: #{painn_update_padded.1} parent=11 // pred_fallthru
          _
        // Predicated region
        $region17: #{painn_update_padded.1} parent=11 // pred_check
          %p287 = pneg %p123
        $region18: #{painn_update_padded.1} parent=11 // pred_check_branch
          %289 = sbr.rel (%p287) target = $region20
        $region19: #{painn_update_padded.1} parent=11 // pred_region
          _
        $region20: #{painn_update_padded.1} parent=11 // pred_fallthru
          _
        // Predicated region
        $region21: #{painn_update_padded.1} parent=11 // pred_check
          %p290 = pneg %p144
        $region22: #{painn_update_padded.1} parent=11 // pred_check_branch
          %292 = sbr.rel (%p290) target = $region24
        $region23: #{painn_update_padded.1} parent=11 // pred_region
          %s294 = ssub.s32 2048, 2048
          %295 = vsyncadd [#allocation9], %s294
          %s296 = sshll.u32 [#allocation8], 4
          %s297 = int_to_ptr.vmem [resolvable:$true] %s296
          %302 = dma.hbm_to_vmem [thread:$0]  %s4, 2048, %s297, [#allocation9], 64, 64, 4
        $region24: #{painn_update_padded.1} parent=11 // pred_fallthru
          _
        // Predicated region
        $region25: #{painn_update_padded.1} parent=11 // pred_check
          %p303 = pneg %p165
        $region26: #{painn_update_padded.1} parent=11 // pred_check_branch
          %305 = sbr.rel (%p303) target = $region28
        $region27: #{painn_update_padded.1} parent=11 // pred_region
          _
        $region28: #{painn_update_padded.1} parent=11 // pred_fallthru
          _
        // Predicated region
        $region29: #{painn_update_padded.1} parent=11 // pred_check
          %p306 = pneg %p186
        $region30: #{painn_update_padded.1} parent=11 // pred_check_branch
          %308 = sbr.rel (%p306) target = $region32
        $region31: #{painn_update_padded.1} parent=11 // pred_region
          %s310 = ssub.s32 3072, 3072
          %311 = vsyncadd [#allocation9], %s310
          %s312 = sshll.u32 [#allocation10], 4
          %s313 = int_to_ptr.vmem [resolvable:$true] %s312
          %318 = dma.hbm_to_vmem [thread:$0]  %s6, 3072, %s313, [#allocation9], 192, 192, 12
        $region32: #{painn_update_padded.1} parent=11 // pred_fallthru
          _
        // Predicated region
        $region33: #{painn_update_padded.1} parent=11 // pred_check
          %p319 = pneg %p207
        $region34: #{painn_update_padded.1} parent=11 // pred_check_branch
          %321 = sbr.rel (%p319) target = $region36
        $region35: #{painn_update_padded.1} parent=11 // pred_region
          _
        $region36: #{painn_update_padded.1} parent=11 // pred_fallthru
          _
      $region12: #{painn_update_padded.1} parent=5 // pred_fallthru
        _
      %p322 = scmp.lt.s32.totalorder %s29, 2
      // Predicated region
      $region37: #{painn_update_padded.1} parent=5 // pred_check
        %p323 = pneg %p322
      $region38: #{painn_update_padded.1} parent=5 // pred_check_branch
        %325 = sbr.rel (%p323) target = $region40
      $region39: #{painn_update_padded.1} parent=5 // pred_region
        // Predicated region
        $region41: #{painn_update_padded.1} parent=39 // pred_check
          %p326 = pneg %p49
        $region42: #{painn_update_padded.1} parent=39 // pred_check_branch
          %328 = sbr.rel (%p326) target = $region44
        $region43: #{painn_update_padded.1} parent=39 // pred_region
          %s329 = sand.u32 %s39, 1
          %s330 = scalar_lea.sflag [#allocation3], %s329
          %s331 = sand.u32 %s39, 1
          %s332 = smul.addr %s331, 152
          %s333 = scalar_lea.vmem [#allocation2], %s332
          %s334 = smul.u32 19, %s29
          %s336 = ssub.s32 2432, 2432
          %337 = vsyncadd %s330, %s336
          %s338 = smul.addr %s334, 128
          %s339 = scalar_lea.hbm %s0, %s338
          %s340 = sshll.u32 %s333, 4
          %s341 = int_to_ptr.vmem [resolvable:$true] %s340
          %346 = dma.hbm_to_vmem [thread:$0]  %s339, 2432, %s341, %s330, 128, 128, 8
        $region44: #{painn_update_padded.1} parent=39 // pred_fallthru
          _
        // Predicated region
        $region45: #{painn_update_padded.1} parent=39 // pred_check
          %p347 = pneg %p75
        $region46: #{painn_update_padded.1} parent=39 // pred_check_branch
          %349 = sbr.rel (%p347) target = $region48
        $region47: #{painn_update_padded.1} parent=39 // pred_region
          #allocation15 [shape = 'u32[6]{0}', space=smem, size = 0x18, scoped, tag = 'DMA stride descriptor']
          %s350 = sand.u32 %s29, 1
          %s351 = scalar_lea.sflag [#allocation6], %s350
          %s352 = sand.u32 %s65, 1
          %s353 = smul.addr %s352, 456
          %s354 = scalar_lea.vmem [#allocation5], %s353
          %s355 = smul.u32 19, %s29
          %s357 = ssub.s32 7296, 7296
          %358 = vsyncadd %s351, %s357
          %s359 = smul.addr %s355, 128
          %s360 = scalar_lea.hbm %s1, %s359
          %s362 = sshll.u32 1, 14
          %s363 = sxor.u32 4294967295, %s362
          %s365 = sld [smem:[#allocation0]]
          %s366 = sadd.s32 2, %s365
          %s368 = sshll.u32 7, 26
          %s369 = sxor.u32 4294967295, %s368
          %s370 = sand.u32 0, %s369
          %s371 = sshll.u32 %s366, 26
          %s372 = sor.u32 %s370, %s371
          %s373 = sshll.u32 %s354, 4
          %s374 = int_to_ptr.vmem [resolvable:$true] %s373
          %380 = sst [smem:[#allocation15]] 4864
          %s381 = scalar_lea.smem [#allocation15], 1
          %382 = sst [smem:[%s381]] 2432
          %s383 = scalar_lea.smem [#allocation15], 2
          %384 = sst [smem:[%s383]] 19
          %s385 = scalar_lea.smem [#allocation15], 3
          %386 = sst [smem:[%s385]] 128
          %s387 = scalar_lea.smem [#allocation15], 4
          %388 = sst [smem:[%s387]] 128
          %s389 = scalar_lea.smem [#allocation15], 5
          %390 = sst [smem:[%s389]] 8
          %392 = dma.general %s360, 7296, %s374, %s351, [#allocation14], [#allocation15], %s372, 0
        $region48: #{painn_update_padded.1} parent=39 // pred_fallthru
          _
      $region40: #{painn_update_padded.1} parent=5 // pred_fallthru
        _
      %p393 = scmp.le.s32.totalorder 1, %s29
      %p394 = scmp.lt.s32.totalorder %s29, 3
      %p395 = pnand %p393, %p394
      %p396 = pneg %p395
      // Predicated region
      $region49: #{painn_update_padded.1} parent=5 // pred_check
        _
      $region50: #{painn_update_padded.1} parent=5 // pred_check_branch
        %398 = sbr.rel (%p395) target = $region52
      $region51: #{painn_update_padded.1} parent=5 // pred_region
        %s399 = ssub.s32 %s29, 1
        %s400 = sand.u32 %s42, 1
        %s401 = scalar_lea.sflag [#allocation3], %s400
        %s402 = sand.u32 %s42, 1
        %s403 = smul.addr %s402, 152
        %s404 = scalar_lea.vmem [#allocation2], %s403
        // Predicated region
        $region53: #{painn_update_padded.1} parent=51 // pred_check
          %p405 = pneg %p55
        $region54: #{painn_update_padded.1} parent=51 // pred_check_branch
          %407 = sbr.rel (%p405) target = $region56
        $region55: #{painn_update_padded.1} parent=51 // pred_region
          %408 = dma.done %s401, 2432
        $region56: #{painn_update_padded.1} parent=51 // pred_fallthru
          _
        %s409 = sand.u32 %s34, 1
        %s410 = scalar_lea.sflag [#allocation6], %s409
        %s411 = sand.u32 %s68, 1
        %s412 = smul.addr %s411, 456
        %s413 = scalar_lea.vmem [#allocation5], %s412
        // Predicated region
        $region57: #{painn_update_padded.1} parent=51 // pred_check
          %p414 = pneg %p81
        $region58: #{painn_update_padded.1} parent=51 // pred_check_branch
          %416 = sbr.rel (%p414) target = $region60
        $region59: #{painn_update_padded.1} parent=51 // pred_region
          %417 = dma.done %s410, 7296
        $region60: #{painn_update_padded.1} parent=51 // pred_fallthru
          _
        // Predicated region
        $region61: #{painn_update_padded.1} parent=51 // pred_check
          %p418 = pneg %p102
        $region62: #{painn_update_padded.1} parent=51 // pred_check_branch
          %420 = sbr.rel (%p418) target = $region64
        $region63: #{painn_update_padded.1} parent=51 // pred_region
          %421 = dma.done [#allocation6], 2048
        $region64: #{painn_update_padded.1} parent=51 // pred_fallthru
          _
        // Predicated region
        $region65: #{painn_update_padded.1} parent=51 // pred_check
          %p422 = pneg %p144
        $region66: #{painn_update_padded.1} parent=51 // pred_check_branch
          %424 = sbr.rel (%p422) target = $region68
        $region67: #{painn_update_padded.1} parent=51 // pred_region
          %425 = dma.done [#allocation9], 2048
        $region68: #{painn_update_padded.1} parent=51 // pred_fallthru
          _
        // Predicated region
        $region69: #{painn_update_padded.1} parent=51 // pred_check
          %p426 = pneg %p186
        $region70: #{painn_update_padded.1} parent=51 // pred_check_branch
          %428 = sbr.rel (%p426) target = $region72
        $region71: #{painn_update_padded.1} parent=51 // pred_region
          %429 = dma.done [#allocation9], 3072
        $region72: #{painn_update_padded.1} parent=51 // pred_fallthru
          _
        %s430 = sand.u32 %s42, 1
        %s431 = scalar_lea.sflag [#allocation3], %s430
        %s432 = sand.u32 %s42, 1
        %s433 = smul.addr %s432, 152
        %s434 = scalar_lea.vmem [#allocation2], %s433
        %p435 = pneg %p55
        %p436 = pneg %p52
        %s437 = sand.u32 %s34, 1
        %s438 = scalar_lea.sflag [#allocation6], %s437
        %s439 = sand.u32 %s68, 1
        %s440 = smul.addr %s439, 456
        %s441 = scalar_lea.vmem [#allocation5], %s440
        %p442 = pneg %p81
        %p443 = pneg %p78
        %p444 = pneg %p102
        %p445 = pneg %p99
        %p446 = pneg %p123
        %p447 = pneg %p120
        %p448 = pneg %p144
        %p449 = pneg %p141
        %p450 = pneg %p165
        %p451 = pneg %p162
        %p452 = pneg %p186
        %p453 = pneg %p183
        %p454 = pneg %p207
        %p455 = pneg %p204
        %p456 = pneg %p233
        %p457 = pneg %p230
        %s458 = sand.u32 %s220, 1
        %s459 = scalar_lea.sflag [#allocation4], %s458
        %s460 = sand.u32 %s220, 1
        %s461 = smul.addr %s460, 152
        %s462 = scalar_lea.vmem [#allocation11], %s461
        %p463 = pneg %p259
        %p464 = pneg %p256
        %s465 = sand.u32 %s246, 1
        %s466 = scalar_lea.sflag [#allocation13], %s465
        %s467 = sand.u32 %s246, 1
        %s468 = smul.addr %s467, 456
        %s469 = scalar_lea.vmem [#allocation12], %s468
        %s470 = smul.u32 19, %s34
        %s471 = smul.u32 19, %s34
        %s472 = smul.u32 19, %s34
        %s473 = smul.u32 19, %s34
        %v475 = vld [vmem:[%s404] sm:$0xff]
        %v476 = vld [vmem:[%s404 + $0x8] sm:$0xff]
        %v477 = vld [vmem:[%s404 + $0x10] sm:$0xff]
        %v478 = vld [vmem:[%s404 + $0x18] sm:$0xff]
        %v479 = vld [vmem:[%s404 + $0x20] sm:$0xff]
        %v480 = vld [vmem:[%s404 + $0x28] sm:$0xff]
        %v481 = vld [vmem:[%s404 + $0x30] sm:$0xff]
        %v482 = vld [vmem:[%s404 + $0x38] sm:$0xff]
        %v483 = vld [vmem:[%s404 + $0x40] sm:$0xff]
        %v484 = vld [vmem:[%s404 + $0x48] sm:$0xff]
        %v485 = vld [vmem:[%s404 + $0x50] sm:$0xff]
        %v486 = vld [vmem:[%s404 + $0x58] sm:$0xff]
        %v487 = vld [vmem:[%s404 + $0x60] sm:$0xff]
        %v488 = vld [vmem:[%s404 + $0x68] sm:$0xff]
        %v489 = vld [vmem:[%s404 + $0x70] sm:$0xff]
        %v490 = vld [vmem:[%s404 + $0x78] sm:$0xff]
        %v491 = vld [vmem:[%s404 + $0x80] sm:$0xff]
        %v492 = vld [vmem:[%s404 + $0x88] sm:$0xff]
        %v493 = vld [vmem:[%s404 + $0x90] sm:$0xff]
        %v494 = vld [vmem:[#allocation7] sm:$0xff]
        %v495 = vld [vmem:[#allocation7 + $0x8] sm:$0xff]
        %v496 = vld [vmem:[#allocation7 + $0x10] sm:$0xff]
        %v497 = vld [vmem:[#allocation7 + $0x18] sm:$0xff]
        %v498 = vld [vmem:[#allocation7 + $0x20] sm:$0xff]
        %v499 = vld [vmem:[#allocation7 + $0x28] sm:$0xff]
        %v500 = vld [vmem:[#allocation7 + $0x30] sm:$0xff]
        %v501 = vld [vmem:[#allocation7 + $0x38] sm:$0xff]
        %v502 = vld [vmem:[#allocation7 + $0x40] sm:$0xff]
        %v503 = vld [vmem:[#allocation7 + $0x48] sm:$0xff]
        %v504 = vld [vmem:[#allocation7 + $0x50] sm:$0xff]
        %v505 = vld [vmem:[#allocation7 + $0x58] sm:$0xff]
        %v506 = vld [vmem:[#allocation7 + $0x60] sm:$0xff]
        %v507 = vld [vmem:[#allocation7 + $0x68] sm:$0xff]
        %v508 = vld [vmem:[#allocation7 + $0x70] sm:$0xff]
        %v509 = vld [vmem:[#allocation7 + $0x78] sm:$0xff]
        %v510 = vld [vmem:[%s3] sm:$0x3]
        %v511 = vld [vmem:[%s413] sm:$0xff]
        %v512 = vld [vmem:[%s413 + $0x8] sm:$0xff]
        %v513 = vld [vmem:[%s413 + $0x10] sm:$0xff]
        %v514 = vld [vmem:[%s413 + $0x18] sm:$0xff]
        %v515 = vld [vmem:[%s413 + $0x20] sm:$0xff]
        %v516 = vld [vmem:[%s413 + $0x28] sm:$0xff]
        %v517 = vld [vmem:[%s413 + $0x30] sm:$0xff]
        %v518 = vld [vmem:[%s413 + $0x38] sm:$0xff]
        %v519 = vld [vmem:[%s413 + $0x40] sm:$0xff]
        %v520 = vld [vmem:[%s413 + $0x48] sm:$0xff]
        %v521 = vld [vmem:[%s413 + $0x50] sm:$0xff]
        %v522 = vld [vmem:[%s413 + $0x58] sm:$0xff]
        %v523 = vld [vmem:[%s413 + $0x60] sm:$0xff]
        %v524 = vld [vmem:[%s413 + $0x68] sm:$0xff]
        %v525 = vld [vmem:[%s413 + $0x70] sm:$0xff]
        %v526 = vld [vmem:[%s413 + $0x78] sm:$0xff]
        %v527 = vld [vmem:[%s413 + $0x80] sm:$0xff]
        %v528 = vld [vmem:[%s413 + $0x88] sm:$0xff]
        %v529 = vld [vmem:[%s413 + $0x90] sm:$0xff]
        %v530 = vpack.c.bf16 %v512, %v511
        %v531 = vpack.c.bf16 %v514, %v513
        %v532 = vpack.c.bf16 %v516, %v515
        %v533 = vpack.c.bf16 %v518, %v517
        %v534 = vpack.c.bf16 %v520, %v519
        %v535 = vpack.c.bf16 %v522, %v521
        %v536 = vpack.c.bf16 %v524, %v523
        %v537 = vpack.c.bf16 %v526, %v525
        %v538 = vpack.c.bf16 %v528, %v527
        %v539 = vpack.c.bf16 %v529, %v529
        %v541 = vlaneseq
        %v542 = vshrl.u32 %v541, 7
        %v543 = vsub.s32 0, %v542
        %v544 = vrot.slane %v510, %v543
        %v545 = vlaneseq
        %v546 = vshrl.u32 %v545, 7
        %v547 = vsub.s32 1, %v546
        %v548 = vrot.slane %v510, %v547
        %v567 = vunpack.c.l.b16 %v494
        %v568 = vunpack.c.h.b16 %v494
        %v569 = vunpack.c.l.b16 %v495
        %v570 = vunpack.c.h.b16 %v495
        %v571 = vunpack.c.l.b16 %v496
        %v572 = vunpack.c.h.b16 %v496
        %v573 = vunpack.c.l.b16 %v497
        %v574 = vunpack.c.h.b16 %v497
        %v575 = vunpack.c.l.b16 %v498
        %v576 = vunpack.c.h.b16 %v498
        %v577 = vunpack.c.l.b16 %v499
        %v578 = vunpack.c.h.b16 %v499
        %v579 = vunpack.c.l.b16 %v500
        %v580 = vunpack.c.h.b16 %v500
        %v581 = vunpack.c.l.b16 %v501
        %v582 = vunpack.c.h.b16 %v501
        %v583 = vunpack.c.l.b16 %v502
        %v584 = vunpack.c.h.b16 %v502
        %v585 = vunpack.c.l.b16 %v503
        %v586 = vunpack.c.h.b16 %v503
        %v587 = vunpack.c.l.b16 %v504
        %v588 = vunpack.c.h.b16 %v504
        %v589 = vunpack.c.l.b16 %v505
        %v590 = vunpack.c.h.b16 %v505
        %v591 = vunpack.c.l.b16 %v506
        %v592 = vunpack.c.h.b16 %v506
        %v593 = vunpack.c.l.b16 %v507
        %v594 = vunpack.c.h.b16 %v507
        %v595 = vunpack.c.l.b16 %v508
        %v596 = vunpack.c.h.b16 %v508
        %v597 = vunpack.c.l.b16 %v509
        %v598 = vunpack.c.h.b16 %v509
        %v599 = vpack.c.b16 %v569, %v567
        %v600 = vpack.c.b16 %v570, %v568
        %v601 = vpack.c.b16 %v573, %v571
        %v602 = vpack.c.b16 %v574, %v572
        %v603 = vpack.c.b16 %v577, %v575
        %v604 = vpack.c.b16 %v578, %v576
        %v605 = vpack.c.b16 %v581, %v579
        %v606 = vpack.c.b16 %v582, %v580
        %v607 = vpack.c.b16 %v585, %v583
        %v608 = vpack.c.b16 %v586, %v584
        %v609 = vpack.c.b16 %v589, %v587
        %v610 = vpack.c.b16 %v590, %v588
        %v611 = vpack.c.b16 %v593, %v591
        %v612 = vpack.c.b16 %v594, %v592
        %v613 = vpack.c.b16 %v597, %v595
        %v614 = vpack.c.b16 %v598, %v596
        %631 = vmatprep.subr.bf16.mxu0 %v600
        %632 = vmatpush1.bf16.msra.mxu0 %v599
        %633 = vmatprep.subr.bf16.mxu0 %v602
        %634 = vmatpush1.bf16.msra.mxu0 %v601
        %635 = vmatprep.subr.bf16.mxu0 %v604
        %636 = vmatpush1.bf16.msra.mxu0 %v603
        %637 = vmatprep.subr.bf16.mxu0 %v606
        %638 = vmatpush1.bf16.msra.mxu0 %v605
        %639 = vmatprep.subr.bf16.mxu0 %v608
        %640 = vmatpush1.bf16.msra.mxu0 %v607
        %641 = vmatprep.subr.bf16.mxu0 %v610
        %642 = vmatpush1.bf16.msra.mxu0 %v609
        %643 = vmatprep.subr.bf16.mxu0 %v612
        %644 = vmatpush1.bf16.msra.mxu0 %v611
        %645 = vmatprep.subr.bf16.mxu0 %v614
        %646 = vmatpush1.bf16.msra.mxu0 %v613
        %647 = vmatprep.subr.bf16.mxu0 0
        %648 = vmatpush1.bf16.msra.mxu0 0
        %649 = vmatprep.subr.bf16.mxu0 0
        %650 = vmatpush1.bf16.msra.mxu0 0
        %651 = vmatprep.subr.bf16.mxu0 0
        %652 = vmatpush1.bf16.msra.mxu0 0
        %653 = vmatprep.subr.bf16.mxu0 0
        %654 = vmatpush1.bf16.msra.mxu0 0
        %655 = vmatprep.subr.bf16.mxu0 0
        %656 = vmatpush1.bf16.msra.mxu0 0
        %657 = vmatprep.subr.bf16.mxu0 0
        %658 = vmatpush1.bf16.msra.mxu0 0
        %659 = vmatprep.subr.bf16.mxu0 0
        %660 = vmatpush1.bf16.msra.mxu0 0
        %661 = vmatprep.subr.bf16.mxu0 0
        %662 = vmatpush1.bf16.msra.mxu0 0
        %663 = vmatprep.mubr.bf16.mxu0 0
        %664 = vmatmul.mubr.bf16.gmra.mrb[0].mxu0 %v530
        %v665 = vpop.f32.mrb[0].mxu0
        %v666 = vadd.f32 %v544, %v665
        %v667 = vpop.f32.mrb[0].mxu0
        %v668 = vadd.f32 %v548, %v667
        %v669 = vpop.f32.mrb[0].mxu0
        %v670 = vadd.f32 %v544, %v669
        %v671 = vpop.f32.mrb[0].mxu0
        %v672 = vadd.f32 %v548, %v671
        %673 = vmatprep.mubr.bf16.mxu0 0
        %674 = vmatmul.mubr.bf16.gmra.mrb[0].mxu0 %v531
        %v675 = vpop.f32.mrb[0].mxu0
        %v676 = vadd.f32 %v544, %v675
        %v677 = vpop.f32.mrb[0].mxu0
        %v678 = vadd.f32 %v548, %v677
        %v679 = vpop.f32.mrb[0].mxu0
        %v680 = vadd.f32 %v544, %v679
        %v681 = vpop.f32.mrb[0].mxu0
        %v682 = vadd.f32 %v548, %v681
        %683 = vmatprep.mubr.bf16.mxu0 0
        %684 = vmatmul.mubr.bf16.gmra.mrb[0].mxu0 %v532
        %v685 = vpop.f32.mrb[0].mxu0
        %v686 = vadd.f32 %v544, %v685
        %v687 = vpop.f32.mrb[0].mxu0
        %v688 = vadd.f32 %v548, %v687
        %v689 = vpop.f32.mrb[0].mxu0
        %v690 = vadd.f32 %v544, %v689
        %v691 = vpop.f32.mrb[0].mxu0
        %v692 = vadd.f32 %v548, %v691
        %693 = vmatprep.mubr.bf16.mxu0 0
        %694 = vmatmul.mubr.bf16.gmra.mrb[0].mxu0 %v533
        %v695 = vpop.f32.mrb[0].mxu0
        %v696 = vadd.f32 %v544, %v695
        %v697 = vpop.f32.mrb[0].mxu0
        %v698 = vadd.f32 %v548, %v697
        %v699 = vpop.f32.mrb[0].mxu0
        %v700 = vadd.f32 %v544, %v699
        %v701 = vpop.f32.mrb[0].mxu0
        %v702 = vadd.f32 %v548, %v701
        %703 = vmatprep.mubr.bf16.mxu0 0
        %704 = vmatmul.mubr.bf16.gmra.mrb[0].mxu0 %v534
        %v705 = vpop.f32.mrb[0].mxu0
        %v706 = vadd.f32 %v544, %v705
        %v707 = vpop.f32.mrb[0].mxu0
        %v708 = vadd.f32 %v548, %v707
        %v709 = vpop.f32.mrb[0].mxu0
        %v710 = vadd.f32 %v544, %v709
        %v711 = vpop.f32.mrb[0].mxu0
        %v712 = vadd.f32 %v548, %v711
        %713 = vmatprep.mubr.bf16.mxu0 0
        %714 = vmatmul.mubr.bf16.gmra.mrb[0].mxu0 %v535
        %v715 = vpop.f32.mrb[0].mxu0
        %v716 = vadd.f32 %v544, %v715
        %v717 = vpop.f32.mrb[0].mxu0
        %v718 = vadd.f32 %v548, %v717
        %v719 = vpop.f32.mrb[0].mxu0
        %v720 = vadd.f32 %v544, %v719
        %v721 = vpop.f32.mrb[0].mxu0
        %v722 = vadd.f32 %v548, %v721
        %723 = vmatprep.mubr.bf16.mxu0 0
        %724 = vmatmul.mubr.bf16.gmra.mrb[0].mxu0 %v536
        %v725 = vpop.f32.mrb[0].mxu0
        %v726 = vadd.f32 %v544, %v725
        %v727 = vpop.f32.mrb[0].mxu0
        %v728 = vadd.f32 %v548, %v727
        %v729 = vpop.f32.mrb[0].mxu0
        %v730 = vadd.f32 %v544, %v729
        %v731 = vpop.f32.mrb[0].mxu0
        %v732 = vadd.f32 %v548, %v731
        %733 = vmatprep.mubr.bf16.mxu0 0
        %734 = vmatmul.mubr.bf16.gmra.mrb[0].mxu0 %v537
        %v735 = vpop.f32.mrb[0].mxu0
        %v736 = vadd.f32 %v544, %v735
        %v737 = vpop.f32.mrb[0].mxu0
        %v738 = vadd.f32 %v548, %v737
        %v739 = vpop.f32.mrb[0].mxu0
        %v740 = vadd.f32 %v544, %v739
        %v741 = vpop.f32.mrb[0].mxu0
        %v742 = vadd.f32 %v548, %v741
        %743 = vmatprep.mubr.bf16.mxu0 0
        %744 = vmatmul.mubr.bf16.gmra.mrb[0].mxu0 %v538
        %v745 = vpop.f32.mrb[0].mxu0
        %v746 = vadd.f32 %v544, %v745
        %v747 = vpop.f32.mrb[0].mxu0
        %v748 = vadd.f32 %v548, %v747
        %v749 = vpop.f32.mrb[0].mxu0
        %v750 = vadd.f32 %v544, %v749
        %v751 = vpop.f32.mrb[0].mxu0
        %v752 = vadd.f32 %v548, %v751
        %753 = vmatprep.mubr.bf16.mxu0 0
        %754 = vmatmul.mubr.bf16.gmra.mrb[0].mxu0 %v539
        %v755 = vpop.f32.mrb[0].mxu0
        %v756 = vadd.f32 %v544, %v755
        %v757 = vpop.f32.mrb[0].mxu0
        %v758 = vadd.f32 %v548, %v757
        %v759 = vpop.f32.mrb[0].mxu0
        %v760 = vpop.f32.mrb[0].mxu0
        %761 = vdwg.mxu0
        %v762 = vmul.f32 %v666, %v668
        %v763 = vmul.f32 %v670, %v672
        %v764 = vmul.f32 %v676, %v678
        %v765 = vmul.f32 %v680, %v682
        %v766 = vmul.f32 %v686, %v688
        %v767 = vmul.f32 %v690, %v692
        %v768 = vmul.f32 %v696, %v698
        %v769 = vmul.f32 %v700, %v702
        %v770 = vmul.f32 %v706, %v708
        %v771 = vmul.f32 %v710, %v712
        %v772 = vmul.f32 %v716, %v718
        %v773 = vmul.f32 %v720, %v722
        %v774 = vmul.f32 %v726, %v728
        %v775 = vmul.f32 %v730, %v732
        %v776 = vmul.f32 %v736, %v738
        %v777 = vmul.f32 %v740, %v742
        %v778 = vmul.f32 %v746, %v748
        %v779 = vmul.f32 %v750, %v752
        %v780 = vmul.f32 %v756, %v758
        %v781 = vadd.f32 %v762, 0.0
        %v782 = vadd.f32 %v763, 0.0
        %v783 = vadd.f32 %v764, 0.0
        %v784 = vadd.f32 %v765, 0.0
        %v785 = vadd.f32 %v766, 0.0
        %v786 = vadd.f32 %v767, 0.0
        %v787 = vadd.f32 %v768, 0.0
        %v788 = vadd.f32 %v769, 0.0
        %v789 = vadd.f32 %v770, 0.0
        %v790 = vadd.f32 %v771, 0.0
        %v791 = vadd.f32 %v772, 0.0
        %v792 = vadd.f32 %v773, 0.0
        %v793 = vadd.f32 %v774, 0.0
        %v794 = vadd.f32 %v775, 0.0
        %v795 = vadd.f32 %v776, 0.0
        %v796 = vadd.f32 %v777, 0.0
        %v797 = vadd.f32 %v778, 0.0
        %v798 = vadd.f32 %v779, 0.0
        %v799 = vadd.f32 %v780, 0.0
        %v800 = vmul.f32 %v668, %v668
        %v801 = vmul.f32 %v672, %v672
        %v802 = vmul.f32 %v678, %v678
        %v803 = vmul.f32 %v682, %v682
        %v804 = vmul.f32 %v688, %v688
        %v805 = vmul.f32 %v692, %v692
        %v806 = vmul.f32 %v698, %v698
        %v807 = vmul.f32 %v702, %v702
        %v808 = vmul.f32 %v708, %v708
        %v809 = vmul.f32 %v712, %v712
        %v810 = vmul.f32 %v718, %v718
        %v811 = vmul.f32 %v722, %v722
        %v812 = vmul.f32 %v728, %v728
        %v813 = vmul.f32 %v732, %v732
        %v814 = vmul.f32 %v738, %v738
        %v815 = vmul.f32 %v742, %v742
        %v816 = vmul.f32 %v748, %v748
        %v817 = vmul.f32 %v752, %v752
        %v818 = vmul.f32 %v758, %v758
        %v819 = vadd.f32 %v800, 0.0
        %v820 = vadd.f32 %v801, 0.0
        %v821 = vadd.f32 %v802, 0.0
        %v822 = vadd.f32 %v803, 0.0
        %v823 = vadd.f32 %v804, 0.0
        %v824 = vadd.f32 %v805, 0.0
        %v825 = vadd.f32 %v806, 0.0
        %v826 = vadd.f32 %v807, 0.0
        %v827 = vadd.f32 %v808, 0.0
        %v828 = vadd.f32 %v809, 0.0
        %v829 = vadd.f32 %v810, 0.0
        %v830 = vadd.f32 %v811, 0.0
        %v831 = vadd.f32 %v812, 0.0
        %v832 = vadd.f32 %v813, 0.0
        %v833 = vadd.f32 %v814, 0.0
        %v834 = vadd.f32 %v815, 0.0
        %v835 = vadd.f32 %v816, 0.0
        %v836 = vadd.f32 %v817, 0.0
        %v837 = vadd.f32 %v818, 0.0
        %838 = vst [vmem:[%s469] sm:$0xff] %v666
        %839 = vst [vmem:[%s469 + $0x8] sm:$0xff] %v670
        %840 = vst [vmem:[%s469 + $0x10] sm:$0xff] %v676
        %841 = vst [vmem:[%s469 + $0x18] sm:$0xff] %v680
        %842 = vst [vmem:[%s469 + $0x20] sm:$0xff] %v686
        %843 = vst [vmem:[%s469 + $0x28] sm:$0xff] %v690
        %844 = vst [vmem:[%s469 + $0x30] sm:$0xff] %v696
        %845 = vst [vmem:[%s469 + $0x38] sm:$0xff] %v700
        %846 = vst [vmem:[%s469 + $0x40] sm:$0xff] %v706
        %847 = vst [vmem:[%s469 + $0x48] sm:$0xff] %v710
        %848 = vst [vmem:[%s469 + $0x50] sm:$0xff] %v716
        %849 = vst [vmem:[%s469 + $0x58] sm:$0xff] %v720
        %850 = vst [vmem:[%s469 + $0x60] sm:$0xff] %v726
        %851 = vst [vmem:[%s469 + $0x68] sm:$0xff] %v730
        %852 = vst [vmem:[%s469 + $0x70] sm:$0xff] %v736
        %853 = vst [vmem:[%s469 + $0x78] sm:$0xff] %v740
        %854 = vst [vmem:[%s469 + $0x80] sm:$0xff] %v746
        %855 = vst [vmem:[%s469 + $0x88] sm:$0xff] %v750
        %856 = vst [vmem:[%s469 + $0x90] sm:$0xff] %v756
        %s857 = scalar_lea.vmem %s413, 152 [#allocation5]
        %v858 = vld [vmem:[%s857] sm:$0xff]
        %v859 = vld [vmem:[%s857 + $0x8] sm:$0xff]
        %v860 = vld [vmem:[%s857 + $0x10] sm:$0xff]
        %v861 = vld [vmem:[%s857 + $0x18] sm:$0xff]
        %v862 = vld [vmem:[%s857 + $0x20] sm:$0xff]
        %v863 = vld [vmem:[%s857 + $0x28] sm:$0xff]
        %v864 = vld [vmem:[%s857 + $0x30] sm:$0xff]
        %v865 = vld [vmem:[%s857 + $0x38] sm:$0xff]
        %v866 = vld [vmem:[%s857 + $0x40] sm:$0xff]
        %v867 = vld [vmem:[%s857 + $0x48] sm:$0xff]
        %v868 = vld [vmem:[%s857 + $0x50] sm:$0xff]
        %v869 = vld [vmem:[%s857 + $0x58] sm:$0xff]
        %v870 = vld [vmem:[%s857 + $0x60] sm:$0xff]
        %v871 = vld [vmem:[%s857 + $0x68] sm:$0xff]
        %v872 = vld [vmem:[%s857 + $0x70] sm:$0xff]
        %v873 = vld [vmem:[%s857 + $0x78] sm:$0xff]
        %v874 = vld [vmem:[%s857 + $0x80] sm:$0xff]
        %v875 = vld [vmem:[%s857 + $0x88] sm:$0xff]
        %v876 = vld [vmem:[%s857 + $0x90] sm:$0xff]
        %v877 = vpack.c.bf16 %v859, %v858
        %v878 = vpack.c.bf16 %v861, %v860
        %v879 = vpack.c.bf16 %v863, %v862
        %v880 = vpack.c.bf16 %v865, %v864
        %v881 = vpack.c.bf16 %v867, %v866
        %v882 = vpack.c.bf16 %v869, %v868
        %v883 = vpack.c.bf16 %v871, %v870
        %v884 = vpack.c.bf16 %v873, %v872
        %v885 = vpack.c.bf16 %v875, %v874
        %v886 = vpack.c.bf16 %v876, %v876
        %887 = vmatprep.subr.bf16.mxu0 %v600
        %888 = vmatpush1.bf16.msra.mxu0 %v599
        %889 = vmatprep.subr.bf16.mxu0 %v602
        %890 = vmatpush1.bf16.msra.mxu0 %v601
        %891 = vmatprep.subr.bf16.mxu0 %v604
        %892 = vmatpush1.bf16.msra.mxu0 %v603
        %893 = vmatprep.subr.bf16.mxu0 %v606
        %894 = vmatpush1.bf16.msra.mxu0 %v605
        %895 = vmatprep.subr.bf16.mxu0 %v608
        %896 = vmatpush1.bf16.msra.mxu0 %v607
        %897 = vmatprep.subr.bf16.mxu0 %v610
        %898 = vmatpush1.bf16.msra.mxu0 %v609
        %899 = vmatprep.subr.bf16.mxu0 %v612
        %900 = vmatpush1.bf16.msra.mxu0 %v611
        %901 = vmatprep.subr.bf16.mxu0 %v614
        %902 = vmatpush1.bf16.msra.mxu0 %v613
        %903 = vmatprep.subr.bf16.mxu0 0
        %904 = vmatpush1.bf16.msra.mxu0 0
        %905 = vmatprep.subr.bf16.mxu0 0
        %906 = vmatpush1.bf16.msra.mxu0 0
        %907 = vmatprep.subr.bf16.mxu0 0
        %908 = vmatpush1.bf16.msra.mxu0 0
        %909 = vmatprep.subr.bf16.mxu0 0
        %910 = vmatpush1.bf16.msra.mxu0 0
        %911 = vmatprep.subr.bf16.mxu0 0
        %912 = vmatpush1.bf16.msra.mxu0 0
        %913 = vmatprep.subr.bf16.mxu0 0
        %914 = vmatpush1.bf16.msra.mxu0 0
        %915 = vmatprep.subr.bf16.mxu0 0
        %916 = vmatpush1.bf16.msra.mxu0 0
        %917 = vmatprep.subr.bf16.mxu0 0
        %918 = vmatpush1.bf16.msra.mxu0 0
        %919 = vmatprep.mubr.bf16.mxu0 0
        %920 = vmatmul.mubr.bf16.gmra.mrb[0].mxu0 %v877
        %v921 = vpop.f32.mrb[0].mxu0
        %v922 = vadd.f32 %v544, %v921
        %v923 = vpop.f32.mrb[0].mxu0
        %v924 = vadd.f32 %v548, %v923
        %v925 = vpop.f32.mrb[0].mxu0
        %v926 = vadd.f32 %v544, %v925
        %v927 = vpop.f32.mrb[0].mxu0
        %v928 = vadd.f32 %v548, %v927
        %929 = vmatprep.mubr.bf16.mxu0 0
        %930 = vmatmul.mubr.bf16.gmra.mrb[0].mxu0 %v878
        %v931 = vpop.f32.mrb[0].mxu0
        %v932 = vadd.f32 %v544, %v931
        %v933 = vpop.f32.mrb[0].mxu0
        %v934 = vadd.f32 %v548, %v933
        %v935 = vpop.f32.mrb[0].mxu0
        %v936 = vadd.f32 %v544, %v935
        %v937 = vpop.f32.mrb[0].mxu0
        %v938 = vadd.f32 %v548, %v937
        %939 = vmatprep.mubr.bf16.mxu0 0
        %940 = vmatmul.mubr.bf16.gmra.mrb[0].mxu0 %v879
        %v941 = vpop.f32.mrb[0].mxu0
        %v942 = vadd.f32 %v544, %v941
        %v943 = vpop.f32.mrb[0].mxu0
        %v944 = vadd.f32 %v548, %v943
        %v945 = vpop.f32.mrb[0].mxu0
        %v946 = vadd.f32 %v544, %v945
        %v947 = vpop.f32.mrb[0].mxu0
        %v948 = vadd.f32 %v548, %v947
        %949 = vmatprep.mubr.bf16.mxu0 0
        %950 = vmatmul.mubr.bf16.gmra.mrb[0].mxu0 %v880
        %v951 = vpop.f32.mrb[0].mxu0
        %v952 = vadd.f32 %v544, %v951
        %v953 = vpop.f32.mrb[0].mxu0
        %v954 = vadd.f32 %v548, %v953
        %v955 = vpop.f32.mrb[0].mxu0
        %v956 = vadd.f32 %v544, %v955
        %v957 = vpop.f32.mrb[0].mxu0
        %v958 = vadd.f32 %v548, %v957
        %959 = vmatprep.mubr.bf16.mxu0 0
        %960 = vmatmul.mubr.bf16.gmra.mrb[0].mxu0 %v881
        %v961 = vpop.f32.mrb[0].mxu0
        %v962 = vadd.f32 %v544, %v961
        %v963 = vpop.f32.mrb[0].mxu0
        %v964 = vadd.f32 %v548, %v963
        %v965 = vpop.f32.mrb[0].mxu0
        %v966 = vadd.f32 %v544, %v965
        %v967 = vpop.f32.mrb[0].mxu0
        %v968 = vadd.f32 %v548, %v967
        %969 = vmatprep.mubr.bf16.mxu0 0
        %970 = vmatmul.mubr.bf16.gmra.mrb[0].mxu0 %v882
        %v971 = vpop.f32.mrb[0].mxu0
        %v972 = vadd.f32 %v544, %v971
        %v973 = vpop.f32.mrb[0].mxu0
        %v974 = vadd.f32 %v548, %v973
        %v975 = vpop.f32.mrb[0].mxu0
        %v976 = vadd.f32 %v544, %v975
        %v977 = vpop.f32.mrb[0].mxu0
        %v978 = vadd.f32 %v548, %v977
        %979 = vmatprep.mubr.bf16.mxu0 0
        %980 = vmatmul.mubr.bf16.gmra.mrb[0].mxu0 %v883
        %v981 = vpop.f32.mrb[0].mxu0
        %v982 = vadd.f32 %v544, %v981
        %v983 = vpop.f32.mrb[0].mxu0
        %v984 = vadd.f32 %v548, %v983
        %v985 = vpop.f32.mrb[0].mxu0
        %v986 = vadd.f32 %v544, %v985
        %v987 = vpop.f32.mrb[0].mxu0
        %v988 = vadd.f32 %v548, %v987
        %989 = vmatprep.mubr.bf16.mxu0 0
        %990 = vmatmul.mubr.bf16.gmra.mrb[0].mxu0 %v884
        %v991 = vpop.f32.mrb[0].mxu0
        %v992 = vadd.f32 %v544, %v991
        %v993 = vpop.f32.mrb[0].mxu0
        %v994 = vadd.f32 %v548, %v993
        %v995 = vpop.f32.mrb[0].mxu0
        %v996 = vadd.f32 %v544, %v995
        %v997 = vpop.f32.mrb[0].mxu0
        %v998 = vadd.f32 %v548, %v997
        %999 = vmatprep.mubr.bf16.mxu0 0
        %1000 = vmatmul.mubr.bf16.gmra.mrb[0].mxu0 %v885
        %v1001 = vpop.f32.mrb[0].mxu0
        %v1002 = vadd.f32 %v544, %v1001
        %v1003 = vpop.f32.mrb[0].mxu0
        %v1004 = vadd.f32 %v548, %v1003
        %v1005 = vpop.f32.mrb[0].mxu0
        %v1006 = vadd.f32 %v544, %v1005
        %v1007 = vpop.f32.mrb[0].mxu0
        %v1008 = vadd.f32 %v548, %v1007
        %1009 = vmatprep.mubr.bf16.mxu0 0
        %1010 = vmatmul.mubr.bf16.gmra.mrb[0].mxu0 %v886
        %v1011 = vpop.f32.mrb[0].mxu0
        %v1012 = vadd.f32 %v544, %v1011
        %v1013 = vpop.f32.mrb[0].mxu0
        %v1014 = vadd.f32 %v548, %v1013
        %v1015 = vpop.f32.mrb[0].mxu0
        %v1016 = vpop.f32.mrb[0].mxu0
        %1017 = vdwg.mxu0
        %v1018 = vmul.f32 %v922, %v924
        %v1019 = vmul.f32 %v926, %v928
        %v1020 = vmul.f32 %v932, %v934
        %v1021 = vmul.f32 %v936, %v938
        %v1022 = vmul.f32 %v942, %v944
        %v1023 = vmul.f32 %v946, %v948
        %v1024 = vmul.f32 %v952, %v954
        %v1025 = vmul.f32 %v956, %v958
        %v1026 = vmul.f32 %v962, %v964
        %v1027 = vmul.f32 %v966, %v968
        %v1028 = vmul.f32 %v972, %v974
        %v1029 = vmul.f32 %v976, %v978
        %v1030 = vmul.f32 %v982, %v984
        %v1031 = vmul.f32 %v986, %v988
        %v1032 = vmul.f32 %v992, %v994
        %v1033 = vmul.f32 %v996, %v998
        %v1034 = vmul.f32 %v1002, %v1004
        %v1035 = vmul.f32 %v1006, %v1008
        %v1036 = vmul.f32 %v1012, %v1014
        %v1037 = vadd.f32 %v781, %v1018
        %v1038 = vadd.f32 %v782, %v1019
        %v1039 = vadd.f32 %v783, %v1020
        %v1040 = vadd.f32 %v784, %v1021
        %v1041 = vadd.f32 %v785, %v1022
        %v1042 = vadd.f32 %v786, %v1023
        %v1043 = vadd.f32 %v787, %v1024
        %v1044 = vadd.f32 %v788, %v1025
        %v1045 = vadd.f32 %v789, %v1026
        %v1046 = vadd.f32 %v790, %v1027
        %v1047 = vadd.f32 %v791, %v1028
        %v1048 = vadd.f32 %v792, %v1029
        %v1049 = vadd.f32 %v793, %v1030
        %v1050 = vadd.f32 %v794, %v1031
        %v1051 = vadd.f32 %v795, %v1032
        %v1052 = vadd.f32 %v796, %v1033
        %v1053 = vadd.f32 %v797, %v1034
        %v1054 = vadd.f32 %v798, %v1035
        %v1055 = vadd.f32 %v799, %v1036
        %v1056 = vmul.f32 %v924, %v924
        %v1057 = vmul.f32 %v928, %v928
        %v1058 = vmul.f32 %v934, %v934
        %v1059 = vmul.f32 %v938, %v938
        %v1060 = vmul.f32 %v944, %v944
        %v1061 = vmul.f32 %v948, %v948
        %v1062 = vmul.f32 %v954, %v954
        %v1063 = vmul.f32 %v958, %v958
        %v1064 = vmul.f32 %v964, %v964
        %v1065 = vmul.f32 %v968, %v968
        %v1066 = vmul.f32 %v974, %v974
        %v1067 = vmul.f32 %v978, %v978
        %v1068 = vmul.f32 %v984, %v984
        %v1069 = vmul.f32 %v988, %v988
        %v1070 = vmul.f32 %v994, %v994
        %v1071 = vmul.f32 %v998, %v998
        %v1072 = vmul.f32 %v1004, %v1004
        %v1073 = vmul.f32 %v1008, %v1008
        %v1074 = vmul.f32 %v1014, %v1014
        %v1075 = vadd.f32 %v819, %v1056
        %v1076 = vadd.f32 %v820, %v1057
        %v1077 = vadd.f32 %v821, %v1058
        %v1078 = vadd.f32 %v822, %v1059
        %v1079 = vadd.f32 %v823, %v1060
        %v1080 = vadd.f32 %v824, %v1061
        %v1081 = vadd.f32 %v825, %v1062
        %v1082 = vadd.f32 %v826, %v1063
        %v1083 = vadd.f32 %v827, %v1064
        %v1084 = vadd.f32 %v828, %v1065
        %v1085 = vadd.f32 %v829, %v1066
        %v1086 = vadd.f32 %v830, %v1067
        %v1087 = vadd.f32 %v831, %v1068
        %v1088 = vadd.f32 %v832, %v1069
        %v1089 = vadd.f32 %v833, %v1070
        %v1090 = vadd.f32 %v834, %v1071
        %v1091 = vadd.f32 %v835, %v1072
        %v1092 = vadd.f32 %v836, %v1073
        %v1093 = vadd.f32 %v837, %v1074
        %s1094 = scalar_lea.vmem %s469, 152 [#allocation12]
        %1095 = vst [vmem:[%s1094] sm:$0xff] %v922
        %1096 = vst [vmem:[%s1094 + $0x8] sm:$0xff] %v926
        %1097 = vst [vmem:[%s1094 + $0x10] sm:$0xff] %v932
        %1098 = vst [vmem:[%s1094 + $0x18] sm:$0xff] %v936
        %1099 = vst [vmem:[%s1094 + $0x20] sm:$0xff] %v942
        %1100 = vst [vmem:[%s1094 + $0x28] sm:$0xff] %v946
        %1101 = vst [vmem:[%s1094 + $0x30] sm:$0xff] %v952
        %1102 = vst [vmem:[%s1094 + $0x38] sm:$0xff] %v956
        %1103 = vst [vmem:[%s1094 + $0x40] sm:$0xff] %v962
        %1104 = vst [vmem:[%s1094 + $0x48] sm:$0xff] %v966
        %1105 = vst [vmem:[%s1094 + $0x50] sm:$0xff] %v972
        %1106 = vst [vmem:[%s1094 + $0x58] sm:$0xff] %v976
        %1107 = vst [vmem:[%s1094 + $0x60] sm:$0xff] %v982
        %1108 = vst [vmem:[%s1094 + $0x68] sm:$0xff] %v986
        %1109 = vst [vmem:[%s1094 + $0x70] sm:$0xff] %v992
        %1110 = vst [vmem:[%s1094 + $0x78] sm:$0xff] %v996
        %1111 = vst [vmem:[%s1094 + $0x80] sm:$0xff] %v1002
        %1112 = vst [vmem:[%s1094 + $0x88] sm:$0xff] %v1006
        %1113 = vst [vmem:[%s1094 + $0x90] sm:$0xff] %v1012
        %s1114 = scalar_lea.vmem %s413, 304 [#allocation5]
        %v1115 = vld [vmem:[%s1114] sm:$0xff]
        %v1116 = vld [vmem:[%s1114 + $0x8] sm:$0xff]
        %v1117 = vld [vmem:[%s1114 + $0x10] sm:$0xff]
        %v1118 = vld [vmem:[%s1114 + $0x18] sm:$0xff]
        %v1119 = vld [vmem:[%s1114 + $0x20] sm:$0xff]
        %v1120 = vld [vmem:[%s1114 + $0x28] sm:$0xff]
        %v1121 = vld [vmem:[%s1114 + $0x30] sm:$0xff]
        %v1122 = vld [vmem:[%s1114 + $0x38] sm:$0xff]
        %v1123 = vld [vmem:[%s1114 + $0x40] sm:$0xff]
        %v1124 = vld [vmem:[%s1114 + $0x48] sm:$0xff]
        %v1125 = vld [vmem:[%s1114 + $0x50] sm:$0xff]
        %v1126 = vld [vmem:[%s1114 + $0x58] sm:$0xff]
        %v1127 = vld [vmem:[%s1114 + $0x60] sm:$0xff]
        %v1128 = vld [vmem:[%s1114 + $0x68] sm:$0xff]
        %v1129 = vld [vmem:[%s1114 + $0x70] sm:$0xff]
        %v1130 = vld [vmem:[%s1114 + $0x78] sm:$0xff]
        %v1131 = vld [vmem:[%s1114 + $0x80] sm:$0xff]
        %v1132 = vld [vmem:[%s1114 + $0x88] sm:$0xff]
        %v1133 = vld [vmem:[%s1114 + $0x90] sm:$0xff]
        %v1134 = vpack.c.bf16 %v1116, %v1115
        %v1135 = vpack.c.bf16 %v1118, %v1117
        %v1136 = vpack.c.bf16 %v1120, %v1119
        %v1137 = vpack.c.bf16 %v1122, %v1121
        %v1138 = vpack.c.bf16 %v1124, %v1123
        %v1139 = vpack.c.bf16 %v1126, %v1125
        %v1140 = vpack.c.bf16 %v1128, %v1127
        %v1141 = vpack.c.bf16 %v1130, %v1129
        %v1142 = vpack.c.bf16 %v1132, %v1131
        %v1143 = vpack.c.bf16 %v1133, %v1133
        %1144 = vmatprep.subr.bf16.mxu0 %v600
        %1145 = vmatpush1.bf16.msra.mxu0 %v599
        %1146 = vmatprep.subr.bf16.mxu0 %v602
        %1147 = vmatpush1.bf16.msra.mxu0 %v601
        %1148 = vmatprep.subr.bf16.mxu0 %v604
        %1149 = vmatpush1.bf16.msra.mxu0 %v603
        %1150 = vmatprep.subr.bf16.mxu0 %v606
        %1151 = vmatpush1.bf16.msra.mxu0 %v605
        %1152 = vmatprep.subr.bf16.mxu0 %v608
        %1153 = vmatpush1.bf16.msra.mxu0 %v607
        %1154 = vmatprep.subr.bf16.mxu0 %v610
        %1155 = vmatpush1.bf16.msra.mxu0 %v609
        %1156 = vmatprep.subr.bf16.mxu0 %v612
        %1157 = vmatpush1.bf16.msra.mxu0 %v611
        %1158 = vmatprep.subr.bf16.mxu0 %v614
        %1159 = vmatpush1.bf16.msra.mxu0 %v613
        %1160 = vmatprep.subr.bf16.mxu0 0
        %1161 = vmatpush1.bf16.msra.mxu0 0
        %1162 = vmatprep.subr.bf16.mxu0 0
        %1163 = vmatpush1.bf16.msra.mxu0 0
        %1164 = vmatprep.subr.bf16.mxu0 0
        %1165 = vmatpush1.bf16.msra.mxu0 0
        %1166 = vmatprep.subr.bf16.mxu0 0
        %1167 = vmatpush1.bf16.msra.mxu0 0
        %1168 = vmatprep.subr.bf16.mxu0 0
        %1169 = vmatpush1.bf16.msra.mxu0 0
        %1170 = vmatprep.subr.bf16.mxu0 0
        %1171 = vmatpush1.bf16.msra.mxu0 0
        %1172 = vmatprep.subr.bf16.mxu0 0
        %1173 = vmatpush1.bf16.msra.mxu0 0
        %1174 = vmatprep.subr.bf16.mxu0 0
        %1175 = vmatpush1.bf16.msra.mxu0 0
        %1176 = vmatprep.mubr.bf16.mxu0 0
        %1177 = vmatmul.mubr.bf16.gmra.mrb[0].mxu0 %v1134
        %v1178 = vpop.f32.mrb[0].mxu0
        %v1179 = vadd.f32 %v544, %v1178
        %v1180 = vpop.f32.mrb[0].mxu0
        %v1181 = vadd.f32 %v548, %v1180
        %v1182 = vpop.f32.mrb[0].mxu0
        %v1183 = vadd.f32 %v544, %v1182
        %v1184 = vpop.f32.mrb[0].mxu0
        %v1185 = vadd.f32 %v548, %v1184
        %1186 = vmatprep.mubr.bf16.mxu0 0
        %1187 = vmatmul.mubr.bf16.gmra.mrb[0].mxu0 %v1135
        %v1188 = vpop.f32.mrb[0].mxu0
        %v1189 = vadd.f32 %v544, %v1188
        %v1190 = vpop.f32.mrb[0].mxu0
        %v1191 = vadd.f32 %v548, %v1190
        %v1192 = vpop.f32.mrb[0].mxu0
        %v1193 = vadd.f32 %v544, %v1192
        %v1194 = vpop.f32.mrb[0].mxu0
        %v1195 = vadd.f32 %v548, %v1194
        %1196 = vmatprep.mubr.bf16.mxu0 0
        %1197 = vmatmul.mubr.bf16.gmra.mrb[0].mxu0 %v1136
        %v1198 = vpop.f32.mrb[0].mxu0
        %v1199 = vadd.f32 %v544, %v1198
        %v1200 = vpop.f32.mrb[0].mxu0
        %v1201 = vadd.f32 %v548, %v1200
        %v1202 = vpop.f32.mrb[0].mxu0
        %v1203 = vadd.f32 %v544, %v1202
        %v1204 = vpop.f32.mrb[0].mxu0
        %v1205 = vadd.f32 %v548, %v1204
        %1206 = vmatprep.mubr.bf16.mxu0 0
        %1207 = vmatmul.mubr.bf16.gmra.mrb[0].mxu0 %v1137
        %v1208 = vpop.f32.mrb[0].mxu0
        %v1209 = vadd.f32 %v544, %v1208
        %v1210 = vpop.f32.mrb[0].mxu0
        %v1211 = vadd.f32 %v548, %v1210
        %v1212 = vpop.f32.mrb[0].mxu0
        %v1213 = vadd.f32 %v544, %v1212
        %v1214 = vpop.f32.mrb[0].mxu0
        %v1215 = vadd.f32 %v548, %v1214
        %1216 = vmatprep.mubr.bf16.mxu0 0
        %1217 = vmatmul.mubr.bf16.gmra.mrb[0].mxu0 %v1138
        %v1218 = vpop.f32.mrb[0].mxu0
        %v1219 = vadd.f32 %v544, %v1218
        %v1220 = vpop.f32.mrb[0].mxu0
        %v1221 = vadd.f32 %v548, %v1220
        %v1222 = vpop.f32.mrb[0].mxu0
        %v1223 = vadd.f32 %v544, %v1222
        %v1224 = vpop.f32.mrb[0].mxu0
        %v1225 = vadd.f32 %v548, %v1224
        %1226 = vmatprep.mubr.bf16.mxu0 0
        %1227 = vmatmul.mubr.bf16.gmra.mrb[0].mxu0 %v1139
        %v1228 = vpop.f32.mrb[0].mxu0
        %v1229 = vadd.f32 %v544, %v1228
        %v1230 = vpop.f32.mrb[0].mxu0
        %v1231 = vadd.f32 %v548, %v1230
        %v1232 = vpop.f32.mrb[0].mxu0
        %v1233 = vadd.f32 %v544, %v1232
        %v1234 = vpop.f32.mrb[0].mxu0
        %v1235 = vadd.f32 %v548, %v1234
        %1236 = vmatprep.mubr.bf16.mxu0 0
        %1237 = vmatmul.mubr.bf16.gmra.mrb[0].mxu0 %v1140
        %v1238 = vpop.f32.mrb[0].mxu0
        %v1239 = vadd.f32 %v544, %v1238
        %v1240 = vpop.f32.mrb[0].mxu0
        %v1241 = vadd.f32 %v548, %v1240
        %v1242 = vpop.f32.mrb[0].mxu0
        %v1243 = vadd.f32 %v544, %v1242
        %v1244 = vpop.f32.mrb[0].mxu0
        %v1245 = vadd.f32 %v548, %v1244
        %1246 = vmatprep.mubr.bf16.mxu0 0
        %1247 = vmatmul.mubr.bf16.gmra.mrb[0].mxu0 %v1141
        %v1248 = vpop.f32.mrb[0].mxu0
        %v1249 = vadd.f32 %v544, %v1248
        %v1250 = vpop.f32.mrb[0].mxu0
        %v1251 = vadd.f32 %v548, %v1250
        %v1252 = vpop.f32.mrb[0].mxu0
        %v1253 = vadd.f32 %v544, %v1252
        %v1254 = vpop.f32.mrb[0].mxu0
        %v1255 = vadd.f32 %v548, %v1254
        %1256 = vmatprep.mubr.bf16.mxu0 0
        %1257 = vmatmul.mubr.bf16.gmra.mrb[0].mxu0 %v1142
        %v1258 = vpop.f32.mrb[0].mxu0
        %v1259 = vadd.f32 %v544, %v1258
        %v1260 = vpop.f32.mrb[0].mxu0
        %v1261 = vadd.f32 %v548, %v1260
        %v1262 = vpop.f32.mrb[0].mxu0
        %v1263 = vadd.f32 %v544, %v1262
        %v1264 = vpop.f32.mrb[0].mxu0
        %v1265 = vadd.f32 %v548, %v1264
        %1266 = vmatprep.mubr.bf16.mxu0 0
        %1267 = vmatmul.mubr.bf16.gmra.mrb[0].mxu0 %v1143
        %v1268 = vpop.f32.mrb[0].mxu0
        %v1269 = vadd.f32 %v544, %v1268
        %v1270 = vpop.f32.mrb[0].mxu0
        %v1271 = vadd.f32 %v548, %v1270
        %v1272 = vpop.f32.mrb[0].mxu0
        %v1273 = vpop.f32.mrb[0].mxu0
        %1274 = vdwg.mxu0
        %v1275 = vmul.f32 %v1179, %v1181
        %v1276 = vmul.f32 %v1183, %v1185
        %v1277 = vmul.f32 %v1189, %v1191
        %v1278 = vmul.f32 %v1193, %v1195
        %v1279 = vmul.f32 %v1199, %v1201
        %v1280 = vmul.f32 %v1203, %v1205
        %v1281 = vmul.f32 %v1209, %v1211
        %v1282 = vmul.f32 %v1213, %v1215
        %v1283 = vmul.f32 %v1219, %v1221
        %v1284 = vmul.f32 %v1223, %v1225
        %v1285 = vmul.f32 %v1229, %v1231
        %v1286 = vmul.f32 %v1233, %v1235
        %v1287 = vmul.f32 %v1239, %v1241
        %v1288 = vmul.f32 %v1243, %v1245
        %v1289 = vmul.f32 %v1249, %v1251
        %v1290 = vmul.f32 %v1253, %v1255
        %v1291 = vmul.f32 %v1259, %v1261
        %v1292 = vmul.f32 %v1263, %v1265
        %v1293 = vmul.f32 %v1269, %v1271
        %v1294 = vadd.f32 %v1037, %v1275
        %v1295 = vadd.f32 %v1038, %v1276
        %v1296 = vadd.f32 %v1039, %v1277
        %v1297 = vadd.f32 %v1040, %v1278
        %v1298 = vadd.f32 %v1041, %v1279
        %v1299 = vadd.f32 %v1042, %v1280
        %v1300 = vadd.f32 %v1043, %v1281
        %v1301 = vadd.f32 %v1044, %v1282
        %v1302 = vadd.f32 %v1045, %v1283
        %v1303 = vadd.f32 %v1046, %v1284
        %v1304 = vadd.f32 %v1047, %v1285
        %v1305 = vadd.f32 %v1048, %v1286
        %v1306 = vadd.f32 %v1049, %v1287
        %v1307 = vadd.f32 %v1050, %v1288
        %v1308 = vadd.f32 %v1051, %v1289
        %v1309 = vadd.f32 %v1052, %v1290
        %v1310 = vadd.f32 %v1053, %v1291
        %v1311 = vadd.f32 %v1054, %v1292
        %v1312 = vadd.f32 %v1055, %v1293
        %v1313 = vmul.f32 %v1181, %v1181
        %v1314 = vmul.f32 %v1185, %v1185
        %v1315 = vmul.f32 %v1191, %v1191
        %v1316 = vmul.f32 %v1195, %v1195
        %v1317 = vmul.f32 %v1201, %v1201
        %v1318 = vmul.f32 %v1205, %v1205
        %v1319 = vmul.f32 %v1211, %v1211
        %v1320 = vmul.f32 %v1215, %v1215
        %v1321 = vmul.f32 %v1221, %v1221
        %v1322 = vmul.f32 %v1225, %v1225
        %v1323 = vmul.f32 %v1231, %v1231
        %v1324 = vmul.f32 %v1235, %v1235
        %v1325 = vmul.f32 %v1241, %v1241
        %v1326 = vmul.f32 %v1245, %v1245
        %v1327 = vmul.f32 %v1251, %v1251
        %v1328 = vmul.f32 %v1255, %v1255
        %v1329 = vmul.f32 %v1261, %v1261
        %v1330 = vmul.f32 %v1265, %v1265
        %v1331 = vmul.f32 %v1271, %v1271
        %v1332 = vadd.f32 %v1075, %v1313
        %v1333 = vadd.f32 %v1076, %v1314
        %v1334 = vadd.f32 %v1077, %v1315
        %v1335 = vadd.f32 %v1078, %v1316
        %v1336 = vadd.f32 %v1079, %v1317
        %v1337 = vadd.f32 %v1080, %v1318
        %v1338 = vadd.f32 %v1081, %v1319
        %v1339 = vadd.f32 %v1082, %v1320
        %v1340 = vadd.f32 %v1083, %v1321
        %v1341 = vadd.f32 %v1084, %v1322
        %v1342 = vadd.f32 %v1085, %v1323
        %v1343 = vadd.f32 %v1086, %v1324
        %v1344 = vadd.f32 %v1087, %v1325
        %v1345 = vadd.f32 %v1088, %v1326
        %v1346 = vadd.f32 %v1089, %v1327
        %v1347 = vadd.f32 %v1090, %v1328
        %v1348 = vadd.f32 %v1091, %v1329
        %v1349 = vadd.f32 %v1092, %v1330
        %v1350 = vadd.f32 %v1093, %v1331
        %s1351 = scalar_lea.vmem %s469, 304 [#allocation12]
        %1352 = vst [vmem:[%s1351] sm:$0xff] %v1179
        %1353 = vst [vmem:[%s1351 + $0x8] sm:$0xff] %v1183
        %1354 = vst [vmem:[%s1351 + $0x10] sm:$0xff] %v1189
        %1355 = vst [vmem:[%s1351 + $0x18] sm:$0xff] %v1193
        %1356 = vst [vmem:[%s1351 + $0x20] sm:$0xff] %v1199
        %1357 = vst [vmem:[%s1351 + $0x28] sm:$0xff] %v1203
        %1358 = vst [vmem:[%s1351 + $0x30] sm:$0xff] %v1209
        %1359 = vst [vmem:[%s1351 + $0x38] sm:$0xff] %v1213
        %1360 = vst [vmem:[%s1351 + $0x40] sm:$0xff] %v1219
        %1361 = vst [vmem:[%s1351 + $0x48] sm:$0xff] %v1223
        %1362 = vst [vmem:[%s1351 + $0x50] sm:$0xff] %v1229
        %1363 = vst [vmem:[%s1351 + $0x58] sm:$0xff] %v1233
        %1364 = vst [vmem:[%s1351 + $0x60] sm:$0xff] %v1239
        %1365 = vst [vmem:[%s1351 + $0x68] sm:$0xff] %v1243
        %1366 = vst [vmem:[%s1351 + $0x70] sm:$0xff] %v1249
        %1367 = vst [vmem:[%s1351 + $0x78] sm:$0xff] %v1253
        %1368 = vst [vmem:[%s1351 + $0x80] sm:$0xff] %v1259
        %1369 = vst [vmem:[%s1351 + $0x88] sm:$0xff] %v1263
        %1370 = vst [vmem:[%s1351 + $0x90] sm:$0xff] %v1269
        %v1371 = vrsqrt.pop %v1332
        %v1372 = vmul.f32 %v1332, %v1371
        %vm1373 = vcmp.eq.f32.partialorder %v1332, inf
        %v1374 = vsel %vm1373, %v1332, %v1372
        %vm1375 = vcmp.eq.f32.partialorder %v1332, 0.0
        %v1376 = vand.u32 %v1332, 2147483648
        %v1377 = vsel %vm1375, %v1376, %v1374
        %v1378 = vrsqrt.pop %v1333
        %v1379 = vmul.f32 %v1333, %v1378
        %vm1380 = vcmp.eq.f32.partialorder %v1333, inf
        %v1381 = vsel %vm1380, %v1333, %v1379
        %vm1382 = vcmp.eq.f32.partialorder %v1333, 0.0
        %v1383 = vand.u32 %v1333, 2147483648
        %v1384 = vsel %vm1382, %v1383, %v1381
        %v1385 = vrsqrt.pop %v1334
        %v1386 = vmul.f32 %v1334, %v1385
        %vm1387 = vcmp.eq.f32.partialorder %v1334, inf
        %v1388 = vsel %vm1387, %v1334, %v1386
        %vm1389 = vcmp.eq.f32.partialorder %v1334, 0.0
        %v1390 = vand.u32 %v1334, 2147483648
        %v1391 = vsel %vm1389, %v1390, %v1388
        %v1392 = vrsqrt.pop %v1335
        %v1393 = vmul.f32 %v1335, %v1392
        %vm1394 = vcmp.eq.f32.partialorder %v1335, inf
        %v1395 = vsel %vm1394, %v1335, %v1393
        %vm1396 = vcmp.eq.f32.partialorder %v1335, 0.0
        %v1397 = vand.u32 %v1335, 2147483648
        %v1398 = vsel %vm1396, %v1397, %v1395
        %v1399 = vrsqrt.pop %v1336
        %v1400 = vmul.f32 %v1336, %v1399
        %vm1401 = vcmp.eq.f32.partialorder %v1336, inf
        %v1402 = vsel %vm1401, %v1336, %v1400
        %vm1403 = vcmp.eq.f32.partialorder %v1336, 0.0
        %v1404 = vand.u32 %v1336, 2147483648
        %v1405 = vsel %vm1403, %v1404, %v1402
        %v1406 = vrsqrt.pop %v1337
        %v1407 = vmul.f32 %v1337, %v1406
        %vm1408 = vcmp.eq.f32.partialorder %v1337, inf
        %v1409 = vsel %vm1408, %v1337, %v1407
        %vm1410 = vcmp.eq.f32.partialorder %v1337, 0.0
        %v1411 = vand.u32 %v1337, 2147483648
        %v1412 = vsel %vm1410, %v1411, %v1409
        %v1413 = vrsqrt.pop %v1338
        %v1414 = vmul.f32 %v1338, %v1413
        %vm1415 = vcmp.eq.f32.partialorder %v1338, inf
        %v1416 = vsel %vm1415, %v1338, %v1414
        %vm1417 = vcmp.eq.f32.partialorder %v1338, 0.0
        %v1418 = vand.u32 %v1338, 2147483648
        %v1419 = vsel %vm1417, %v1418, %v1416
        %v1420 = vrsqrt.pop %v1339
        %v1421 = vmul.f32 %v1339, %v1420
        %vm1422 = vcmp.eq.f32.partialorder %v1339, inf
        %v1423 = vsel %vm1422, %v1339, %v1421
        %vm1424 = vcmp.eq.f32.partialorder %v1339, 0.0
        %v1425 = vand.u32 %v1339, 2147483648
        %v1426 = vsel %vm1424, %v1425, %v1423
        %v1427 = vrsqrt.pop %v1340
        %v1428 = vmul.f32 %v1340, %v1427
        %vm1429 = vcmp.eq.f32.partialorder %v1340, inf
        %v1430 = vsel %vm1429, %v1340, %v1428
        %vm1431 = vcmp.eq.f32.partialorder %v1340, 0.0
        %v1432 = vand.u32 %v1340, 2147483648
        %v1433 = vsel %vm1431, %v1432, %v1430
        %v1434 = vrsqrt.pop %v1341
        %v1435 = vmul.f32 %v1341, %v1434
        %vm1436 = vcmp.eq.f32.partialorder %v1341, inf
        %v1437 = vsel %vm1436, %v1341, %v1435
        %vm1438 = vcmp.eq.f32.partialorder %v1341, 0.0
        %v1439 = vand.u32 %v1341, 2147483648
        %v1440 = vsel %vm1438, %v1439, %v1437
        %v1441 = vrsqrt.pop %v1342
        %v1442 = vmul.f32 %v1342, %v1441
        %vm1443 = vcmp.eq.f32.partialorder %v1342, inf
        %v1444 = vsel %vm1443, %v1342, %v1442
        %vm1445 = vcmp.eq.f32.partialorder %v1342, 0.0
        %v1446 = vand.u32 %v1342, 2147483648
        %v1447 = vsel %vm1445, %v1446, %v1444
        %v1448 = vrsqrt.pop %v1343
        %v1449 = vmul.f32 %v1343, %v1448
        %vm1450 = vcmp.eq.f32.partialorder %v1343, inf
        %v1451 = vsel %vm1450, %v1343, %v1449
        %vm1452 = vcmp.eq.f32.partialorder %v1343, 0.0
        %v1453 = vand.u32 %v1343, 2147483648
        %v1454 = vsel %vm1452, %v1453, %v1451
        %v1455 = vrsqrt.pop %v1344
        %v1456 = vmul.f32 %v1344, %v1455
        %vm1457 = vcmp.eq.f32.partialorder %v1344, inf
        %v1458 = vsel %vm1457, %v1344, %v1456
        %vm1459 = vcmp.eq.f32.partialorder %v1344, 0.0
        %v1460 = vand.u32 %v1344, 2147483648
        %v1461 = vsel %vm1459, %v1460, %v1458
        %v1462 = vrsqrt.pop %v1345
        %v1463 = vmul.f32 %v1345, %v1462
        %vm1464 = vcmp.eq.f32.partialorder %v1345, inf
        %v1465 = vsel %vm1464, %v1345, %v1463
        %vm1466 = vcmp.eq.f32.partialorder %v1345, 0.0
        %v1467 = vand.u32 %v1345, 2147483648
        %v1468 = vsel %vm1466, %v1467, %v1465
        %v1469 = vrsqrt.pop %v1346
        %v1470 = vmul.f32 %v1346, %v1469
        %vm1471 = vcmp.eq.f32.partialorder %v1346, inf
        %v1472 = vsel %vm1471, %v1346, %v1470
        %vm1473 = vcmp.eq.f32.partialorder %v1346, 0.0
        %v1474 = vand.u32 %v1346, 2147483648
        %v1475 = vsel %vm1473, %v1474, %v1472
        %v1476 = vrsqrt.pop %v1347
        %v1477 = vmul.f32 %v1347, %v1476
        %vm1478 = vcmp.eq.f32.partialorder %v1347, inf
        %v1479 = vsel %vm1478, %v1347, %v1477
        %vm1480 = vcmp.eq.f32.partialorder %v1347, 0.0
        %v1481 = vand.u32 %v1347, 2147483648
        %v1482 = vsel %vm1480, %v1481, %v1479
        %v1483 = vrsqrt.pop %v1348
        %v1484 = vmul.f32 %v1348, %v1483
        %vm1485 = vcmp.eq.f32.partialorder %v1348, inf
        %v1486 = vsel %vm1485, %v1348, %v1484
        %vm1487 = vcmp.eq.f32.partialorder %v1348, 0.0
        %v1488 = vand.u32 %v1348, 2147483648
        %v1489 = vsel %vm1487, %v1488, %v1486
        %v1490 = vrsqrt.pop %v1349
        %v1491 = vmul.f32 %v1349, %v1490
        %vm1492 = vcmp.eq.f32.partialorder %v1349, inf
        %v1493 = vsel %vm1492, %v1349, %v1491
        %vm1494 = vcmp.eq.f32.partialorder %v1349, 0.0
        %v1495 = vand.u32 %v1349, 2147483648
        %v1496 = vsel %vm1494, %v1495, %v1493
        %v1497 = vrsqrt.pop %v1350
        %v1498 = vmul.f32 %v1350, %v1497
        %vm1499 = vcmp.eq.f32.partialorder %v1350, inf
        %v1500 = vsel %vm1499, %v1350, %v1498
        %vm1501 = vcmp.eq.f32.partialorder %v1350, 0.0
        %v1502 = vand.u32 %v1350, 2147483648
        %v1503 = vsel %vm1501, %v1502, %v1500
        %v1504 = vpack.c.bf16 %v1384, %v1377
        %v1505 = vpack.c.bf16 %v476, %v475
        %v1506 = vpack.c.bf16 %v1398, %v1391
        %v1507 = vpack.c.bf16 %v478, %v477
        %v1508 = vpack.c.bf16 %v1412, %v1405
        %v1509 = vpack.c.bf16 %v480, %v479
        %v1510 = vpack.c.bf16 %v1426, %v1419
        %v1511 = vpack.c.bf16 %v482, %v481
        %v1512 = vpack.c.bf16 %v1440, %v1433
        %v1513 = vpack.c.bf16 %v484, %v483
        %v1514 = vpack.c.bf16 %v1454, %v1447
        %v1515 = vpack.c.bf16 %v486, %v485
        %v1516 = vpack.c.bf16 %v1468, %v1461
        %v1517 = vpack.c.bf16 %v488, %v487
        %v1518 = vpack.c.bf16 %v1482, %v1475
        %v1519 = vpack.c.bf16 %v490, %v489
        %v1520 = vpack.c.bf16 %v1496, %v1489
        %v1521 = vpack.c.bf16 %v492, %v491
        %v1522 = vpack.c.bf16 %v1503, %v1503
        %v1523 = vpack.c.bf16 %v493, %v493
        %v1524 = vld [vmem:[#allocation8] sm:$0xf]
        %v1525 = vld [vmem:[#allocation8 + $0x4] sm:$0xf]
        %v1526 = vld [vmem:[#allocation8 + $0x8] sm:$0xf]
        %v1527 = vld [vmem:[#allocation8 + $0xc] sm:$0xf]
        %v1528 = vld [vmem:[#allocation8 + $0x10] sm:$0xf]
        %v1529 = vld [vmem:[#allocation8 + $0x14] sm:$0xf]
        %v1530 = vld [vmem:[#allocation8 + $0x18] sm:$0xf]
        %v1531 = vld [vmem:[#allocation8 + $0x1c] sm:$0xf]
        %v1532 = vld [vmem:[#allocation8 + $0x20] sm:$0xf]
        %v1533 = vld [vmem:[#allocation8 + $0x24] sm:$0xf]
        %v1534 = vld [vmem:[#allocation8 + $0x28] sm:$0xf]
        %v1535 = vld [vmem:[#allocation8 + $0x2c] sm:$0xf]
        %v1536 = vld [vmem:[#allocation8 + $0x30] sm:$0xf]
        %v1537 = vld [vmem:[#allocation8 + $0x34] sm:$0xf]
        %v1538 = vld [vmem:[#allocation8 + $0x38] sm:$0xf]
        %v1539 = vld [vmem:[#allocation8 + $0x3c] sm:$0xf]
        %v1540 = vld [vmem:[#allocation8 + $0x40] sm:$0xf]
        %v1541 = vld [vmem:[#allocation8 + $0x44] sm:$0xf]
        %v1542 = vld [vmem:[#allocation8 + $0x48] sm:$0xf]
        %v1543 = vld [vmem:[#allocation8 + $0x4c] sm:$0xf]
        %v1544 = vld [vmem:[#allocation8 + $0x50] sm:$0xf]
        %v1545 = vld [vmem:[#allocation8 + $0x54] sm:$0xf]
        %v1546 = vld [vmem:[#allocation8 + $0x58] sm:$0xf]
        %v1547 = vld [vmem:[#allocation8 + $0x5c] sm:$0xf]
        %v1548 = vld [vmem:[#allocation8 + $0x60] sm:$0xf]
        %v1549 = vld [vmem:[#allocation8 + $0x64] sm:$0xf]
        %v1550 = vld [vmem:[#allocation8 + $0x68] sm:$0xf]
        %v1551 = vld [vmem:[#allocation8 + $0x6c] sm:$0xf]
        %v1552 = vld [vmem:[#allocation8 + $0x70] sm:$0xf]
        %v1553 = vld [vmem:[#allocation8 + $0x74] sm:$0xf]
        %v1554 = vld [vmem:[#allocation8 + $0x78] sm:$0xf]
        %v1555 = vld [vmem:[#allocation8 + $0x7c] sm:$0xf]
        %v1556 = vld [vmem:[%s5] sm:$0x1]
        %v1558 = vlaneseq
        %v1559 = vshrl.u32 %v1558, 7
        %v1560 = vsub.s32 0, %v1559
        %v1561 = vrot.slane %v1556, %v1560
        %v1595 = vunpack.c.l.b16 %v1524
        %v1596 = vunpack.c.l.b16 %v1525
        %v1597 = vunpack.c.l.b16 %v1526
        %v1598 = vunpack.c.l.b16 %v1527
        %v1599 = vunpack.c.l.b16 %v1528
        %v1600 = vunpack.c.l.b16 %v1529
        %v1601 = vunpack.c.l.b16 %v1530
        %v1602 = vunpack.c.l.b16 %v1531
        %v1603 = vunpack.c.l.b16 %v1532
        %v1604 = vunpack.c.l.b16 %v1533
        %v1605 = vunpack.c.l.b16 %v1534
        %v1606 = vunpack.c.l.b16 %v1535
        %v1607 = vunpack.c.l.b16 %v1536
        %v1608 = vunpack.c.l.b16 %v1537
        %v1609 = vunpack.c.l.b16 %v1538
        %v1610 = vunpack.c.l.b16 %v1539
        %v1611 = vunpack.c.l.b16 %v1540
        %v1612 = vunpack.c.l.b16 %v1541
        %v1613 = vunpack.c.l.b16 %v1542
        %v1614 = vunpack.c.l.b16 %v1543
        %v1615 = vunpack.c.l.b16 %v1544
        %v1616 = vunpack.c.l.b16 %v1545
        %v1617 = vunpack.c.l.b16 %v1546
        %v1618 = vunpack.c.l.b16 %v1547
        %v1619 = vunpack.c.l.b16 %v1548
        %v1620 = vunpack.c.l.b16 %v1549
        %v1621 = vunpack.c.l.b16 %v1550
        %v1622 = vunpack.c.l.b16 %v1551
        %v1623 = vunpack.c.l.b16 %v1552
        %v1624 = vunpack.c.l.b16 %v1553
        %v1625 = vunpack.c.l.b16 %v1554
        %v1626 = vunpack.c.l.b16 %v1555
        %v1627 = vpack.c.b16 %v1596, %v1595
        %v1628 = vpack.c.b16 %v1598, %v1597
        %v1629 = vpack.c.b16 %v1600, %v1599
        %v1630 = vpack.c.b16 %v1602, %v1601
        %v1631 = vpack.c.b16 %v1604, %v1603
        %v1632 = vpack.c.b16 %v1606, %v1605
        %v1633 = vpack.c.b16 %v1608, %v1607
        %v1634 = vpack.c.b16 %v1610, %v1609
        %v1635 = vpack.c.b16 %v1612, %v1611
        %v1636 = vpack.c.b16 %v1614, %v1613
        %v1637 = vpack.c.b16 %v1616, %v1615
        %v1638 = vpack.c.b16 %v1618, %v1617
        %v1639 = vpack.c.b16 %v1620, %v1619
        %v1640 = vpack.c.b16 %v1622, %v1621
        %v1641 = vpack.c.b16 %v1624, %v1623
        %v1642 = vpack.c.b16 %v1626, %v1625
        %1659 = vmatprep.subr.bf16.mxu0 0
        %1660 = vmatpush1.bf16.msra.mxu0 %v1627
        %1661 = vmatprep.subr.bf16.mxu0 0
        %1662 = vmatpush1.bf16.msra.mxu0 %v1628
        %1663 = vmatprep.subr.bf16.mxu0 0
        %1664 = vmatpush1.bf16.msra.mxu0 %v1629
        %1665 = vmatprep.subr.bf16.mxu0 0
        %1666 = vmatpush1.bf16.msra.mxu0 %v1630
        %1667 = vmatprep.subr.bf16.mxu0 0
        %1668 = vmatpush1.bf16.msra.mxu0 %v1631
        %1669 = vmatprep.subr.bf16.mxu0 0
        %1670 = vmatpush1.bf16.msra.mxu0 %v1632
        %1671 = vmatprep.subr.bf16.mxu0 0
        %1672 = vmatpush1.bf16.msra.mxu0 %v1633
        %1673 = vmatprep.subr.bf16.mxu0 0
        %1674 = vmatpush1.bf16.msra.mxu0 %v1634
        %1675 = vmatprep.subr.bf16.mxu0 0
        %1676 = vmatpush1.bf16.msra.mxu0 %v1635
        %1677 = vmatprep.subr.bf16.mxu0 0
        %1678 = vmatpush1.bf16.msra.mxu0 %v1636
        %1679 = vmatprep.subr.bf16.mxu0 0
        %1680 = vmatpush1.bf16.msra.mxu0 %v1637
        %1681 = vmatprep.subr.bf16.mxu0 0
        %1682 = vmatpush1.bf16.msra.mxu0 %v1638
        %1683 = vmatprep.subr.bf16.mxu0 0
        %1684 = vmatpush1.bf16.msra.mxu0 %v1639
        %1685 = vmatprep.subr.bf16.mxu0 0
        %1686 = vmatpush1.bf16.msra.mxu0 %v1640
        %1687 = vmatprep.subr.bf16.mxu0 0
        %1688 = vmatpush1.bf16.msra.mxu0 %v1641
        %1689 = vmatprep.subr.bf16.mxu0 0
        %1690 = vmatpush1.bf16.msra.mxu0 %v1642
        %1691 = vmatprep.mubr.bf16.mxu0 %v1505
        %1692 = vmatmul.mubr.bf16.gmra.mrb[0].mxu0 %v1504
        %v1693 = vpop.f32.mrb[0].mxu0
        %v1694 = vadd.f32 %v1561, %v1693
        %v1695 = vpop.f32.mrb[0].mxu0
        %v1696 = vpop.f32.mrb[0].mxu0
        %v1697 = vadd.f32 %v1561, %v1696
        %v1698 = vpop.f32.mrb[0].mxu0
        %1699 = vmatprep.mubr.bf16.mxu0 %v1507
        %1700 = vmatmul.mubr.bf16.gmra.mrb[0].mxu0 %v1506
        %v1701 = vpop.f32.mrb[0].mxu0
        %v1702 = vadd.f32 %v1561, %v1701
        %v1703 = vpop.f32.mrb[0].mxu0
        %v1704 = vpop.f32.mrb[0].mxu0
        %v1705 = vadd.f32 %v1561, %v1704
        %v1706 = vpop.f32.mrb[0].mxu0
        %1707 = vmatprep.mubr.bf16.mxu0 %v1509
        %1708 = vmatmul.mubr.bf16.gmra.mrb[0].mxu0 %v1508
        %v1709 = vpop.f32.mrb[0].mxu0
        %v1710 = vadd.f32 %v1561, %v1709
        %v1711 = vpop.f32.mrb[0].mxu0
        %v1712 = vpop.f32.mrb[0].mxu0
        %v1713 = vadd.f32 %v1561, %v1712
        %v1714 = vpop.f32.mrb[0].mxu0
        %1715 = vmatprep.mubr.bf16.mxu0 %v1511
        %1716 = vmatmul.mubr.bf16.gmra.mrb[0].mxu0 %v1510
        %v1717 = vpop.f32.mrb[0].mxu0
        %v1718 = vadd.f32 %v1561, %v1717
        %v1719 = vpop.f32.mrb[0].mxu0
        %v1720 = vpop.f32.mrb[0].mxu0
        %v1721 = vadd.f32 %v1561, %v1720
        %v1722 = vpop.f32.mrb[0].mxu0
        %1723 = vmatprep.mubr.bf16.mxu0 %v1513
        %1724 = vmatmul.mubr.bf16.gmra.mrb[0].mxu0 %v1512
        %v1725 = vpop.f32.mrb[0].mxu0
        %v1726 = vadd.f32 %v1561, %v1725
        %v1727 = vpop.f32.mrb[0].mxu0
        %v1728 = vpop.f32.mrb[0].mxu0
        %v1729 = vadd.f32 %v1561, %v1728
        %v1730 = vpop.f32.mrb[0].mxu0
        %1731 = vmatprep.mubr.bf16.mxu0 %v1515
        %1732 = vmatmul.mubr.bf16.gmra.mrb[0].mxu0 %v1514
        %v1733 = vpop.f32.mrb[0].mxu0
        %v1734 = vadd.f32 %v1561, %v1733
        %v1735 = vpop.f32.mrb[0].mxu0
        %v1736 = vpop.f32.mrb[0].mxu0
        %v1737 = vadd.f32 %v1561, %v1736
        %v1738 = vpop.f32.mrb[0].mxu0
        %1739 = vmatprep.mubr.bf16.mxu0 %v1517
        %1740 = vmatmul.mubr.bf16.gmra.mrb[0].mxu0 %v1516
        %v1741 = vpop.f32.mrb[0].mxu0
        %v1742 = vadd.f32 %v1561, %v1741
        %v1743 = vpop.f32.mrb[0].mxu0
        %v1744 = vpop.f32.mrb[0].mxu0
        %v1745 = vadd.f32 %v1561, %v1744
        %v1746 = vpop.f32.mrb[0].mxu0
        %1747 = vmatprep.mubr.bf16.mxu0 %v1519
        %1748 = vmatmul.mubr.bf16.gmra.mrb[0].mxu0 %v1518
        %v1749 = vpop.f32.mrb[0].mxu0
        %v1750 = vadd.f32 %v1561, %v1749
        %v1751 = vpop.f32.mrb[0].mxu0
        %v1752 = vpop.f32.mrb[0].mxu0
        %v1753 = vadd.f32 %v1561, %v1752
        %v1754 = vpop.f32.mrb[0].mxu0
        %1755 = vmatprep.mubr.bf16.mxu0 %v1521
        %1756 = vmatmul.mubr.bf16.gmra.mrb[0].mxu0 %v1520
        %v1757 = vpop.f32.mrb[0].mxu0
        %v1758 = vadd.f32 %v1561, %v1757
        %v1759 = vpop.f32.mrb[0].mxu0
        %v1760 = vpop.f32.mrb[0].mxu0
        %v1761 = vadd.f32 %v1561, %v1760
        %v1762 = vpop.f32.mrb[0].mxu0
        %1763 = vmatprep.mubr.bf16.mxu0 %v1523
        %1764 = vmatmul.mubr.bf16.gmra.mrb[0].mxu0 %v1522
        %v1765 = vpop.f32.mrb[0].mxu0
        %v1766 = vadd.f32 %v1561, %v1765
        %v1767 = vpop.f32.mrb[0].mxu0
        %v1768 = vpop.f32.mrb[0].mxu0
        %v1769 = vpop.f32.mrb[0].mxu0
        %1770 = vdwg.mxu0
        %v1771 = vxor.u32 %v1694, 2147483648
        %v1772 = vxor.u32 %v1697, 2147483648
        %v1773 = vxor.u32 %v1702, 2147483648
        %v1774 = vxor.u32 %v1705, 2147483648
        %v1775 = vxor.u32 %v1710, 2147483648
        %v1776 = vxor.u32 %v1713, 2147483648
        %v1777 = vxor.u32 %v1718, 2147483648
        %v1778 = vxor.u32 %v1721, 2147483648
        %v1779 = vxor.u32 %v1726, 2147483648
        %v1780 = vxor.u32 %v1729, 2147483648
        %v1781 = vxor.u32 %v1734, 2147483648
        %v1782 = vxor.u32 %v1737, 2147483648
        %v1783 = vxor.u32 %v1742, 2147483648
        %v1784 = vxor.u32 %v1745, 2147483648
        %v1785 = vxor.u32 %v1750, 2147483648
        %v1786 = vxor.u32 %v1753, 2147483648
        %v1787 = vxor.u32 %v1758, 2147483648
        %v1788 = vxor.u32 %v1761, 2147483648
        %v1789 = vxor.u32 %v1766, 2147483648
        %v1790 = vmul.f32 %v1771, 1.442695
        %v1791 = vpow.pop %v1790
        %v1792 = vmul.f32 %v1772, 1.442695
        %v1793 = vpow.pop %v1792
        %v1794 = vmul.f32 %v1773, 1.442695
        %v1795 = vpow.pop %v1794
        %v1796 = vmul.f32 %v1774, 1.442695
        %v1797 = vpow.pop %v1796
        %v1798 = vmul.f32 %v1775, 1.442695
        %v1799 = vpow.pop %v1798
        %v1800 = vmul.f32 %v1776, 1.442695
        %v1801 = vpow.pop %v1800
        %v1802 = vmul.f32 %v1777, 1.442695
        %v1803 = vpow.pop %v1802
        %v1804 = vmul.f32 %v1778, 1.442695
        %v1805 = vpow.pop %v1804
        %v1806 = vmul.f32 %v1779, 1.442695
        %v1807 = vpow.pop %v1806
        %v1808 = vmul.f32 %v1780, 1.442695
        %v1809 = vpow.pop %v1808
        %v1810 = vmul.f32 %v1781, 1.442695
        %v1811 = vpow.pop %v1810
        %v1812 = vmul.f32 %v1782, 1.442695
        %v1813 = vpow.pop %v1812
        %v1814 = vmul.f32 %v1783, 1.442695
        %v1815 = vpow.pop %v1814
        %v1816 = vmul.f32 %v1784, 1.442695
        %v1817 = vpow.pop %v1816
        %v1818 = vmul.f32 %v1785, 1.442695
        %v1819 = vpow.pop %v1818
        %v1820 = vmul.f32 %v1786, 1.442695
        %v1821 = vpow.pop %v1820
        %v1822 = vmul.f32 %v1787, 1.442695
        %v1823 = vpow.pop %v1822
        %v1824 = vmul.f32 %v1788, 1.442695
        %v1825 = vpow.pop %v1824
        %v1826 = vmul.f32 %v1789, 1.442695
        %v1827 = vpow.pop %v1826
        %v1828 = vadd.f32 %v1791, 1.0
        %v1829 = vadd.f32 %v1793, 1.0
        %v1830 = vadd.f32 %v1795, 1.0
        %v1831 = vadd.f32 %v1797, 1.0
        %v1832 = vadd.f32 %v1799, 1.0
        %v1833 = vadd.f32 %v1801, 1.0
        %v1834 = vadd.f32 %v1803, 1.0
        %v1835 = vadd.f32 %v1805, 1.0
        %v1836 = vadd.f32 %v1807, 1.0
        %v1837 = vadd.f32 %v1809, 1.0
        %v1838 = vadd.f32 %v1811, 1.0
        %v1839 = vadd.f32 %v1813, 1.0
        %v1840 = vadd.f32 %v1815, 1.0
        %v1841 = vadd.f32 %v1817, 1.0
        %v1842 = vadd.f32 %v1819, 1.0
        %v1843 = vadd.f32 %v1821, 1.0
        %v1844 = vadd.f32 %v1823, 1.0
        %v1845 = vadd.f32 %v1825, 1.0
        %v1846 = vadd.f32 %v1827, 1.0
        %v1847 = vrcp.pop %v1828
        %v1848 = vmul.f32 1.0, %v1847
        %v1849 = vrcp.pop %v1829
        %v1850 = vmul.f32 1.0, %v1849
        %v1851 = vrcp.pop %v1830
        %v1852 = vmul.f32 1.0, %v1851
        %v1853 = vrcp.pop %v1831
        %v1854 = vmul.f32 1.0, %v1853
        %v1855 = vrcp.pop %v1832
        %v1856 = vmul.f32 1.0, %v1855
        %v1857 = vrcp.pop %v1833
        %v1858 = vmul.f32 1.0, %v1857
        %v1859 = vrcp.pop %v1834
        %v1860 = vmul.f32 1.0, %v1859
        %v1861 = vrcp.pop %v1835
        %v1862 = vmul.f32 1.0, %v1861
        %v1863 = vrcp.pop %v1836
        %v1864 = vmul.f32 1.0, %v1863
        %v1865 = vrcp.pop %v1837
        %v1866 = vmul.f32 1.0, %v1865
        %v1867 = vrcp.pop %v1838
        %v1868 = vmul.f32 1.0, %v1867
        %v1869 = vrcp.pop %v1839
        %v1870 = vmul.f32 1.0, %v1869
        %v1871 = vrcp.pop %v1840
        %v1872 = vmul.f32 1.0, %v1871
        %v1873 = vrcp.pop %v1841
        %v1874 = vmul.f32 1.0, %v1873
        %v1875 = vrcp.pop %v1842
        %v1876 = vmul.f32 1.0, %v1875
        %v1877 = vrcp.pop %v1843
        %v1878 = vmul.f32 1.0, %v1877
        %v1879 = vrcp.pop %v1844
        %v1880 = vmul.f32 1.0, %v1879
        %v1881 = vrcp.pop %v1845
        %v1882 = vmul.f32 1.0, %v1881
        %v1883 = vrcp.pop %v1846
        %v1884 = vmul.f32 1.0, %v1883
        %v1885 = vmul.f32 %v1694, %v1848
        %v1886 = vmul.f32 %v1697, %v1850
        %v1887 = vmul.f32 %v1702, %v1852
        %v1888 = vmul.f32 %v1705, %v1854
        %v1889 = vmul.f32 %v1710, %v1856
        %v1890 = vmul.f32 %v1713, %v1858
        %v1891 = vmul.f32 %v1718, %v1860
        %v1892 = vmul.f32 %v1721, %v1862
        %v1893 = vmul.f32 %v1726, %v1864
        %v1894 = vmul.f32 %v1729, %v1866
        %v1895 = vmul.f32 %v1734, %v1868
        %v1896 = vmul.f32 %v1737, %v1870
        %v1897 = vmul.f32 %v1742, %v1872
        %v1898 = vmul.f32 %v1745, %v1874
        %v1899 = vmul.f32 %v1750, %v1876
        %v1900 = vmul.f32 %v1753, %v1878
        %v1901 = vmul.f32 %v1758, %v1880
        %v1902 = vmul.f32 %v1761, %v1882
        %v1903 = vmul.f32 %v1766, %v1884
        %v1904 = vpack.c.bf16 %v1886, %v1885
        %v1905 = vpack.c.bf16 %v1888, %v1887
        %v1906 = vpack.c.bf16 %v1890, %v1889
        %v1907 = vpack.c.bf16 %v1892, %v1891
        %v1908 = vpack.c.bf16 %v1894, %v1893
        %v1909 = vpack.c.bf16 %v1896, %v1895
        %v1910 = vpack.c.bf16 %v1898, %v1897
        %v1911 = vpack.c.bf16 %v1900, %v1899
        %v1912 = vpack.c.bf16 %v1902, %v1901
        %v1913 = vpack.c.bf16 %v1903, %v1903
        %v1914 = vld [vmem:[#allocation10] sm:$0xff]
        %v1915 = vld [vmem:[#allocation10 + $0x8] sm:$0xf]
        %v1916 = vld [vmem:[#allocation10 + $0xc] sm:$0xff]
        %v1917 = vld [vmem:[#allocation10 + $0x14] sm:$0xf]
        %v1918 = vld [vmem:[#allocation10 + $0x18] sm:$0xff]
        %v1919 = vld [vmem:[#allocation10 + $0x20] sm:$0xf]
        %v1920 = vld [vmem:[#allocation10 + $0x24] sm:$0xff]
        %v1921 = vld [vmem:[#allocation10 + $0x2c] sm:$0xf]
        %v1922 = vld [vmem:[#allocation10 + $0x30] sm:$0xff]
        %v1923 = vld [vmem:[#allocation10 + $0x38] sm:$0xf]
        %v1924 = vld [vmem:[#allocation10 + $0x3c] sm:$0xff]
        %v1925 = vld [vmem:[#allocation10 + $0x44] sm:$0xf]
        %v1926 = vld [vmem:[#allocation10 + $0x48] sm:$0xff]
        %v1927 = vld [vmem:[#allocation10 + $0x50] sm:$0xf]
        %v1928 = vld [vmem:[#allocation10 + $0x54] sm:$0xff]
        %v1929 = vld [vmem:[#allocation10 + $0x5c] sm:$0xf]
        %v1930 = vld [vmem:[#allocation10 + $0x60] sm:$0xff]
        %v1931 = vld [vmem:[#allocation10 + $0x68] sm:$0xf]
        %v1932 = vld [vmem:[#allocation10 + $0x6c] sm:$0xff]
        %v1933 = vld [vmem:[#allocation10 + $0x74] sm:$0xf]
        %v1934 = vld [vmem:[#allocation10 + $0x78] sm:$0xff]
        %v1935 = vld [vmem:[#allocation10 + $0x80] sm:$0xf]
        %v1936 = vld [vmem:[#allocation10 + $0x84] sm:$0xff]
        %v1937 = vld [vmem:[#allocation10 + $0x8c] sm:$0xf]
        %v1938 = vld [vmem:[#allocation10 + $0x90] sm:$0xff]
        %v1939 = vld [vmem:[#allocation10 + $0x98] sm:$0xf]
        %v1940 = vld [vmem:[#allocation10 + $0x9c] sm:$0xff]
        %v1941 = vld [vmem:[#allocation10 + $0xa4] sm:$0xf]
        %v1942 = vld [vmem:[#allocation10 + $0xa8] sm:$0xff]
        %v1943 = vld [vmem:[#allocation10 + $0xb0] sm:$0xf]
        %v1944 = vld [vmem:[#allocation10 + $0xb4] sm:$0xff]
        %v1945 = vld [vmem:[#allocation10 + $0xbc] sm:$0xf]
        %v1946 = vld [vmem:[%s7] sm:$0x7]
        %v1948 = vlaneseq
        %v1949 = vshrl.u32 %v1948, 7
        %v1950 = vsub.s32 0, %v1949
        %v1951 = vrot.slane %v1946, %v1950
        %v1952 = vlaneseq
        %v1953 = vshrl.u32 %v1952, 7
        %v1954 = vsub.s32 1, %v1953
        %v1955 = vrot.slane %v1946, %v1954
        %v1956 = vlaneseq
        %v1957 = vshrl.u32 %v1956, 7
        %v1958 = vsub.s32 2, %v1957
        %v1959 = vrot.slane %v1946, %v1958
        %v1995 = vunpack.c.l.b16 %v1914
        %v1996 = vunpack.c.h.b16 %v1914
        %v1997 = vunpack.c.l.b16 %v1915
        %v1998 = vunpack.c.l.b16 %v1916
        %v1999 = vunpack.c.h.b16 %v1916
        %v2000 = vunpack.c.l.b16 %v1917
        %v2001 = vunpack.c.l.b16 %v1918
        %v2002 = vunpack.c.h.b16 %v1918
        %v2003 = vunpack.c.l.b16 %v1919
        %v2004 = vunpack.c.l.b16 %v1920
        %v2005 = vunpack.c.h.b16 %v1920
        %v2006 = vunpack.c.l.b16 %v1921
        %v2007 = vunpack.c.l.b16 %v1922
        %v2008 = vunpack.c.h.b16 %v1922
        %v2009 = vunpack.c.l.b16 %v1923
        %v2010 = vunpack.c.l.b16 %v1924
        %v2011 = vunpack.c.h.b16 %v1924
        %v2012 = vunpack.c.l.b16 %v1925
        %v2013 = vunpack.c.l.b16 %v1926
        %v2014 = vunpack.c.h.b16 %v1926
        %v2015 = vunpack.c.l.b16 %v1927
        %v2016 = vunpack.c.l.b16 %v1928
        %v2017 = vunpack.c.h.b16 %v1928
        %v2018 = vunpack.c.l.b16 %v1929
        %v2019 = vunpack.c.l.b16 %v1930
        %v2020 = vunpack.c.h.b16 %v1930
        %v2021 = vunpack.c.l.b16 %v1931
        %v2022 = vunpack.c.l.b16 %v1932
        %v2023 = vunpack.c.h.b16 %v1932
        %v2024 = vunpack.c.l.b16 %v1933
        %v2025 = vunpack.c.l.b16 %v1934
        %v2026 = vunpack.c.h.b16 %v1934
        %v2027 = vunpack.c.l.b16 %v1935
        %v2028 = vunpack.c.l.b16 %v1936
        %v2029 = vunpack.c.h.b16 %v1936
        %v2030 = vunpack.c.l.b16 %v1937
        %v2031 = vunpack.c.l.b16 %v1938
        %v2032 = vunpack.c.h.b16 %v1938
        %v2033 = vunpack.c.l.b16 %v1939
        %v2034 = vunpack.c.l.b16 %v1940
        %v2035 = vunpack.c.h.b16 %v1940
        %v2036 = vunpack.c.l.b16 %v1941
        %v2037 = vunpack.c.l.b16 %v1942
        %v2038 = vunpack.c.h.b16 %v1942
        %v2039 = vunpack.c.l.b16 %v1943
        %v2040 = vunpack.c.l.b16 %v1944
        %v2041 = vunpack.c.h.b16 %v1944
        %v2042 = vunpack.c.l.b16 %v1945
        %v2043 = vpack.c.b16 %v1998, %v1995
        %v2044 = vpack.c.b16 %v1999, %v1996
        %v2045 = vpack.c.b16 %v2000, %v1997
        %v2046 = vpack.c.b16 %v2004, %v2001
        %v2047 = vpack.c.b16 %v2005, %v2002
        %v2048 = vpack.c.b16 %v2006, %v2003
        %v2049 = vpack.c.b16 %v2010, %v2007
        %v2050 = vpack.c.b16 %v2011, %v2008
        %v2051 = vpack.c.b16 %v2012, %v2009
        %v2052 = vpack.c.b16 %v2016, %v2013
        %v2053 = vpack.c.b16 %v2017, %v2014
        %v2054 = vpack.c.b16 %v2018, %v2015
        %v2055 = vpack.c.b16 %v2022, %v2019
        %v2056 = vpack.c.b16 %v2023, %v2020
        %v2057 = vpack.c.b16 %v2024, %v2021
        %v2058 = vpack.c.b16 %v2028, %v2025
        %v2059 = vpack.c.b16 %v2029, %v2026
        %v2060 = vpack.c.b16 %v2030, %v2027
        %v2061 = vpack.c.b16 %v2034, %v2031
        %v2062 = vpack.c.b16 %v2035, %v2032
        %v2063 = vpack.c.b16 %v2036, %v2033
        %v2064 = vpack.c.b16 %v2040, %v2037
        %v2065 = vpack.c.b16 %v2041, %v2038
        %v2066 = vpack.c.b16 %v2042, %v2039
        %2091 = vmatprep.subr.bf16.mxu0 %v2044
        %2092 = vmatpush1.bf16.msra.mxu0 %v2043
        %2093 = vmatprep.subr.bf16.mxu0 %v2047
        %2094 = vmatpush1.bf16.msra.mxu0 %v2046
        %2095 = vmatprep.subr.bf16.mxu0 %v2050
        %2096 = vmatpush1.bf16.msra.mxu0 %v2049
        %2097 = vmatprep.subr.bf16.mxu0 %v2053
        %2098 = vmatpush1.bf16.msra.mxu0 %v2052
        %2099 = vmatprep.subr.bf16.mxu0 %v2056
        %2100 = vmatpush1.bf16.msra.mxu0 %v2055
        %2101 = vmatprep.subr.bf16.mxu0 %v2059
        %2102 = vmatpush1.bf16.msra.mxu0 %v2058
        %2103 = vmatprep.subr.bf16.mxu0 %v2062
        %2104 = vmatpush1.bf16.msra.mxu0 %v2061
        %2105 = vmatprep.subr.bf16.mxu0 %v2065
        %2106 = vmatpush1.bf16.msra.mxu0 %v2064
        %2107 = vmatprep.subr.bf16.mxu0 0
        %2108 = vmatpush1.bf16.msra.mxu0 0
        %2109 = vmatprep.subr.bf16.mxu0 0
        %2110 = vmatpush1.bf16.msra.mxu0 0
        %2111 = vmatprep.subr.bf16.mxu0 0
        %2112 = vmatpush1.bf16.msra.mxu0 0
        %2113 = vmatprep.subr.bf16.mxu0 0
        %2114 = vmatpush1.bf16.msra.mxu0 0
        %2115 = vmatprep.subr.bf16.mxu0 0
        %2116 = vmatpush1.bf16.msra.mxu0 0
        %2117 = vmatprep.subr.bf16.mxu0 0
        %2118 = vmatpush1.bf16.msra.mxu0 0
        %2119 = vmatprep.subr.bf16.mxu0 0
        %2120 = vmatpush1.bf16.msra.mxu0 0
        %2121 = vmatprep.subr.bf16.mxu0 0
        %2122 = vmatpush1.bf16.msra.mxu0 0
        %2123 = vmatprep.mubr.bf16.mxu0 0
        %2124 = vmatmul.mubr.bf16.gmra.mrb[0].mxu0 %v1904
        %v2125 = vpop.f32.mrb[0].mxu0
        %v2126 = vadd.f32 %v1951, %v2125
        %v2127 = vpop.f32.mrb[0].mxu0
        %v2128 = vadd.f32 %v1955, %v2127
        %v2129 = vpop.f32.mrb[0].mxu0
        %v2130 = vadd.f32 %v1951, %v2129
        %v2131 = vpop.f32.mrb[0].mxu0
        %v2132 = vadd.f32 %v1955, %v2131
        %2133 = vmatprep.mubr.bf16.mxu0 0
        %2134 = vmatmul.mubr.bf16.gmra.mrb[0].mxu0 %v1905
        %v2135 = vpop.f32.mrb[0].mxu0
        %v2136 = vadd.f32 %v1951, %v2135
        %v2137 = vpop.f32.mrb[0].mxu0
        %v2138 = vadd.f32 %v1955, %v2137
        %v2139 = vpop.f32.mrb[0].mxu0
        %v2140 = vadd.f32 %v1951, %v2139
        %v2141 = vpop.f32.mrb[0].mxu0
        %v2142 = vadd.f32 %v1955, %v2141
        %2143 = vmatprep.mubr.bf16.mxu0 0
        %2144 = vmatmul.mubr.bf16.gmra.mrb[0].mxu0 %v1906
        %v2145 = vpop.f32.mrb[0].mxu0
        %v2146 = vadd.f32 %v1951, %v2145
        %v2147 = vpop.f32.mrb[0].mxu0
        %v2148 = vadd.f32 %v1955, %v2147
        %v2149 = vpop.f32.mrb[0].mxu0
        %v2150 = vadd.f32 %v1951, %v2149
        %v2151 = vpop.f32.mrb[0].mxu0
        %v2152 = vadd.f32 %v1955, %v2151
        %2153 = vmatprep.mubr.bf16.mxu0 0
        %2154 = vmatmul.mubr.bf16.gmra.mrb[0].mxu0 %v1907
        %v2155 = vpop.f32.mrb[0].mxu0
        %v2156 = vadd.f32 %v1951, %v2155
        %v2157 = vpop.f32.mrb[0].mxu0
        %v2158 = vadd.f32 %v1955, %v2157
        %v2159 = vpop.f32.mrb[0].mxu0
        %v2160 = vadd.f32 %v1951, %v2159
        %v2161 = vpop.f32.mrb[0].mxu0
        %v2162 = vadd.f32 %v1955, %v2161
        %2163 = vmatprep.mubr.bf16.mxu0 0
        %2164 = vmatmul.mubr.bf16.gmra.mrb[0].mxu0 %v1908
        %v2165 = vpop.f32.mrb[0].mxu0
        %v2166 = vadd.f32 %v1951, %v2165
        %v2167 = vpop.f32.mrb[0].mxu0
        %v2168 = vadd.f32 %v1955, %v2167
        %v2169 = vpop.f32.mrb[0].mxu0
        %v2170 = vadd.f32 %v1951, %v2169
        %v2171 = vpop.f32.mrb[0].mxu0
        %v2172 = vadd.f32 %v1955, %v2171
        %2173 = vmatprep.mubr.bf16.mxu0 0
        %2174 = vmatmul.mubr.bf16.gmra.mrb[0].mxu0 %v1909
        %v2175 = vpop.f32.mrb[0].mxu0
        %v2176 = vadd.f32 %v1951, %v2175
        %v2177 = vpop.f32.mrb[0].mxu0
        %v2178 = vadd.f32 %v1955, %v2177
        %v2179 = vpop.f32.mrb[0].mxu0
        %v2180 = vadd.f32 %v1951, %v2179
        %v2181 = vpop.f32.mrb[0].mxu0
        %v2182 = vadd.f32 %v1955, %v2181
        %2183 = vmatprep.mubr.bf16.mxu0 0
        %2184 = vmatmul.mubr.bf16.gmra.mrb[0].mxu0 %v1910
        %v2185 = vpop.f32.mrb[0].mxu0
        %v2186 = vadd.f32 %v1951, %v2185
        %v2187 = vpop.f32.mrb[0].mxu0
        %v2188 = vadd.f32 %v1955, %v2187
        %v2189 = vpop.f32.mrb[0].mxu0
        %v2190 = vadd.f32 %v1951, %v2189
        %v2191 = vpop.f32.mrb[0].mxu0
        %v2192 = vadd.f32 %v1955, %v2191
        %2193 = vmatprep.mubr.bf16.mxu0 0
        %2194 = vmatmul.mubr.bf16.gmra.mrb[0].mxu0 %v1911
        %v2195 = vpop.f32.mrb[0].mxu0
        %v2196 = vadd.f32 %v1951, %v2195
        %v2197 = vpop.f32.mrb[0].mxu0
        %v2198 = vadd.f32 %v1955, %v2197
        %v2199 = vpop.f32.mrb[0].mxu0
        %v2200 = vadd.f32 %v1951, %v2199
        %v2201 = vpop.f32.mrb[0].mxu0
        %v2202 = vadd.f32 %v1955, %v2201
        %2203 = vmatprep.mubr.bf16.mxu0 0
        %2204 = vmatmul.mubr.bf16.gmra.mrb[0].mxu0 %v1912
        %v2205 = vpop.f32.mrb[0].mxu0
        %v2206 = vadd.f32 %v1951, %v2205
        %v2207 = vpop.f32.mrb[0].mxu0
        %v2208 = vadd.f32 %v1955, %v2207
        %v2209 = vpop.f32.mrb[0].mxu0
        %v2210 = vadd.f32 %v1951, %v2209
        %v2211 = vpop.f32.mrb[0].mxu0
        %v2212 = vadd.f32 %v1955, %v2211
        %2213 = vmatprep.mubr.bf16.mxu0 0
        %2214 = vmatmul.mubr.bf16.gmra.mrb[0].mxu0 %v1913
        %v2215 = vpop.f32.mrb[0].mxu0
        %v2216 = vadd.f32 %v1951, %v2215
        %v2217 = vpop.f32.mrb[0].mxu0
        %v2218 = vadd.f32 %v1955, %v2217
        %v2219 = vpop.f32.mrb[0].mxu0
        %v2220 = vpop.f32.mrb[0].mxu0
        %2221 = vdwg.mxu0
        %2222 = vmatprep.subr.bf16.mxu0 0
        %2223 = vmatpush1.bf16.msra.mxu0 %v2045
        %2224 = vmatprep.subr.bf16.mxu0 0
        %2225 = vmatpush1.bf16.msra.mxu0 %v2048
        %2226 = vmatprep.subr.bf16.mxu0 0
        %2227 = vmatpush1.bf16.msra.mxu0 %v2051
        %2228 = vmatprep.subr.bf16.mxu0 0
        %2229 = vmatpush1.bf16.msra.mxu0 %v2054
        %2230 = vmatprep.subr.bf16.mxu0 0
        %2231 = vmatpush1.bf16.msra.mxu0 %v2057
        %2232 = vmatprep.subr.bf16.mxu0 0
        %2233 = vmatpush1.bf16.msra.mxu0 %v2060
        %2234 = vmatprep.subr.bf16.mxu0 0
        %2235 = vmatpush1.bf16.msra.mxu0 %v2063
        %2236 = vmatprep.subr.bf16.mxu0 0
        %2237 = vmatpush1.bf16.msra.mxu0 %v2066
        %2238 = vmatprep.subr.bf16.mxu0 0
        %2239 = vmatpush1.bf16.msra.mxu0 0
        %2240 = vmatprep.subr.bf16.mxu0 0
        %2241 = vmatpush1.bf16.msra.mxu0 0
        %2242 = vmatprep.subr.bf16.mxu0 0
        %2243 = vmatpush1.bf16.msra.mxu0 0
        %2244 = vmatprep.subr.bf16.mxu0 0
        %2245 = vmatpush1.bf16.msra.mxu0 0
        %2246 = vmatprep.subr.bf16.mxu0 0
        %2247 = vmatpush1.bf16.msra.mxu0 0
        %2248 = vmatprep.subr.bf16.mxu0 0
        %2249 = vmatpush1.bf16.msra.mxu0 0
        %2250 = vmatprep.subr.bf16.mxu0 0
        %2251 = vmatpush1.bf16.msra.mxu0 0
        %2252 = vmatprep.subr.bf16.mxu0 0
        %2253 = vmatpush1.bf16.msra.mxu0 0
        %2254 = vmatprep.mubr.bf16.mxu0 0
        %2255 = vmatmul.mubr.bf16.gmra.mrb[0].mxu0 %v1904
        %v2256 = vpop.f32.mrb[0].mxu0
        %v2257 = vadd.f32 %v1959, %v2256
        %v2258 = vpop.f32.mrb[0].mxu0
        %v2259 = vpop.f32.mrb[0].mxu0
        %v2260 = vadd.f32 %v1959, %v2259
        %v2261 = vpop.f32.mrb[0].mxu0
        %2262 = vmatprep.mubr.bf16.mxu0 0
        %2263 = vmatmul.mubr.bf16.gmra.mrb[0].mxu0 %v1905
        %v2264 = vpop.f32.mrb[0].mxu0
        %v2265 = vadd.f32 %v1959, %v2264
        %v2266 = vpop.f32.mrb[0].mxu0
        %v2267 = vpop.f32.mrb[0].mxu0
        %v2268 = vadd.f32 %v1959, %v2267
        %v2269 = vpop.f32.mrb[0].mxu0
        %2270 = vmatprep.mubr.bf16.mxu0 0
        %2271 = vmatmul.mubr.bf16.gmra.mrb[0].mxu0 %v1906
        %v2272 = vpop.f32.mrb[0].mxu0
        %v2273 = vadd.f32 %v1959, %v2272
        %v2274 = vpop.f32.mrb[0].mxu0
        %v2275 = vpop.f32.mrb[0].mxu0
        %v2276 = vadd.f32 %v1959, %v2275
        %v2277 = vpop.f32.mrb[0].mxu0
        %2278 = vmatprep.mubr.bf16.mxu0 0
        %2279 = vmatmul.mubr.bf16.gmra.mrb[0].mxu0 %v1907
        %v2280 = vpop.f32.mrb[0].mxu0
        %v2281 = vadd.f32 %v1959, %v2280
        %v2282 = vpop.f32.mrb[0].mxu0
        %v2283 = vpop.f32.mrb[0].mxu0
        %v2284 = vadd.f32 %v1959, %v2283
        %v2285 = vpop.f32.mrb[0].mxu0
        %2286 = vmatprep.mubr.bf16.mxu0 0
        %2287 = vmatmul.mubr.bf16.gmra.mrb[0].mxu0 %v1908
        %v2288 = vpop.f32.mrb[0].mxu0
        %v2289 = vadd.f32 %v1959, %v2288
        %v2290 = vpop.f32.mrb[0].mxu0
        %v2291 = vpop.f32.mrb[0].mxu0
        %v2292 = vadd.f32 %v1959, %v2291
        %v2293 = vpop.f32.mrb[0].mxu0
        %2294 = vmatprep.mubr.bf16.mxu0 0
        %2295 = vmatmul.mubr.bf16.gmra.mrb[0].mxu0 %v1909
        %v2296 = vpop.f32.mrb[0].mxu0
        %v2297 = vadd.f32 %v1959, %v2296
        %v2298 = vpop.f32.mrb[0].mxu0
        %v2299 = vpop.f32.mrb[0].mxu0
        %v2300 = vadd.f32 %v1959, %v2299
        %v2301 = vpop.f32.mrb[0].mxu0
        %2302 = vmatprep.mubr.bf16.mxu0 0
        %2303 = vmatmul.mubr.bf16.gmra.mrb[0].mxu0 %v1910
        %v2304 = vpop.f32.mrb[0].mxu0
        %v2305 = vadd.f32 %v1959, %v2304
        %v2306 = vpop.f32.mrb[0].mxu0
        %v2307 = vpop.f32.mrb[0].mxu0
        %v2308 = vadd.f32 %v1959, %v2307
        %v2309 = vpop.f32.mrb[0].mxu0
        %2310 = vmatprep.mubr.bf16.mxu0 0
        %2311 = vmatmul.mubr.bf16.gmra.mrb[0].mxu0 %v1911
        %v2312 = vpop.f32.mrb[0].mxu0
        %v2313 = vadd.f32 %v1959, %v2312
        %v2314 = vpop.f32.mrb[0].mxu0
        %v2315 = vpop.f32.mrb[0].mxu0
        %v2316 = vadd.f32 %v1959, %v2315
        %v2317 = vpop.f32.mrb[0].mxu0
        %2318 = vmatprep.mubr.bf16.mxu0 0
        %2319 = vmatmul.mubr.bf16.gmra.mrb[0].mxu0 %v1912
        %v2320 = vpop.f32.mrb[0].mxu0
        %v2321 = vadd.f32 %v1959, %v2320
        %v2322 = vpop.f32.mrb[0].mxu0
        %v2323 = vpop.f32.mrb[0].mxu0
        %v2324 = vadd.f32 %v1959, %v2323
        %v2325 = vpop.f32.mrb[0].mxu0
        %2326 = vmatprep.mubr.bf16.mxu0 0
        %2327 = vmatmul.mubr.bf16.gmra.mrb[0].mxu0 %v1913
        %v2328 = vpop.f32.mrb[0].mxu0
        %v2329 = vadd.f32 %v1959, %v2328
        %v2330 = vpop.f32.mrb[0].mxu0
        %v2331 = vpop.f32.mrb[0].mxu0
        %v2332 = vpop.f32.mrb[0].mxu0
        %2333 = vdwg.mxu0
        %v2334 = vmul.f32 %v2128, %v1294
        %v2335 = vmul.f32 %v2132, %v1295
        %v2336 = vmul.f32 %v2138, %v1296
        %v2337 = vmul.f32 %v2142, %v1297
        %v2338 = vmul.f32 %v2148, %v1298
        %v2339 = vmul.f32 %v2152, %v1299
        %v2340 = vmul.f32 %v2158, %v1300
        %v2341 = vmul.f32 %v2162, %v1301
        %v2342 = vmul.f32 %v2168, %v1302
        %v2343 = vmul.f32 %v2172, %v1303
        %v2344 = vmul.f32 %v2178, %v1304
        %v2345 = vmul.f32 %v2182, %v1305
        %v2346 = vmul.f32 %v2188, %v1306
        %v2347 = vmul.f32 %v2192, %v1307
        %v2348 = vmul.f32 %v2198, %v1308
        %v2349 = vmul.f32 %v2202, %v1309
        %v2350 = vmul.f32 %v2208, %v1310
        %v2351 = vmul.f32 %v2212, %v1311
        %v2352 = vmul.f32 %v2218, %v1312
        %v2353 = vadd.f32 %v475, %v2334
        %v2354 = vadd.f32 %v476, %v2335
        %v2355 = vadd.f32 %v477, %v2336
        %v2356 = vadd.f32 %v478, %v2337
        %v2357 = vadd.f32 %v479, %v2338
        %v2358 = vadd.f32 %v480, %v2339
        %v2359 = vadd.f32 %v481, %v2340
        %v2360 = vadd.f32 %v482, %v2341
        %v2361 = vadd.f32 %v483, %v2342
        %v2362 = vadd.f32 %v484, %v2343
        %v2363 = vadd.f32 %v485, %v2344
        %v2364 = vadd.f32 %v486, %v2345
        %v2365 = vadd.f32 %v487, %v2346
        %v2366 = vadd.f32 %v488, %v2347
        %v2367 = vadd.f32 %v489, %v2348
        %v2368 = vadd.f32 %v490, %v2349
        %v2369 = vadd.f32 %v491, %v2350
        %v2370 = vadd.f32 %v492, %v2351
        %v2371 = vadd.f32 %v493, %v2352
        %v2372 = vadd.f32 %v2353, %v2257
        %v2373 = vadd.f32 %v2354, %v2260
        %v2374 = vadd.f32 %v2355, %v2265
        %v2375 = vadd.f32 %v2356, %v2268
        %v2376 = vadd.f32 %v2357, %v2273
        %v2377 = vadd.f32 %v2358, %v2276
        %v2378 = vadd.f32 %v2359, %v2281
        %v2379 = vadd.f32 %v2360, %v2284
        %v2380 = vadd.f32 %v2361, %v2289
        %v2381 = vadd.f32 %v2362, %v2292
        %v2382 = vadd.f32 %v2363, %v2297
        %v2383 = vadd.f32 %v2364, %v2300
        %v2384 = vadd.f32 %v2365, %v2305
        %v2385 = vadd.f32 %v2366, %v2308
        %v2386 = vadd.f32 %v2367, %v2313
        %v2387 = vadd.f32 %v2368, %v2316
        %v2388 = vadd.f32 %v2369, %v2321
        %v2389 = vadd.f32 %v2370, %v2324
        %v2390 = vadd.f32 %v2371, %v2329
        %2391 = vst [vmem:[%s462] sm:$0xff] %v2372
        %2392 = vst [vmem:[%s462 + $0x8] sm:$0xff] %v2373
        %2393 = vst [vmem:[%s462 + $0x10] sm:$0xff] %v2374
        %2394 = vst [vmem:[%s462 + $0x18] sm:$0xff] %v2375
        %2395 = vst [vmem:[%s462 + $0x20] sm:$0xff] %v2376
        %2396 = vst [vmem:[%s462 + $0x28] sm:$0xff] %v2377
        %2397 = vst [vmem:[%s462 + $0x30] sm:$0xff] %v2378
        %2398 = vst [vmem:[%s462 + $0x38] sm:$0xff] %v2379
        %2399 = vst [vmem:[%s462 + $0x40] sm:$0xff] %v2380
        %2400 = vst [vmem:[%s462 + $0x48] sm:$0xff] %v2381
        %2401 = vst [vmem:[%s462 + $0x50] sm:$0xff] %v2382
        %2402 = vst [vmem:[%s462 + $0x58] sm:$0xff] %v2383
        %2403 = vst [vmem:[%s462 + $0x60] sm:$0xff] %v2384
        %2404 = vst [vmem:[%s462 + $0x68] sm:$0xff] %v2385
        %2405 = vst [vmem:[%s462 + $0x70] sm:$0xff] %v2386
        %2406 = vst [vmem:[%s462 + $0x78] sm:$0xff] %v2387
        %2407 = vst [vmem:[%s462 + $0x80] sm:$0xff] %v2388
        %2408 = vst [vmem:[%s462 + $0x88] sm:$0xff] %v2389
        %2409 = vst [vmem:[%s462 + $0x90] sm:$0xff] %v2390
        %v2410 = vld [vmem:[%s413] sm:$0xff]
        %v2411 = vld [vmem:[%s413 + $0x8] sm:$0xff]
        %v2412 = vld [vmem:[%s413 + $0x10] sm:$0xff]
        %v2413 = vld [vmem:[%s413 + $0x18] sm:$0xff]
        %v2414 = vld [vmem:[%s413 + $0x20] sm:$0xff]
        %v2415 = vld [vmem:[%s413 + $0x28] sm:$0xff]
        %v2416 = vld [vmem:[%s413 + $0x30] sm:$0xff]
        %v2417 = vld [vmem:[%s413 + $0x38] sm:$0xff]
        %v2418 = vld [vmem:[%s413 + $0x40] sm:$0xff]
        %v2419 = vld [vmem:[%s413 + $0x48] sm:$0xff]
        %v2420 = vld [vmem:[%s413 + $0x50] sm:$0xff]
        %v2421 = vld [vmem:[%s413 + $0x58] sm:$0xff]
        %v2422 = vld [vmem:[%s413 + $0x60] sm:$0xff]
        %v2423 = vld [vmem:[%s413 + $0x68] sm:$0xff]
        %v2424 = vld [vmem:[%s413 + $0x70] sm:$0xff]
        %v2425 = vld [vmem:[%s413 + $0x78] sm:$0xff]
        %v2426 = vld [vmem:[%s413 + $0x80] sm:$0xff]
        %v2427 = vld [vmem:[%s413 + $0x88] sm:$0xff]
        %v2428 = vld [vmem:[%s413 + $0x90] sm:$0xff]
        %v2429 = vld [vmem:[%s469] sm:$0xff]
        %v2430 = vld [vmem:[%s469 + $0x8] sm:$0xff]
        %v2431 = vld [vmem:[%s469 + $0x10] sm:$0xff]
        %v2432 = vld [vmem:[%s469 + $0x18] sm:$0xff]
        %v2433 = vld [vmem:[%s469 + $0x20] sm:$0xff]
        %v2434 = vld [vmem:[%s469 + $0x28] sm:$0xff]
        %v2435 = vld [vmem:[%s469 + $0x30] sm:$0xff]
        %v2436 = vld [vmem:[%s469 + $0x38] sm:$0xff]
        %v2437 = vld [vmem:[%s469 + $0x40] sm:$0xff]
        %v2438 = vld [vmem:[%s469 + $0x48] sm:$0xff]
        %v2439 = vld [vmem:[%s469 + $0x50] sm:$0xff]
        %v2440 = vld [vmem:[%s469 + $0x58] sm:$0xff]
        %v2441 = vld [vmem:[%s469 + $0x60] sm:$0xff]
        %v2442 = vld [vmem:[%s469 + $0x68] sm:$0xff]
        %v2443 = vld [vmem:[%s469 + $0x70] sm:$0xff]
        %v2444 = vld [vmem:[%s469 + $0x78] sm:$0xff]
        %v2445 = vld [vmem:[%s469 + $0x80] sm:$0xff]
        %v2446 = vld [vmem:[%s469 + $0x88] sm:$0xff]
        %v2447 = vld [vmem:[%s469 + $0x90] sm:$0xff]
        %v2448 = vmul.f32 %v2126, %v2429
        %v2449 = vmul.f32 %v2130, %v2430
        %v2450 = vmul.f32 %v2136, %v2431
        %v2451 = vmul.f32 %v2140, %v2432
        %v2452 = vmul.f32 %v2146, %v2433
        %v2453 = vmul.f32 %v2150, %v2434
        %v2454 = vmul.f32 %v2156, %v2435
        %v2455 = vmul.f32 %v2160, %v2436
        %v2456 = vmul.f32 %v2166, %v2437
        %v2457 = vmul.f32 %v2170, %v2438
        %v2458 = vmul.f32 %v2176, %v2439
        %v2459 = vmul.f32 %v2180, %v2440
        %v2460 = vmul.f32 %v2186, %v2441
        %v2461 = vmul.f32 %v2190, %v2442
        %v2462 = vmul.f32 %v2196, %v2443
        %v2463 = vmul.f32 %v2200, %v2444
        %v2464 = vmul.f32 %v2206, %v2445
        %v2465 = vmul.f32 %v2210, %v2446
        %v2466 = vmul.f32 %v2216, %v2447
        %v2467 = vadd.f32 %v2410, %v2448
        %v2468 = vadd.f32 %v2411, %v2449
        %v2469 = vadd.f32 %v2412, %v2450
        %v2470 = vadd.f32 %v2413, %v2451
        %v2471 = vadd.f32 %v2414, %v2452
        %v2472 = vadd.f32 %v2415, %v2453
        %v2473 = vadd.f32 %v2416, %v2454
        %v2474 = vadd.f32 %v2417, %v2455
        %v2475 = vadd.f32 %v2418, %v2456
        %v2476 = vadd.f32 %v2419, %v2457
        %v2477 = vadd.f32 %v2420, %v2458
        %v2478 = vadd.f32 %v2421, %v2459
        %v2479 = vadd.f32 %v2422, %v2460
        %v2480 = vadd.f32 %v2423, %v2461
        %v2481 = vadd.f32 %v2424, %v2462
        %v2482 = vadd.f32 %v2425, %v2463
        %v2483 = vadd.f32 %v2426, %v2464
        %v2484 = vadd.f32 %v2427, %v2465
        %v2485 = vadd.f32 %v2428, %v2466
        %2486 = vst [vmem:[%s469] sm:$0xff] %v2467
        %2487 = vst [vmem:[%s469 + $0x8] sm:$0xff] %v2468
        %2488 = vst [vmem:[%s469 + $0x10] sm:$0xff] %v2469
        %2489 = vst [vmem:[%s469 + $0x18] sm:$0xff] %v2470
        %2490 = vst [vmem:[%s469 + $0x20] sm:$0xff] %v2471
        %2491 = vst [vmem:[%s469 + $0x28] sm:$0xff] %v2472
        %2492 = vst [vmem:[%s469 + $0x30] sm:$0xff] %v2473
        %2493 = vst [vmem:[%s469 + $0x38] sm:$0xff] %v2474
        %2494 = vst [vmem:[%s469 + $0x40] sm:$0xff] %v2475
        %2495 = vst [vmem:[%s469 + $0x48] sm:$0xff] %v2476
        %2496 = vst [vmem:[%s469 + $0x50] sm:$0xff] %v2477
        %2497 = vst [vmem:[%s469 + $0x58] sm:$0xff] %v2478
        %2498 = vst [vmem:[%s469 + $0x60] sm:$0xff] %v2479
        %2499 = vst [vmem:[%s469 + $0x68] sm:$0xff] %v2480
        %2500 = vst [vmem:[%s469 + $0x70] sm:$0xff] %v2481
        %2501 = vst [vmem:[%s469 + $0x78] sm:$0xff] %v2482
        %2502 = vst [vmem:[%s469 + $0x80] sm:$0xff] %v2483
        %2503 = vst [vmem:[%s469 + $0x88] sm:$0xff] %v2484
        %2504 = vst [vmem:[%s469 + $0x90] sm:$0xff] %v2485
        %v2505 = vld [vmem:[%s857] sm:$0xff]
        %v2506 = vld [vmem:[%s857 + $0x8] sm:$0xff]
        %v2507 = vld [vmem:[%s857 + $0x10] sm:$0xff]
        %v2508 = vld [vmem:[%s857 + $0x18] sm:$0xff]
        %v2509 = vld [vmem:[%s857 + $0x20] sm:$0xff]
        %v2510 = vld [vmem:[%s857 + $0x28] sm:$0xff]
        %v2511 = vld [vmem:[%s857 + $0x30] sm:$0xff]
        %v2512 = vld [vmem:[%s857 + $0x38] sm:$0xff]
        %v2513 = vld [vmem:[%s857 + $0x40] sm:$0xff]
        %v2514 = vld [vmem:[%s857 + $0x48] sm:$0xff]
        %v2515 = vld [vmem:[%s857 + $0x50] sm:$0xff]
        %v2516 = vld [vmem:[%s857 + $0x58] sm:$0xff]
        %v2517 = vld [vmem:[%s857 + $0x60] sm:$0xff]
        %v2518 = vld [vmem:[%s857 + $0x68] sm:$0xff]
        %v2519 = vld [vmem:[%s857 + $0x70] sm:$0xff]
        %v2520 = vld [vmem:[%s857 + $0x78] sm:$0xff]
        %v2521 = vld [vmem:[%s857 + $0x80] sm:$0xff]
        %v2522 = vld [vmem:[%s857 + $0x88] sm:$0xff]
        %v2523 = vld [vmem:[%s857 + $0x90] sm:$0xff]
        %v2524 = vld [vmem:[%s1094] sm:$0xff]
        %v2525 = vld [vmem:[%s1094 + $0x8] sm:$0xff]
        %v2526 = vld [vmem:[%s1094 + $0x10] sm:$0xff]
        %v2527 = vld [vmem:[%s1094 + $0x18] sm:$0xff]
        %v2528 = vld [vmem:[%s1094 + $0x20] sm:$0xff]
        %v2529 = vld [vmem:[%s1094 + $0x28] sm:$0xff]
        %v2530 = vld [vmem:[%s1094 + $0x30] sm:$0xff]
        %v2531 = vld [vmem:[%s1094 + $0x38] sm:$0xff]
        %v2532 = vld [vmem:[%s1094 + $0x40] sm:$0xff]
        %v2533 = vld [vmem:[%s1094 + $0x48] sm:$0xff]
        %v2534 = vld [vmem:[%s1094 + $0x50] sm:$0xff]
        %v2535 = vld [vmem:[%s1094 + $0x58] sm:$0xff]
        %v2536 = vld [vmem:[%s1094 + $0x60] sm:$0xff]
        %v2537 = vld [vmem:[%s1094 + $0x68] sm:$0xff]
        %v2538 = vld [vmem:[%s1094 + $0x70] sm:$0xff]
        %v2539 = vld [vmem:[%s1094 + $0x78] sm:$0xff]
        %v2540 = vld [vmem:[%s1094 + $0x80] sm:$0xff]
        %v2541 = vld [vmem:[%s1094 + $0x88] sm:$0xff]
        %v2542 = vld [vmem:[%s1094 + $0x90] sm:$0xff]
        %v2543 = vmul.f32 %v2126, %v2524
        %v2544 = vmul.f32 %v2130, %v2525
        %v2545 = vmul.f32 %v2136, %v2526
        %v2546 = vmul.f32 %v2140, %v2527
        %v2547 = vmul.f32 %v2146, %v2528
        %v2548 = vmul.f32 %v2150, %v2529
        %v2549 = vmul.f32 %v2156, %v2530
        %v2550 = vmul.f32 %v2160, %v2531
        %v2551 = vmul.f32 %v2166, %v2532
        %v2552 = vmul.f32 %v2170, %v2533
        %v2553 = vmul.f32 %v2176, %v2534
        %v2554 = vmul.f32 %v2180, %v2535
        %v2555 = vmul.f32 %v2186, %v2536
        %v2556 = vmul.f32 %v2190, %v2537
        %v2557 = vmul.f32 %v2196, %v2538
        %v2558 = vmul.f32 %v2200, %v2539
        %v2559 = vmul.f32 %v2206, %v2540
        %v2560 = vmul.f32 %v2210, %v2541
        %v2561 = vmul.f32 %v2216, %v2542
        %v2562 = vadd.f32 %v2505, %v2543
        %v2563 = vadd.f32 %v2506, %v2544
        %v2564 = vadd.f32 %v2507, %v2545
        %v2565 = vadd.f32 %v2508, %v2546
        %v2566 = vadd.f32 %v2509, %v2547
        %v2567 = vadd.f32 %v2510, %v2548
        %v2568 = vadd.f32 %v2511, %v2549
        %v2569 = vadd.f32 %v2512, %v2550
        %v2570 = vadd.f32 %v2513, %v2551
        %v2571 = vadd.f32 %v2514, %v2552
        %v2572 = vadd.f32 %v2515, %v2553
        %v2573 = vadd.f32 %v2516, %v2554
        %v2574 = vadd.f32 %v2517, %v2555
        %v2575 = vadd.f32 %v2518, %v2556
        %v2576 = vadd.f32 %v2519, %v2557
        %v2577 = vadd.f32 %v2520, %v2558
        %v2578 = vadd.f32 %v2521, %v2559
        %v2579 = vadd.f32 %v2522, %v2560
        %v2580 = vadd.f32 %v2523, %v2561
        %2581 = vst [vmem:[%s1094] sm:$0xff] %v2562
        %2582 = vst [vmem:[%s1094 + $0x8] sm:$0xff] %v2563
        %2583 = vst [vmem:[%s1094 + $0x10] sm:$0xff] %v2564
        %2584 = vst [vmem:[%s1094 + $0x18] sm:$0xff] %v2565
        %2585 = vst [vmem:[%s1094 + $0x20] sm:$0xff] %v2566
        %2586 = vst [vmem:[%s1094 + $0x28] sm:$0xff] %v2567
        %2587 = vst [vmem:[%s1094 + $0x30] sm:$0xff] %v2568
        %2588 = vst [vmem:[%s1094 + $0x38] sm:$0xff] %v2569
        %2589 = vst [vmem:[%s1094 + $0x40] sm:$0xff] %v2570
        %2590 = vst [vmem:[%s1094 + $0x48] sm:$0xff] %v2571
        %2591 = vst [vmem:[%s1094 + $0x50] sm:$0xff] %v2572
        %2592 = vst [vmem:[%s1094 + $0x58] sm:$0xff] %v2573
        %2593 = vst [vmem:[%s1094 + $0x60] sm:$0xff] %v2574
        %2594 = vst [vmem:[%s1094 + $0x68] sm:$0xff] %v2575
        %2595 = vst [vmem:[%s1094 + $0x70] sm:$0xff] %v2576
        %2596 = vst [vmem:[%s1094 + $0x78] sm:$0xff] %v2577
        %2597 = vst [vmem:[%s1094 + $0x80] sm:$0xff] %v2578
        %2598 = vst [vmem:[%s1094 + $0x88] sm:$0xff] %v2579
        %2599 = vst [vmem:[%s1094 + $0x90] sm:$0xff] %v2580
        %v2600 = vld [vmem:[%s1114] sm:$0xff]
        %v2601 = vld [vmem:[%s1114 + $0x8] sm:$0xff]
        %v2602 = vld [vmem:[%s1114 + $0x10] sm:$0xff]
        %v2603 = vld [vmem:[%s1114 + $0x18] sm:$0xff]
        %v2604 = vld [vmem:[%s1114 + $0x20] sm:$0xff]
        %v2605 = vld [vmem:[%s1114 + $0x28] sm:$0xff]
        %v2606 = vld [vmem:[%s1114 + $0x30] sm:$0xff]
        %v2607 = vld [vmem:[%s1114 + $0x38] sm:$0xff]
        %v2608 = vld [vmem:[%s1114 + $0x40] sm:$0xff]
        %v2609 = vld [vmem:[%s1114 + $0x48] sm:$0xff]
        %v2610 = vld [vmem:[%s1114 + $0x50] sm:$0xff]
        %v2611 = vld [vmem:[%s1114 + $0x58] sm:$0xff]
        %v2612 = vld [vmem:[%s1114 + $0x60] sm:$0xff]
        %v2613 = vld [vmem:[%s1114 + $0x68] sm:$0xff]
        %v2614 = vld [vmem:[%s1114 + $0x70] sm:$0xff]
        %v2615 = vld [vmem:[%s1114 + $0x78] sm:$0xff]
        %v2616 = vld [vmem:[%s1114 + $0x80] sm:$0xff]
        %v2617 = vld [vmem:[%s1114 + $0x88] sm:$0xff]
        %v2618 = vld [vmem:[%s1114 + $0x90] sm:$0xff]
        %v2619 = vld [vmem:[%s1351] sm:$0xff]
        %v2620 = vld [vmem:[%s1351 + $0x8] sm:$0xff]
        %v2621 = vld [vmem:[%s1351 + $0x10] sm:$0xff]
        %v2622 = vld [vmem:[%s1351 + $0x18] sm:$0xff]
        %v2623 = vld [vmem:[%s1351 + $0x20] sm:$0xff]
        %v2624 = vld [vmem:[%s1351 + $0x28] sm:$0xff]
        %v2625 = vld [vmem:[%s1351 + $0x30] sm:$0xff]
        %v2626 = vld [vmem:[%s1351 + $0x38] sm:$0xff]
        %v2627 = vld [vmem:[%s1351 + $0x40] sm:$0xff]
        %v2628 = vld [vmem:[%s1351 + $0x48] sm:$0xff]
        %v2629 = vld [vmem:[%s1351 + $0x50] sm:$0xff]
        %v2630 = vld [vmem:[%s1351 + $0x58] sm:$0xff]
        %v2631 = vld [vmem:[%s1351 + $0x60] sm:$0xff]
        %v2632 = vld [vmem:[%s1351 + $0x68] sm:$0xff]
        %v2633 = vld [vmem:[%s1351 + $0x70] sm:$0xff]
        %v2634 = vld [vmem:[%s1351 + $0x78] sm:$0xff]
        %v2635 = vld [vmem:[%s1351 + $0x80] sm:$0xff]
        %v2636 = vld [vmem:[%s1351 + $0x88] sm:$0xff]
        %v2637 = vld [vmem:[%s1351 + $0x90] sm:$0xff]
        %v2638 = vmul.f32 %v2126, %v2619
        %v2639 = vmul.f32 %v2130, %v2620
        %v2640 = vmul.f32 %v2136, %v2621
        %v2641 = vmul.f32 %v2140, %v2622
        %v2642 = vmul.f32 %v2146, %v2623
        %v2643 = vmul.f32 %v2150, %v2624
        %v2644 = vmul.f32 %v2156, %v2625
        %v2645 = vmul.f32 %v2160, %v2626
        %v2646 = vmul.f32 %v2166, %v2627
        %v2647 = vmul.f32 %v2170, %v2628
        %v2648 = vmul.f32 %v2176, %v2629
        %v2649 = vmul.f32 %v2180, %v2630
        %v2650 = vmul.f32 %v2186, %v2631
        %v2651 = vmul.f32 %v2190, %v2632
        %v2652 = vmul.f32 %v2196, %v2633
        %v2653 = vmul.f32 %v2200, %v2634
        %v2654 = vmul.f32 %v2206, %v2635
        %v2655 = vmul.f32 %v2210, %v2636
        %v2656 = vmul.f32 %v2216, %v2637
        %v2657 = vadd.f32 %v2600, %v2638
        %v2658 = vadd.f32 %v2601, %v2639
        %v2659 = vadd.f32 %v2602, %v2640
        %v2660 = vadd.f32 %v2603, %v2641
        %v2661 = vadd.f32 %v2604, %v2642
        %v2662 = vadd.f32 %v2605, %v2643
        %v2663 = vadd.f32 %v2606, %v2644
        %v2664 = vadd.f32 %v2607, %v2645
        %v2665 = vadd.f32 %v2608, %v2646
        %v2666 = vadd.f32 %v2609, %v2647
        %v2667 = vadd.f32 %v2610, %v2648
        %v2668 = vadd.f32 %v2611, %v2649
        %v2669 = vadd.f32 %v2612, %v2650
        %v2670 = vadd.f32 %v2613, %v2651
        %v2671 = vadd.f32 %v2614, %v2652
        %v2672 = vadd.f32 %v2615, %v2653
        %v2673 = vadd.f32 %v2616, %v2654
        %v2674 = vadd.f32 %v2617, %v2655
        %v2675 = vadd.f32 %v2618, %v2656
        %2676 = vst [vmem:[%s1351] sm:$0xff] %v2657
        %2677 = vst [vmem:[%s1351 + $0x8] sm:$0xff] %v2658
        %2678 = vst [vmem:[%s1351 + $0x10] sm:$0xff] %v2659
        %2679 = vst [vmem:[%s1351 + $0x18] sm:$0xff] %v2660
        %2680 = vst [vmem:[%s1351 + $0x20] sm:$0xff] %v2661
        %2681 = vst [vmem:[%s1351 + $0x28] sm:$0xff] %v2662
        %2682 = vst [vmem:[%s1351 + $0x30] sm:$0xff] %v2663
        %2683 = vst [vmem:[%s1351 + $0x38] sm:$0xff] %v2664
        %2684 = vst [vmem:[%s1351 + $0x40] sm:$0xff] %v2665
        %2685 = vst [vmem:[%s1351 + $0x48] sm:$0xff] %v2666
        %2686 = vst [vmem:[%s1351 + $0x50] sm:$0xff] %v2667
        %2687 = vst [vmem:[%s1351 + $0x58] sm:$0xff] %v2668
        %2688 = vst [vmem:[%s1351 + $0x60] sm:$0xff] %v2669
        %2689 = vst [vmem:[%s1351 + $0x68] sm:$0xff] %v2670
        %2690 = vst [vmem:[%s1351 + $0x70] sm:$0xff] %v2671
        %2691 = vst [vmem:[%s1351 + $0x78] sm:$0xff] %v2672
        %2692 = vst [vmem:[%s1351 + $0x80] sm:$0xff] %v2673
        %2693 = vst [vmem:[%s1351 + $0x88] sm:$0xff] %v2674
        %2694 = vst [vmem:[%s1351 + $0x90] sm:$0xff] %v2675
        %s2695 = sand.u32 %s220, 1
        %s2696 = scalar_lea.sflag [#allocation4], %s2695
        %s2697 = sand.u32 %s220, 1
        %s2698 = smul.addr %s2697, 152
        %s2699 = scalar_lea.vmem [#allocation11], %s2698
        %s2700 = sand.u32 %s246, 1
        %s2701 = scalar_lea.sflag [#allocation13], %s2700
        %s2702 = sand.u32 %s246, 1
        %s2703 = smul.addr %s2702, 456
        %s2704 = scalar_lea.vmem [#allocation12], %s2703
        // Predicated region
        $region73: #{painn_update_padded.1} parent=51 // pred_check
          %p2705 = pneg %p230
        $region74: #{painn_update_padded.1} parent=51 // pred_check_branch
          %2707 = sbr.rel (%p2705) target = $region76
        $region75: #{painn_update_padded.1} parent=51 // pred_region
          %s2708 = smul.u32 19, %s34
          %s2710 = ssub.s32 2432, 2432
          %2711 = vsyncadd %s2696, %s2710
          %s2712 = smul.addr %s2708, 128
          %s2713 = scalar_lea.hbm %s8, %s2712
          %s2714 = sshll.u32 %s2699, 4
          %s2715 = int_to_ptr.vmem [resolvable:$true] %s2714
          %2720 = dma.vmem_to_hbm [thread:$0]  %s2715, 2432, %s2713, %s2696, 128, 128, 8
        $region76: #{painn_update_padded.1} parent=51 // pred_fallthru
          _
        // Predicated region
        $region77: #{painn_update_padded.1} parent=51 // pred_check
          %p2721 = pneg %p256
        $region78: #{painn_update_padded.1} parent=51 // pred_check_branch
          %2723 = sbr.rel (%p2721) target = $region80
        $region79: #{painn_update_padded.1} parent=51 // pred_region
          #allocation17 [shape = 'u32[6]{0}', space=smem, size = 0x18, scoped, tag = 'DMA stride descriptor']
          %s2724 = smul.u32 19, %s34
          %s2726 = ssub.s32 7296, 7296
          %2727 = vsyncadd %s2701, %s2726
          %s2728 = smul.addr %s2724, 128
          %s2729 = scalar_lea.hbm %s9, %s2728
          %s2731 = sshll.u32 1, 14
          %s2732 = sxor.u32 4294967295, %s2731
          %s2735 = sshll.u32 7, 18
          %s2736 = sxor.u32 4294967295, %s2735
          %s2737 = sand.u32 0, %s2736
          %s2739 = sor.u32 %s2737, 0
          %s2741 = sshll.u32 3, 24
          %s2742 = sxor.u32 4294967295, %s2741
          %s2743 = sand.u32 %s2739, %s2742
          %s2745 = sor.u32 %s2743, 0
          %s2746 = sshll.u32 %s2704, 4
          %s2747 = int_to_ptr.vmem [resolvable:$true] %s2746
          %2753 = sst [smem:[#allocation17]] 2432
          %s2754 = scalar_lea.smem [#allocation17], 1
          %2755 = sst [smem:[%s2754]] 4864
          %s2756 = scalar_lea.smem [#allocation17], 2
          %2757 = sst [smem:[%s2756]] 19
          %s2758 = scalar_lea.smem [#allocation17], 3
          %2759 = sst [smem:[%s2758]] 128
          %s2760 = scalar_lea.smem [#allocation17], 4
          %2761 = sst [smem:[%s2760]] 128
          %s2762 = scalar_lea.smem [#allocation17], 5
          %2763 = sst [smem:[%s2762]] 8
          %2765 = dma.general %s2747, 7296, %s2729, %s2701, [#allocation16], [#allocation17], %s2745, 0
        $region80: #{painn_update_padded.1} parent=51 // pred_fallthru
          _
      $region52: #{painn_update_padded.1} parent=5 // pred_fallthru
        _
      %p2766 = scmp.le.s32.totalorder 2, %s29
      // Predicated region
      $region81: #{painn_update_padded.1} parent=5 // pred_check
        %p2767 = pneg %p2766
      $region82: #{painn_update_padded.1} parent=5 // pred_check_branch
        %2769 = sbr.rel (%p2767) target = $region84
      $region83: #{painn_update_padded.1} parent=5 // pred_region
        %s2770 = ssub.s32 %s29, 2
        // Predicated region
        $region85: #{painn_update_padded.1} parent=83 // pred_check
          %p2771 = pneg %p236
        $region86: #{painn_update_padded.1} parent=83 // pred_check_branch
          %2773 = sbr.rel (%p2771) target = $region88
        $region87: #{painn_update_padded.1} parent=83 // pred_region
          %s2774 = sand.u32 %s221, 1
          %s2775 = scalar_lea.sflag [#allocation4], %s2774
          %s2776 = sand.u32 %s221, 1
          %s2777 = smul.addr %s2776, 152
          %s2778 = scalar_lea.vmem [#allocation11], %s2777
          %2779 = dma.done %s2775, 2432
        $region88: #{painn_update_padded.1} parent=83 // pred_fallthru
          _
        // Predicated region
        $region89: #{painn_update_padded.1} parent=83 // pred_check
          %p2780 = pneg %p262
        $region90: #{painn_update_padded.1} parent=83 // pred_check_branch
          %2782 = sbr.rel (%p2780) target = $region92
        $region91: #{painn_update_padded.1} parent=83 // pred_region
          %s2783 = sand.u32 %s247, 1
          %s2784 = scalar_lea.sflag [#allocation13], %s2783
          %s2785 = sand.u32 %s247, 1
          %s2786 = smul.addr %s2785, 456
          %s2787 = scalar_lea.vmem [#allocation12], %s2786
          %2788 = dma.done %s2784, 7296
        $region92: #{painn_update_padded.1} parent=83 // pred_fallthru
          _
      $region84: #{painn_update_padded.1} parent=5 // pred_fallthru
        _
    $region6: #{painn_update_padded.1} parent=1 // loop_footer
      %s33 = sadd.s32 1, %s29
    $region7: #{painn_update_padded.1} parent=1 // loop_footer_branch
      %28 = sbr.rel target = $region3
    $region8: #{painn_update_padded.1} parent=1 // loop_exit
      _
    %2789 = vsyncpa [#allocation3], 1
    %s2790 = scalar_lea.sflag [#allocation3], 1
    %2791 = vsyncpa %s2790, 1
    %2792 = vsyncpa [#allocation6], 1
    %s2793 = scalar_lea.sflag [#allocation6], 1
    %2794 = vsyncpa %s2793, 1
    %2795 = vsyncpa [#allocation9], 1
    %2796 = vsyncpa [#allocation4], 1
    %s2797 = scalar_lea.sflag [#allocation4], 1
    %2798 = vsyncpa %s2797, 1
    %2799 = vsyncpa [#allocation13], 1
    %s2800 = scalar_lea.sflag [#allocation13], 1
    %2801 = vsyncpa %s2800, 1

</llo_original>
